<compile_context>
chip_gen: v5e
topology: v5e:2x2
jax: 0.10.0
libtpu: 0.0.40
codegen_flags: <defaults>
</compile_context>

<pallas_src>
import functools

import numpy as np
import jax
import jax.numpy as jnp
from jax.experimental import pallas as pl
from jax.experimental.pallas import tpu as pltpu


def _round_up(x, m):
    return ((x + m - 1) // m) * m


def _cdiv(a, b):
    return -(-a // b)


def _pick_tm(n, tm_max=1024):
    """Row tile: >=128 to fill the MXU M dim; large (<= tm_max) to amortize the
    ~0.35us per-grid-step pipeline overhead; capped so the grid keeps at least
    2 programs so both v7x TensorCores get work."""
    if n <= 256:
        return 128
    tm_max = max(128, _round_up(tm_max, 128))
    cap = max(128, _round_up(_cdiv(n, 2), 128))   # >= 2 grid programs
    return min(tm_max, cap)


# ----------------------------------------------------------------------------
# Pallas kernels
# ----------------------------------------------------------------------------
def _mlp_softmax_tail(h_pre, b1_ref, w2_ref, b2_ref, logit_ref, prob_ref):
    """Shared tail: bias + LeakyReLU + Linear(H, CP) + row softmax.

    h_pre: (tm, H) f32 pre-bias first-layer output.
    Padded class columns carry a -inf bias -> exp(.) == 0 there, so the softmax
    over the real classes is unchanged.
    """
    h = h_pre + b1_ref[...]
    h = jnp.maximum(h, jnp.float32(0.01) * h)                     # LeakyReLU(0.01)
    logits = jnp.dot(h.astype(jnp.bfloat16), w2_ref[...],
                     preferred_element_type=jnp.float32) + b2_ref[...]
    logit_ref[...] = logits.astype(logit_ref.dtype)
    m = jnp.max(logits, axis=-1, keepdims=True)
    e = jnp.exp(logits - m)
    denom = jnp.sum(e, axis=-1, keepdims=True)
    prob_ref[...] = (e * pl.reciprocal(denom, approx=False)).astype(prob_ref.dtype)


def _fused_gather_mlp_kernel(sidx_ref, oidx_ref, pidx_ref, inst_ref, phr_ref,
                             w1_ref, b1_ref, w2_ref, b2_ref,
                             logit_ref, prob_ref):
    """Row tile: gather (subj, obj, phrase) rows from VMEM-resident feature
    tables via exact one-hot MXU matmuls, then MLP + softmax."""
    tm = sidx_ref.shape[0]
    f = inst_ref.shape[1]

    def gather_rows(idx_ref, tbl_ref):
        # one-hot (0/1 exactly representable in bf16) x bf16 table == exact copy
        depth = tbl_ref.shape[0]
        cols = jax.lax.broadcasted_iota(jnp.int32, (tm, depth), 1)
        onehot = (cols == idx_ref[...]).astype(jnp.bfloat16)       # (tm, depth)
        g = jnp.dot(onehot, tbl_ref[...], preferred_element_type=jnp.float32)
        return g.astype(jnp.bfloat16)                              # exact

    xs = gather_rows(sidx_ref, inst_ref)                           # subject feats
    xo = gather_rows(oidx_ref, inst_ref)                           # object feats
    xp = gather_rows(pidx_ref, phr_ref)                            # phrase feats

    # Linear(3F, H) as three K=F matmuls against row slices of W1 -> never
    # materializes the concatenated (tm, 3F) input.
    h = jnp.dot(xs, w1_ref[0:f, :], preferred_element_type=jnp.float32)
    h = h + jnp.dot(xo, w1_ref[f:2 * f, :], preferred_element_type=jnp.float32)
    h = h + jnp.dot(xp, w1_ref[2 * f:3 * f, :], preferred_element_type=jnp.float32)
    _mlp_softmax_tail(h, b1_ref, w2_ref, b2_ref, logit_ref, prob_ref)


def _plain_mlp_kernel(x_ref, w1_ref, b1_ref, w2_ref, b2_ref,
                      logit_ref, prob_ref):
    """Fallback row tile: x already gathered/concatenated (bf16) by XLA."""
    h = jnp.dot(x_ref[...], w1_ref[...], preferred_element_type=jnp.float32)
    _mlp_softmax_tail(h, b1_ref, w2_ref, b2_ref, logit_ref, prob_ref)


# ----------------------------------------------------------------------------
# Jitted apply: padding + pallas_call + un-pad, all in one jit
# ----------------------------------------------------------------------------
@functools.partial(jax.jit, static_argnames=("force_mode",))
def phrase_classifier_apply(params, instance_features, phrase_features,
                            subj_idx, obj_idx, phr_idx, force_mode=None):
    """subj_idx/obj_idx: global rows of instance_features; phr_idx: global rows
    of phrase_features. Returns (logits [N, C], probs [N, C]) in f32."""
    w1, b1, w2, b2 = params
    n = subj_idx.shape[0]
    ni, f = instance_features.shape
    npr = phrase_features.shape[0]
    d = 3 * f
    hdim = w1.shape[1]
    c = w2.shape[1]
    cp = _round_up(c, 128)                 # lane-dense outputs, full MXU N width
    tm = _pick_tm(n)
    n_pad = _round_up(max(n, 1), tm)
    grid = (n_pad // tm,)

    # bf16 MXU operands, f32 accumulation / biases / activations.
    # TODO(synk): optional v7x path — store W1/W2 as fp8 (e4m3) for ~2x MXU
    # throughput on the first GEMM, gated on downstream logit tolerance.
    w1_bf = w1.astype(jnp.bfloat16)
    w2_p = jnp.zeros((hdim, cp), jnp.bfloat16).at[:, :c].set(w2.astype(jnp.bfloat16))
    b1_2d = b1.reshape(1, hdim).astype(jnp.float32)
    b2_p = jnp.full((1, cp), -jnp.inf, jnp.float32).at[0, :c].set(
        b2.astype(jnp.float32))

    def pad_idx(idx):
        return jnp.zeros((n_pad,), jnp.int32).at[:n].set(idx.astype(jnp.int32))

    s_pad, o_pad, p_pad = pad_idx(subj_idx), pad_idx(obj_idx), pad_idx(phr_idx)

    out_shape = (jax.ShapeDtypeStruct((n_pad, cp), jnp.float32),
                 jax.ShapeDtypeStruct((n_pad, cp), jnp.float32))
    out_specs = (pl.BlockSpec((tm, cp), lambda i: (i, 0)),
                 pl.BlockSpec((tm, cp), lambda i: (i, 0)))
    # Weights/biases: constant index_map -> DMA'd once, resident across steps.
    w_specs = [
        pl.BlockSpec((d, hdim), lambda i: (0, 0)),     # W1 (bf16)
        pl.BlockSpec((1, hdim), lambda i: (0, 0)),     # b1 (f32)
        pl.BlockSpec((hdim, cp), lambda i: (0, 0)),    # W2 (class-padded bf16)
        pl.BlockSpec((1, cp), lambda i: (0, 0)),       # b2 (padded with -inf)
    ]
    compiler_params = pltpu.CompilerParams(
        dimension_semantics=("parallel",),
        vmem_limit_bytes=48 * 1024 * 1024)

    ni_pad = _round_up(ni, 128)
    np_pad = _round_up(npr, 128)
    # In-kernel one-hot gather costs ~(2*Ni_pad + Np_pad)*F MACs/row on the MXU;
    # use it while that is <= ~50% of the MLP's (3F*H + H*CP) MACs/row.
    fuse_gather = (2 * ni_pad + np_pad) * f <= (3 * f + cp) * hdim // 2
    if force_mode is not None:
        fuse_gather = (force_mode == "fused")

    if fuse_gather:
        inst_bf = jnp.zeros((ni_pad, f), jnp.bfloat16).at[:ni].set(
            instance_features.astype(jnp.bfloat16))
        phr_bf = jnp.zeros((np_pad, f), jnp.bfloat16).at[:npr].set(
            phrase_features.astype(jnp.bfloat16))
        logits, probs = pl.pallas_call(
            _fused_gather_mlp_kernel,
            out_shape=out_shape,
            grid=grid,
            in_specs=[
                pl.BlockSpec((tm, 1), lambda i: (i, 0)),       # subject row ids
                pl.BlockSpec((tm, 1), lambda i: (i, 0)),       # object row ids
                pl.BlockSpec((tm, 1), lambda i: (i, 0)),       # phrase row ids
                pl.BlockSpec((ni_pad, f), lambda i: (0, 0)),   # instance table
                pl.BlockSpec((np_pad, f), lambda i: (0, 0)),   # phrase table
            ] + w_specs,
            out_specs=out_specs,
            compiler_params=compiler_params,
        )(s_pad.reshape(n_pad, 1), o_pad.reshape(n_pad, 1), p_pad.reshape(n_pad, 1),
          inst_bf, phr_bf, w1_bf, b1_2d, w2_p, b2_p)
    else:
        # Large tables: gather in XLA, but produce the padded bf16 [n_pad, 3F]
        # input in ONE pass (no separate cast / zero-pad copies).
        x_bf = jnp.concatenate(
            [jnp.take(instance_features, s_pad, axis=0),
             jnp.take(instance_features, o_pad, axis=0),
             jnp.take(phrase_features, p_pad, axis=0)],
            axis=1).astype(jnp.bfloat16)
        logits, probs = pl.pallas_call(
            _plain_mlp_kernel,
            out_shape=out_shape,
            grid=grid,
            in_specs=[pl.BlockSpec((tm, d), lambda i: (i, 0))] + w_specs,
            out_specs=out_specs,
            compiler_params=compiler_params,
        )(x_bf, w1_bf, b1_2d, w2_p, b2_p)

    # Un-pad inside the same jit (padded class columns hold -inf logits / 0 probs).
    return logits[:n, :c], probs[:n, :c]


# ----------------------------------------------------------------------------
# Module-equivalent forward: host-side metadata -> flat global row indices
# ----------------------------------------------------------------------------
def build_global_indices(inst_proposal_size, phr_proposal_sizes,
                         connect_mat, phrase_prop_indexs):
    """Turn per-image (connect_mat, phrase index) metadata into flat GLOBAL row
    indices; row order matches the module's per-image loop + torch.cat."""
    subj, obj, phr = [], [], []
    start_instance_idx = 0
    start_phrase_idx = 0
    for img_id in range(len(inst_proposal_size)):
        connect_arr = np.asarray(connect_mat[img_id])
        phr_arr = np.asarray(phrase_prop_indexs[img_id])
        subj.append(connect_arr[0] + start_instance_idx)
        obj.append(connect_arr[1] + start_instance_idx)
        phr.append(phr_arr + start_phrase_idx)
        start_instance_idx += int(inst_proposal_size[img_id])
        start_phrase_idx += int(phr_proposal_sizes[img_id])
    return (np.concatenate(subj).astype(np.int32),
            np.concatenate(obj).astype(np.int32),
            np.concatenate(phr).astype(np.int32))


def phrase_classifier_forward(params, instance_features, phrase_features,
                              inst_proposal_size, phr_proposal_sizes,
                              connect_mat, phrase_prop_indexs):
    subj, obj, phr = build_global_indices(
        inst_proposal_size, phr_proposal_sizes, connect_mat, phrase_prop_indexs)
    return phrase_classifier_apply(
        params, instance_features, phrase_features,
        jnp.asarray(subj), jnp.asarray(obj), jnp.asarray(phr))


# ----------------------------------------------------------------------------
# Deterministic parameter init (shapes from the module __init__)
# ----------------------------------------------------------------------------
def init_params(key, input_chnl, hidden_dim, num_classes):
    k1, k2, k3, k4 = jax.random.split(key, 4)
    lim1 = 1.0 / jnp.sqrt(jnp.float32(input_chnl))
    lim2 = 1.0 / jnp.sqrt(jnp.float32(hidden_dim))
    w1 = jax.random.uniform(k1, (input_chnl, hidden_dim), jnp.float32, -lim1, lim1)
    b1 = jax.random.uniform(k2, (hidden_dim,), jnp.float32, -lim1, lim1)
    w2 = jax.random.uniform(k3, (hidden_dim, num_classes), jnp.float32, -lim2, lim2)
    b2 = jax.random.uniform(k4, (num_classes,), jnp.float32, -lim2, lim2)
    return w1, b1, w2, b2


if __name__ == "__main__":
    key = jax.random.PRNGKey(0)
    FEAT_DIM = 128                   # per-region feature width
    INPUT_CHNL = 3 * FEAT_DIM        # concat(subj inst, obj inst, phrase) = 384
    HIDDEN_DIM = 1024                # hardcoded in the module
    RELATION_CLASS = 16              # cfg.MODEL.RELATION.RELATION_CLASS

    kp, ki, kf, k2 = jax.random.split(key, 4)
    params = init_params(kp, INPUT_CHNL, HIDDEN_DIM, RELATION_CLASS)

    # pure-JAX reference with matching numerics (bf16 MXU inputs, f32 accumulate)
    def ref_mlp(p, x):
        w1, b1, w2, b2 = p
        h = jnp.dot(x.astype(jnp.bfloat16), w1.astype(jnp.bfloat16),
                    preferred_element_type=jnp.float32) + b1
        h = jnp.where(h > 0, h, 0.01 * h)
        lg = jnp.dot(h.astype(jnp.bfloat16), w2.astype(jnp.bfloat16),
                     preferred_element_type=jnp.float32) + b2
        return lg, jax.nn.softmax(lg, axis=1)

    # ---- test 1: module-style per-image inputs (small) ----
    inst_proposal_size = [3, 4]          # instances per image
    phr_proposal_sizes = [2, 3]          # phrase proposals per image
    instance_features = jax.random.normal(ki, (sum(inst_proposal_size), FEAT_DIM),
                                          jnp.float32)
    phrase_features = jax.random.normal(kf, (sum(phr_proposal_sizes), FEAT_DIM),
                                        jnp.float32)
    connect_mat = [np.array([[0, 1, 2], [1, 2, 0]], np.int32),
                   np.array([[0, 1, 2, 3, 0], [3, 2, 1, 0, 2]], np.int32)]
    phrase_prop_indexs = [np.array([0, 1, 0], np.int32),
                          np.array([2, 1, 0, 2, 1], np.int32)]

    logits, probs = phrase_classifier_forward(
        params, instance_features, phrase_features,
        inst_proposal_size, phr_proposal_sizes, connect_mat, phrase_prop_indexs)
    jax.block_until_ready((logits, probs))

    # reference built with the original per-image loop (validates index building)
    rows = []
    si, sp = 0, 0
    for img_id in range(len(inst_proposal_size)):
        inst = instance_features[si:si + inst_proposal_size[img_id]]
        phrf = phrase_features[sp:sp + phr_proposal_sizes[img_id]]
        cm = connect_mat[img_id]
        rows.append(jnp.concatenate(
            [inst[cm[0]], inst[cm[1]], phrf[phrase_prop_indexs[img_id]]], axis=1))
        si += inst_proposal_size[img_id]
        sp += phr_proposal_sizes[img_id]
    ref_logits, ref_probs = ref_mlp(params, jnp.concatenate(rows, axis=0))

    n1 = sum(int(np.asarray(c).shape[1]) for c in connect_mat)
    assert logits.shape == (n1, RELATION_CLASS) and probs.shape == (n1, RELATION_CLASS)
    assert jnp.allclose(logits, ref_logits, atol=2e-2, rtol=2e-2), "logit mismatch"
    assert jnp.allclose(probs, ref_probs, atol=2e-3, rtol=2e-3), "prob mismatch"
    assert bool(jnp.all(jnp.isfinite(probs)))

    # ---- test 2: larger synthetic case — exercises a multi-program grid, a big
    #      row tile, and both the fused-gather and plain kernel paths ----
    NI, NP, NREL = 64, 48, 640
    ka, kb, kc, kd, ke = jax.random.split(k2, 5)
    inst2 = jax.random.normal(ka, (NI, FEAT_DIM), jnp.float32)
    phr2 = jax.random.normal(kb, (NP, FEAT_DIM), jnp.float32)
    sidx2 = jax.random.randint(kc, (NREL,), 0, NI, jnp.int32)
    oidx2 = jax.random.randint(kd, (NREL,), 0, NI, jnp.int32)
    pidx2 = jax.random.randint(ke, (NREL,), 0, NP, jnp.int32)

    ref_lg2, ref_pb2 = ref_mlp(
        params, jnp.concatenate([inst2[sidx2], inst2[oidx2], phr2[pidx2]], axis=1))
    for mode in ("fused", "plain"):
        lg2, pb2 = phrase_classifier_apply(params, inst2, phr2,
                                           sidx2, oidx2, pidx2, force_mode=mode)
        jax.block_until_ready((lg2, pb2))
        assert lg2.shape == (NREL, RELATION_CLASS)
        assert jnp.allclose(lg2, ref_lg2, atol=2e-2, rtol=2e-2), f"logit mismatch ({mode})"
        assert jnp.allclose(pb2, ref_pb2, atol=2e-3, rtol=2e-3), f"prob mismatch ({mode})"
        assert bool(jnp.all(jnp.isfinite(pb2))), mode

    print("KERNEL_OK")
</pallas_src>

<mosaic_0001>
module attributes {stable_mosaic.version = 11 : i64} {
  func.func @_fused_gather_mlp_kernel(%arg0: i32, %arg1: memref<128x1xi32, #tpu.memory_space<vmem>>, %arg2: memref<128x1xi32, #tpu.memory_space<vmem>>, %arg3: memref<128x1xi32, #tpu.memory_space<vmem>>, %arg4: memref<128x128xbf16, #tpu.memory_space<vmem>>, %arg5: memref<128x128xbf16, #tpu.memory_space<vmem>>, %arg6: memref<384x1024xbf16, #tpu.memory_space<vmem>>, %arg7: memref<1x1024xf32, #tpu.memory_space<vmem>>, %arg8: memref<1024x128xbf16, #tpu.memory_space<vmem>>, %arg9: memref<1x128xf32, #tpu.memory_space<vmem>>, %arg10: memref<128x128xf32, #tpu.memory_space<vmem>>, %arg11: memref<128x128xf32, #tpu.memory_space<vmem>>) attributes {dimension_semantics = [#tpu.dimension_semantics<parallel>], iteration_bounds = array<i64: 1>, scalar_prefetch = 0 : i64, scratch_operands = 0 : i64, tpu.core_type = #tpu.core_type<tc>, window_params = [{transform_indices = @transform_0, window_bounds = array<i64: 128, 1>}, {transform_indices = @transform_1, window_bounds = array<i64: 128, 1>}, {transform_indices = @transform_2, window_bounds = array<i64: 128, 1>}, {pipeline_mode = #tpu.pipeline_mode<synchronous>, transform_indices = @transform_3, window_bounds = array<i64: 128, 128>}, {pipeline_mode = #tpu.pipeline_mode<synchronous>, transform_indices = @transform_4, window_bounds = array<i64: 128, 128>}, {pipeline_mode = #tpu.pipeline_mode<synchronous>, transform_indices = @transform_5, window_bounds = array<i64: 384, 1024>}, {pipeline_mode = #tpu.pipeline_mode<synchronous>, transform_indices = @transform_6, window_bounds = array<i64: 1, 1024>}, {pipeline_mode = #tpu.pipeline_mode<synchronous>, transform_indices = @transform_7, window_bounds = array<i64: 1024, 128>}, {pipeline_mode = #tpu.pipeline_mode<synchronous>, transform_indices = @transform_8, window_bounds = array<i64: 1, 128>}, {transform_indices = @transform_9, window_bounds = array<i64: 128, 128>}, {transform_indices = @transform_10, window_bounds = array<i64: 128, 128>}]} {
    %0 = tpu.iota {dimensions = array<i32: 1>} : vector<128x128xi32>
    %c0 = arith.constant 0 : index
    %c0_0 = arith.constant 0 : index
    %1 = vector.load %arg1[%c0, %c0_0] : memref<128x1xi32, #tpu.memory_space<vmem>>, vector<128x1xi32>
    %2 = vector.broadcast %1 : vector<128x1xi32> to vector<128x128xi32>
    %3 = arith.cmpi eq, %0, %2 : vector<128x128xi32>
    %4 = arith.extui %3 : vector<128x128xi1> to vector<128x128xi32>
    %5 = arith.sitofp %4 : vector<128x128xi32> to vector<128x128xf32>
    %6 = arith.truncf %5 : vector<128x128xf32> to vector<128x128xbf16>
    %c0_1 = arith.constant 0 : index
    %c0_2 = arith.constant 0 : index
    %7 = vector.load %arg4[%c0_1, %c0_2] : memref<128x128xbf16, #tpu.memory_space<vmem>>, vector<128x128xbf16>
    %cst = arith.constant dense<0.000000e+00> : vector<128x128xf32>
    %8 = tpu.matmul %6, %7, %cst {dimension_numbers = #tpu.dot_dimension_numbers<[1], [0], [0], [1], [0, 0, 1, 1], [], []>} : vector<128x128xbf16>, vector<128x128xbf16>, vector<128x128xf32> -> vector<128x128xf32>
    %9 = arith.truncf %8 : vector<128x128xf32> to vector<128x128xbf16>
    %10 = tpu.iota {dimensions = array<i32: 1>} : vector<128x128xi32>
    %c0_3 = arith.constant 0 : index
    %c0_4 = arith.constant 0 : index
    %11 = vector.load %arg2[%c0_3, %c0_4] : memref<128x1xi32, #tpu.memory_space<vmem>>, vector<128x1xi32>
    %12 = vector.broadcast %11 : vector<128x1xi32> to vector<128x128xi32>
    %13 = arith.cmpi eq, %10, %12 : vector<128x128xi32>
    %14 = arith.extui %13 : vector<128x128xi1> to vector<128x128xi32>
    %15 = arith.sitofp %14 : vector<128x128xi32> to vector<128x128xf32>
    %16 = arith.truncf %15 : vector<128x128xf32> to vector<128x128xbf16>
    %c0_5 = arith.constant 0 : index
    %c0_6 = arith.constant 0 : index
    %17 = vector.load %arg4[%c0_5, %c0_6] : memref<128x128xbf16, #tpu.memory_space<vmem>>, vector<128x128xbf16>
    %cst_7 = arith.constant dense<0.000000e+00> : vector<128x128xf32>
    %18 = tpu.matmul %16, %17, %cst_7 {dimension_numbers = #tpu.dot_dimension_numbers<[1], [0], [0], [1], [0, 0, 1, 1], [], []>} : vector<128x128xbf16>, vector<128x128xbf16>, vector<128x128xf32> -> vector<128x128xf32>
    %19 = arith.truncf %18 : vector<128x128xf32> to vector<128x128xbf16>
    %20 = tpu.iota {dimensions = array<i32: 1>} : vector<128x128xi32>
    %c0_8 = arith.constant 0 : index
    %c0_9 = arith.constant 0 : index
    %21 = vector.load %arg3[%c0_8, %c0_9] : memref<128x1xi32, #tpu.memory_space<vmem>>, vector<128x1xi32>
    %22 = vector.broadcast %21 : vector<128x1xi32> to vector<128x128xi32>
    %23 = arith.cmpi eq, %20, %22 : vector<128x128xi32>
    %24 = arith.extui %23 : vector<128x128xi1> to vector<128x128xi32>
    %25 = arith.sitofp %24 : vector<128x128xi32> to vector<128x128xf32>
    %26 = arith.truncf %25 : vector<128x128xf32> to vector<128x128xbf16>
    %c0_10 = arith.constant 0 : index
    %c0_11 = arith.constant 0 : index
    %27 = vector.load %arg5[%c0_10, %c0_11] : memref<128x128xbf16, #tpu.memory_space<vmem>>, vector<128x128xbf16>
    %cst_12 = arith.constant dense<0.000000e+00> : vector<128x128xf32>
    %28 = tpu.matmul %26, %27, %cst_12 {dimension_numbers = #tpu.dot_dimension_numbers<[1], [0], [0], [1], [0, 0, 1, 1], [], []>} : vector<128x128xbf16>, vector<128x128xbf16>, vector<128x128xf32> -> vector<128x128xf32>
    %29 = arith.truncf %28 : vector<128x128xf32> to vector<128x128xbf16>
    %c0_13 = arith.constant 0 : index
    %c0_14 = arith.constant 0 : index
    %30 = vector.load %arg6[%c0_13, %c0_14] : memref<384x1024xbf16, #tpu.memory_space<vmem>>, vector<128x1024xbf16>
    %cst_15 = arith.constant dense<0.000000e+00> : vector<128x1024xf32>
    %31 = tpu.matmul %9, %30, %cst_15 {dimension_numbers = #tpu.dot_dimension_numbers<[1], [0], [0], [1], [0, 0, 1, 1], [], []>} : vector<128x128xbf16>, vector<128x1024xbf16>, vector<128x1024xf32> -> vector<128x1024xf32>
    %c128 = arith.constant 128 : index
    %c0_16 = arith.constant 0 : index
    %32 = vector.load %arg6[%c128, %c0_16] : memref<384x1024xbf16, #tpu.memory_space<vmem>>, vector<128x1024xbf16>
    %cst_17 = arith.constant dense<0.000000e+00> : vector<128x1024xf32>
    %33 = tpu.matmul %19, %32, %cst_17 {dimension_numbers = #tpu.dot_dimension_numbers<[1], [0], [0], [1], [0, 0, 1, 1], [], []>} : vector<128x128xbf16>, vector<128x1024xbf16>, vector<128x1024xf32> -> vector<128x1024xf32>
    %34 = arith.addf %31, %33 : vector<128x1024xf32>
    %c256 = arith.constant 256 : index
    %c0_18 = arith.constant 0 : index
    %35 = vector.load %arg6[%c256, %c0_18] : memref<384x1024xbf16, #tpu.memory_space<vmem>>, vector<128x1024xbf16>
    %cst_19 = arith.constant dense<0.000000e+00> : vector<128x1024xf32>
    %36 = tpu.matmul %29, %35, %cst_19 {dimension_numbers = #tpu.dot_dimension_numbers<[1], [0], [0], [1], [0, 0, 1, 1], [], []>} : vector<128x128xbf16>, vector<128x1024xbf16>, vector<128x1024xf32> -> vector<128x1024xf32>
    %37 = arith.addf %34, %36 : vector<128x1024xf32>
    %c0_20 = arith.constant 0 : index
    %c0_21 = arith.constant 0 : index
    %38 = vector.load %arg7[%c0_20, %c0_21] : memref<1x1024xf32, #tpu.memory_space<vmem>>, vector<1x1024xf32>
    %39 = vector.broadcast %38 : vector<1x1024xf32> to vector<128x1024xf32>
    %40 = arith.addf %37, %39 : vector<128x1024xf32>
    %cst_22 = arith.constant 0.00999999977 : f32
    %41 = vector.broadcast %cst_22 : f32 to vector<128x1024xf32>
    %42 = arith.mulf %41, %40 : vector<128x1024xf32>
    %43 = arith.maximumf %40, %42 : vector<128x1024xf32>
    %44 = arith.truncf %43 : vector<128x1024xf32> to vector<128x1024xbf16>
    %c0_23 = arith.constant 0 : index
    %c0_24 = arith.constant 0 : index
    %45 = vector.load %arg8[%c0_23, %c0_24] : memref<1024x128xbf16, #tpu.memory_space<vmem>>, vector<1024x128xbf16>
    %cst_25 = arith.constant dense<0.000000e+00> : vector<128x128xf32>
    %46 = tpu.matmul %44, %45, %cst_25 {dimension_numbers = #tpu.dot_dimension_numbers<[1], [0], [0], [1], [0, 0, 1, 1], [], []>} : vector<128x1024xbf16>, vector<1024x128xbf16>, vector<128x128xf32> -> vector<128x128xf32>
    %c0_26 = arith.constant 0 : index
    %c0_27 = arith.constant 0 : index
    %47 = vector.load %arg9[%c0_26, %c0_27] : memref<1x128xf32, #tpu.memory_space<vmem>>, vector<1x128xf32>
    %48 = vector.broadcast %47 : vector<1x128xf32> to vector<128x128xf32>
    %49 = arith.addf %46, %48 : vector<128x128xf32>
    %c0_28 = arith.constant 0 : index
    %c0_29 = arith.constant 0 : index
    %50 = vector.load %arg10[%c0_28, %c0_29] : memref<128x128xf32, #tpu.memory_space<vmem>>, vector<128x128xf32>
    tpu.vector_store %arg10[%c0_28, %c0_29], %49 {strides = array<i32>} : memref<128x128xf32, #tpu.memory_space<vmem>>, vector<128x128xf32>,
    %cst_30 = arith.constant dense<0xFF800000> : vector<128xf32>
    %51 = vector.multi_reduction <maximumf>, %49, %cst_30 [1] : vector<128x128xf32> to vector<128xf32>
    %52 = vector.shape_cast %51 : vector<128xf32> to vector<128x1xf32>
    %53 = vector.broadcast %52 : vector<128x1xf32> to vector<128x128xf32>
    %54 = arith.subf %49, %53 : vector<128x128xf32>
    %55 = math.exp %54 : vector<128x128xf32>
    %cst_31 = arith.constant dense<0.000000e+00> : vector<128xf32>
    %56 = vector.multi_reduction <add>, %55, %cst_31 [1] : vector<128x128xf32> to vector<128xf32>
    %57 = vector.shape_cast %56 : vector<128xf32> to vector<128x1xf32>
    %58 = tpu.reciprocal %57 : vector<128x1xf32> -> vector<128x1xf32>
    %59 = vector.broadcast %58 : vector<128x1xf32> to vector<128x128xf32>
    %60 = arith.mulf %55, %59 : vector<128x128xf32>
    %c0_32 = arith.constant 0 : index
    %c0_33 = arith.constant 0 : index
    %61 = vector.load %arg11[%c0_32, %c0_33] : memref<128x128xf32, #tpu.memory_space<vmem>>, vector<128x128xf32>
    tpu.vector_store %arg11[%c0_32, %c0_33], %60 {strides = array<i32>} : memref<128x128xf32, #tpu.memory_space<vmem>>, vector<128x128xf32>,
    return
  }
  func.func @transform_0(%arg0: i32) -> (i32, i32) {
    %c0_i32 = arith.constant 0 : i32
    %c0_i32_0 = arith.constant 0 : i32
    return %arg0, %c0_i32 : i32, i32
  }
  func.func @transform_1(%arg0: i32) -> (i32, i32) {
    %c0_i32 = arith.constant 0 : i32
    %c0_i32_0 = arith.constant 0 : i32
    return %arg0, %c0_i32 : i32, i32
  }
  func.func @transform_2(%arg0: i32) -> (i32, i32) {
    %c0_i32 = arith.constant 0 : i32
    %c0_i32_0 = arith.constant 0 : i32
    return %arg0, %c0_i32 : i32, i32
  }
  func.func @transform_3(%arg0: i32) -> (i32, i32) {
    %c0_i32 = arith.constant 0 : i32
    %c0_i32_0 = arith.constant 0 : i32
    %c0_i32_1 = arith.constant 0 : i32
    return %c0_i32, %c0_i32_0 : i32, i32
  }
  func.func @transform_4(%arg0: i32) -> (i32, i32) {
    %c0_i32 = arith.constant 0 : i32
    %c0_i32_0 = arith.constant 0 : i32
    %c0_i32_1 = arith.constant 0 : i32
    return %c0_i32, %c0_i32_0 : i32, i32
  }
  func.func @transform_5(%arg0: i32) -> (i32, i32) {
    %c0_i32 = arith.constant 0 : i32
    %c0_i32_0 = arith.constant 0 : i32
    %c0_i32_1 = arith.constant 0 : i32
    return %c0_i32, %c0_i32_0 : i32, i32
  }
  func.func @transform_6(%arg0: i32) -> (i32, i32) {
    %c0_i32 = arith.constant 0 : i32
    %c0_i32_0 = arith.constant 0 : i32
    %c0_i32_1 = arith.constant 0 : i32
    return %c0_i32, %c0_i32_0 : i32, i32
  }
  func.func @transform_7(%arg0: i32) -> (i32, i32) {
    %c0_i32 = arith.constant 0 : i32
    %c0_i32_0 = arith.constant 0 : i32
    %c0_i32_1 = arith.constant 0 : i32
    return %c0_i32, %c0_i32_0 : i32, i32
  }
  func.func @transform_8(%arg0: i32) -> (i32, i32) {
    %c0_i32 = arith.constant 0 : i32
    %c0_i32_0 = arith.constant 0 : i32
    %c0_i32_1 = arith.constant 0 : i32
    return %c0_i32, %c0_i32_0 : i32, i32
  }
  func.func @transform_9(%arg0: i32) -> (i32, i32) {
    %c0_i32 = arith.constant 0 : i32
    %c0_i32_0 = arith.constant 0 : i32
    return %arg0, %c0_i32 : i32, i32
  }
  func.func @transform_10(%arg0: i32) -> (i32, i32) {
    %c0_i32 = arith.constant 0 : i32
    %c0_i32_0 = arith.constant 0 : i32
    return %arg0, %c0_i32 : i32, i32
  }
}

</mosaic_0001>

<llo_original>
// kernel: phrase_classifier_apply.1
$region0: #{phrase_classifier_apply.1}
  #allocation0 [shape = 'u32[]', space=smem, size = 0x4, offset = 0x4, fixed_abs, tag = 'smem constant byte address 0x4 - core index']
  #allocation1 [shape = 'u32[72,128]{1,0:T(1,128)}', space=vmem, size = 0x9000, scoped, tag = 'internal scratch']
  %s0 = inlined_call_operand.vmem [shape: s32[128,1], index: 0, kind: input, shape index: {}]
  %s1 = inlined_call_operand.vmem [shape: s32[128,1], index: 1, kind: input, shape index: {}]
  %s2 = inlined_call_operand.vmem [shape: s32[128,1], index: 2, kind: input, shape index: {}]
  %s3 = inlined_call_operand.vmem [shape: bf16[128,128], index: 3, kind: input, shape index: {}]
  %s4 = inlined_call_operand.vmem [shape: bf16[128,128], index: 4, kind: input, shape index: {}]
  %s5 = inlined_call_operand.vmem [shape: bf16[384,1024], index: 5, kind: input, shape index: {}]
  %s6 = inlined_call_operand.vmem [shape: f32[1,1024], index: 6, kind: input, shape index: {}]
  %s7 = inlined_call_operand.vmem [shape: bf16[1024,128], index: 7, kind: input, shape index: {}]
  %s8 = inlined_call_operand.vmem [shape: f32[1,128], index: 8, kind: input, shape index: {}]
  %s9 = inlined_call_operand.vmem [shape: f32[128,128], index: 9, kind: output, shape index: {0}]
  %s10 = inlined_call_operand.vmem [shape: f32[128,128], index: 10, kind: output, shape index: {1}]
  %11 = xla_tuple %s9, %s10
  %s12 = sld [smem:[#allocation0]]
  $region54: #{phrase_classifier_apply.1} parent=0
    _
  %s14 = ssub.s32 1, %s12
  %s15 = scalar_select 0, %s14, %s12
  // Predicated region
  $region2: #{phrase_classifier_apply.1} parent=0 // pred_check
    _
  $region3: #{phrase_classifier_apply.1} parent=0 // pred_check_branch
    %17 = sbr.rel (0) target = $region5
  $region4: #{phrase_classifier_apply.1} parent=0 // pred_region
    _
  $region5: #{phrase_classifier_apply.1} parent=0 // pred_fallthru
    _
  // Predicated region
  $region6: #{phrase_classifier_apply.1} parent=0 // pred_check
    _
  $region7: #{phrase_classifier_apply.1} parent=0 // pred_check_branch
    %19 = sbr.rel (0) target = $region9
  $region8: #{phrase_classifier_apply.1} parent=0 // pred_region
    _
  $region9: #{phrase_classifier_apply.1} parent=0 // pred_fallthru
    _
  // Predicated region
  $region10: #{phrase_classifier_apply.1} parent=0 // pred_check
    _
  $region11: #{phrase_classifier_apply.1} parent=0 // pred_check_branch
    %21 = sbr.rel (0) target = $region13
  $region12: #{phrase_classifier_apply.1} parent=0 // pred_region
    _
  $region13: #{phrase_classifier_apply.1} parent=0 // pred_fallthru
    _
  // Predicated region
  $region14: #{phrase_classifier_apply.1} parent=0 // pred_check
    _
  $region15: #{phrase_classifier_apply.1} parent=0 // pred_check_branch
    %23 = sbr.rel (0) target = $region17
  $region16: #{phrase_classifier_apply.1} parent=0 // pred_region
    _
  $region17: #{phrase_classifier_apply.1} parent=0 // pred_fallthru
    _
  // Predicated region
  $region18: #{phrase_classifier_apply.1} parent=0 // pred_check
    _
  $region19: #{phrase_classifier_apply.1} parent=0 // pred_check_branch
    %25 = sbr.rel (0) target = $region21
  $region20: #{phrase_classifier_apply.1} parent=0 // pred_region
    _
  $region21: #{phrase_classifier_apply.1} parent=0 // pred_fallthru
    _
  // Predicated region
  $region22: #{phrase_classifier_apply.1} parent=0 // pred_check
    _
  $region23: #{phrase_classifier_apply.1} parent=0 // pred_check_branch
    %27 = sbr.rel (0) target = $region25
  $region24: #{phrase_classifier_apply.1} parent=0 // pred_region
    _
  $region25: #{phrase_classifier_apply.1} parent=0 // pred_fallthru
    _
  // Predicated region
  $region26: #{phrase_classifier_apply.1} parent=0 // pred_check
    _
  $region27: #{phrase_classifier_apply.1} parent=0 // pred_check_branch
    %29 = sbr.rel (0) target = $region29
  $region28: #{phrase_classifier_apply.1} parent=0 // pred_region
    _
  $region29: #{phrase_classifier_apply.1} parent=0 // pred_fallthru
    _
  // Predicated region
  $region30: #{phrase_classifier_apply.1} parent=0 // pred_check
    _
  $region31: #{phrase_classifier_apply.1} parent=0 // pred_check_branch
    %31 = sbr.rel (0) target = $region33
  $region32: #{phrase_classifier_apply.1} parent=0 // pred_region
    _
  $region33: #{phrase_classifier_apply.1} parent=0 // pred_fallthru
    _
  // Predicated region
  $region34: #{phrase_classifier_apply.1} parent=0 // pred_check
    _
  $region35: #{phrase_classifier_apply.1} parent=0 // pred_check_branch
    %33 = sbr.rel (0) target = $region37
  $region36: #{phrase_classifier_apply.1} parent=0 // pred_region
    _
  $region37: #{phrase_classifier_apply.1} parent=0 // pred_fallthru
    _
  %v34 = vlaneseq
  %v35 = vand.u32 %v34, 127
  %v36 = vld [vmem:[%s0] sm:$0xff]
  %v37 = vld [vmem:[%s0 + $0x8] sm:$0xff]
  %v38 = vld [vmem:[%s0 + $0x10] sm:$0xff]
  %v39 = vld [vmem:[%s0 + $0x18] sm:$0xff]
  %v40 = vld [vmem:[%s0 + $0x20] sm:$0xff]
  %v41 = vld [vmem:[%s0 + $0x28] sm:$0xff]
  %v42 = vld [vmem:[%s0 + $0x30] sm:$0xff]
  %v43 = vld [vmem:[%s0 + $0x38] sm:$0xff]
  %v44 = vld [vmem:[%s0 + $0x40] sm:$0xff]
  %v45 = vld [vmem:[%s0 + $0x48] sm:$0xff]
  %v46 = vld [vmem:[%s0 + $0x50] sm:$0xff]
  %v47 = vld [vmem:[%s0 + $0x58] sm:$0xff]
  %v48 = vld [vmem:[%s0 + $0x60] sm:$0xff]
  %v49 = vld [vmem:[%s0 + $0x68] sm:$0xff]
  %v50 = vld [vmem:[%s0 + $0x70] sm:$0xff]
  %v51 = vld [vmem:[%s0 + $0x78] sm:$0xff]
  %52 = vset.pattern.permute.xlu0 0
  %53 = vperm.xlu0 %52, %v36
  %v54 = vpop.permute.xlu0 %53
  %55 = vset.pattern.permute.xlu0 0
  %56 = vperm.xlu0 %55, %v37
  %v57 = vpop.permute.xlu0 %56
  %58 = vset.pattern.permute.xlu0 0
  %59 = vperm.xlu0 %58, %v38
  %v60 = vpop.permute.xlu0 %59
  %61 = vset.pattern.permute.xlu0 0
  %62 = vperm.xlu0 %61, %v39
  %v63 = vpop.permute.xlu0 %62
  %64 = vset.pattern.permute.xlu0 0
  %65 = vperm.xlu0 %64, %v40
  %v66 = vpop.permute.xlu0 %65
  %67 = vset.pattern.permute.xlu0 0
  %68 = vperm.xlu0 %67, %v41
  %v69 = vpop.permute.xlu0 %68
  %70 = vset.pattern.permute.xlu0 0
  %71 = vperm.xlu0 %70, %v42
  %v72 = vpop.permute.xlu0 %71
  %73 = vset.pattern.permute.xlu0 0
  %74 = vperm.xlu0 %73, %v43
  %v75 = vpop.permute.xlu0 %74
  %76 = vset.pattern.permute.xlu0 0
  %77 = vperm.xlu0 %76, %v44
  %v78 = vpop.permute.xlu0 %77
  %79 = vset.pattern.permute.xlu0 0
  %80 = vperm.xlu0 %79, %v45
  %v81 = vpop.permute.xlu0 %80
  %82 = vset.pattern.permute.xlu0 0
  %83 = vperm.xlu0 %82, %v46
  %v84 = vpop.permute.xlu0 %83
  %85 = vset.pattern.permute.xlu0 0
  %86 = vperm.xlu0 %85, %v47
  %v87 = vpop.permute.xlu0 %86
  %88 = vset.pattern.permute.xlu0 0
  %89 = vperm.xlu0 %88, %v48
  %v90 = vpop.permute.xlu0 %89
  %91 = vset.pattern.permute.xlu0 0
  %92 = vperm.xlu0 %91, %v49
  %v93 = vpop.permute.xlu0 %92
  %94 = vset.pattern.permute.xlu0 0
  %95 = vperm.xlu0 %94, %v50
  %v96 = vpop.permute.xlu0 %95
  %97 = vset.pattern.permute.xlu0 0
  %98 = vperm.xlu0 %97, %v51
  %v99 = vpop.permute.xlu0 %98
  %vm100 = vcmp.eq.s32.totalorder %v35, %v54
  %vm101 = vcmp.eq.s32.totalorder %v35, %v57
  %vm102 = vcmp.eq.s32.totalorder %v35, %v60
  %vm103 = vcmp.eq.s32.totalorder %v35, %v63
  %vm104 = vcmp.eq.s32.totalorder %v35, %v66
  %vm105 = vcmp.eq.s32.totalorder %v35, %v69
  %vm106 = vcmp.eq.s32.totalorder %v35, %v72
  %vm107 = vcmp.eq.s32.totalorder %v35, %v75
  %vm108 = vcmp.eq.s32.totalorder %v35, %v78
  %vm109 = vcmp.eq.s32.totalorder %v35, %v81
  %vm110 = vcmp.eq.s32.totalorder %v35, %v84
  %vm111 = vcmp.eq.s32.totalorder %v35, %v87
  %vm112 = vcmp.eq.s32.totalorder %v35, %v90
  %vm113 = vcmp.eq.s32.totalorder %v35, %v93
  %vm114 = vcmp.eq.s32.totalorder %v35, %v96
  %vm115 = vcmp.eq.s32.totalorder %v35, %v99
  %v116 = vsel %vm100, 1, 0
  %v117 = vsel %vm101, 1, 0
  %v118 = vsel %vm102, 1, 0
  %v119 = vsel %vm103, 1, 0
  %v120 = vsel %vm104, 1, 0
  %v121 = vsel %vm105, 1, 0
  %v122 = vsel %vm106, 1, 0
  %v123 = vsel %vm107, 1, 0
  %v124 = vsel %vm108, 1, 0
  %v125 = vsel %vm109, 1, 0
  %v126 = vsel %vm110, 1, 0
  %v127 = vsel %vm111, 1, 0
  %v128 = vsel %vm112, 1, 0
  %v129 = vsel %vm113, 1, 0
  %v130 = vsel %vm114, 1, 0
  %v131 = vsel %vm115, 1, 0
  %v132 = vcvt.s32.f32 %v116
  %v133 = vcvt.s32.f32 %v117
  %v134 = vcvt.s32.f32 %v118
  %v135 = vcvt.s32.f32 %v119
  %v136 = vcvt.s32.f32 %v120
  %v137 = vcvt.s32.f32 %v121
  %v138 = vcvt.s32.f32 %v122
  %v139 = vcvt.s32.f32 %v123
  %v140 = vcvt.s32.f32 %v124
  %v141 = vcvt.s32.f32 %v125
  %v142 = vcvt.s32.f32 %v126
  %v143 = vcvt.s32.f32 %v127
  %v144 = vcvt.s32.f32 %v128
  %v145 = vcvt.s32.f32 %v129
  %v146 = vcvt.s32.f32 %v130
  %v147 = vcvt.s32.f32 %v131
  %v148 = vpack.c.bf16 %v133, %v132
  %v149 = vpack.c.bf16 %v135, %v134
  %v150 = vpack.c.bf16 %v137, %v136
  %v151 = vpack.c.bf16 %v139, %v138
  %v152 = vpack.c.bf16 %v141, %v140
  %v153 = vpack.c.bf16 %v143, %v142
  %v154 = vpack.c.bf16 %v145, %v144
  %v155 = vpack.c.bf16 %v147, %v146
  %v156 = vld [vmem:[%s3] sm:$0xf]
  %v157 = vld [vmem:[%s3 + $0x4] sm:$0xf]
  %v158 = vld [vmem:[%s3 + $0x8] sm:$0xf]
  %v159 = vld [vmem:[%s3 + $0xc] sm:$0xf]
  %v160 = vld [vmem:[%s3 + $0x10] sm:$0xf]
  %v161 = vld [vmem:[%s3 + $0x14] sm:$0xf]
  %v162 = vld [vmem:[%s3 + $0x18] sm:$0xf]
  %v163 = vld [vmem:[%s3 + $0x1c] sm:$0xf]
  %v164 = vld [vmem:[%s3 + $0x20] sm:$0xf]
  %v165 = vld [vmem:[%s3 + $0x24] sm:$0xf]
  %v166 = vld [vmem:[%s3 + $0x28] sm:$0xf]
  %v167 = vld [vmem:[%s3 + $0x2c] sm:$0xf]
  %v168 = vld [vmem:[%s3 + $0x30] sm:$0xf]
  %v169 = vld [vmem:[%s3 + $0x34] sm:$0xf]
  %v170 = vld [vmem:[%s3 + $0x38] sm:$0xf]
  %v171 = vld [vmem:[%s3 + $0x3c] sm:$0xf]
  %v188 = vunpack.c.l.b16 %v156
  %v189 = vunpack.c.l.b16 %v157
  %v190 = vunpack.c.l.b16 %v158
  %v191 = vunpack.c.l.b16 %v159
  %v192 = vunpack.c.l.b16 %v160
  %v193 = vunpack.c.l.b16 %v161
  %v194 = vunpack.c.l.b16 %v162
  %v195 = vunpack.c.l.b16 %v163
  %v196 = vunpack.c.l.b16 %v164
  %v197 = vunpack.c.l.b16 %v165
  %v198 = vunpack.c.l.b16 %v166
  %v199 = vunpack.c.l.b16 %v167
  %v200 = vunpack.c.l.b16 %v168
  %v201 = vunpack.c.l.b16 %v169
  %v202 = vunpack.c.l.b16 %v170
  %v203 = vunpack.c.l.b16 %v171
  %v204 = vpack.c.b16 %v189, %v188
  %v205 = vpack.c.b16 %v191, %v190
  %v206 = vpack.c.b16 %v193, %v192
  %v207 = vpack.c.b16 %v195, %v194
  %v208 = vpack.c.b16 %v197, %v196
  %v209 = vpack.c.b16 %v199, %v198
  %v210 = vpack.c.b16 %v201, %v200
  %v211 = vpack.c.b16 %v203, %v202
  %220 = vmatpush.bf16.msra.mxu0 %v211
  %221 = vmatpush.bf16.msra.mxu0 %v210
  %222 = vmatpush.bf16.msra.mxu0 %v209
  %223 = vmatpush.bf16.msra.mxu0 %v208
  %224 = vmatpush.bf16.msra.mxu0 %v207
  %225 = vmatpush.bf16.msra.mxu0 %v206
  %226 = vmatpush.bf16.msra.mxu0 %v205
  %227 = vmatpush.bf16.msra.mxu0 %v204
  %228 = vmatmul.bf16.gmra.mxu0 %v148
  %v229 = vpop.f32.mrf.mxu0
  %v230 = vadd.f32 0.0, %v229
  %v231 = vpop.f32.mrf.mxu0
  %v232 = vadd.f32 0.0, %v231
  %233 = vmatmul.bf16.gmra.mxu0 %v149
  %v234 = vpop.f32.mrf.mxu0
  %v235 = vadd.f32 0.0, %v234
  %v236 = vpop.f32.mrf.mxu0
  %v237 = vadd.f32 0.0, %v236
  %238 = vmatmul.bf16.gmra.mxu0 %v150
  %v239 = vpop.f32.mrf.mxu0
  %v240 = vadd.f32 0.0, %v239
  %v241 = vpop.f32.mrf.mxu0
  %v242 = vadd.f32 0.0, %v241
  %243 = vmatmul.bf16.gmra.mxu0 %v151
  %v244 = vpop.f32.mrf.mxu0
  %v245 = vadd.f32 0.0, %v244
  %v246 = vpop.f32.mrf.mxu0
  %v247 = vadd.f32 0.0, %v246
  %248 = vmatmul.bf16.gmra.mxu0 %v152
  %v249 = vpop.f32.mrf.mxu0
  %v250 = vadd.f32 0.0, %v249
  %v251 = vpop.f32.mrf.mxu0
  %v252 = vadd.f32 0.0, %v251
  %253 = vmatmul.bf16.gmra.mxu0 %v153
  %v254 = vpop.f32.mrf.mxu0
  %v255 = vadd.f32 0.0, %v254
  %v256 = vpop.f32.mrf.mxu0
  %v257 = vadd.f32 0.0, %v256
  %258 = vmatmul.bf16.gmra.mxu0 %v154
  %v259 = vpop.f32.mrf.mxu0
  %v260 = vadd.f32 0.0, %v259
  %v261 = vpop.f32.mrf.mxu0
  %v262 = vadd.f32 0.0, %v261
  %263 = vmatmul.bf16.gmra.mxu0 %v155
  %v264 = vpop.f32.mrf.mxu0
  %v265 = vadd.f32 0.0, %v264
  %v266 = vpop.f32.mrf.mxu0
  %v267 = vadd.f32 0.0, %v266
  %268 = vdwg.mxu0
  %v269 = vpack.c.bf16 %v232, %v230
  %v270 = vpack.c.bf16 %v237, %v235
  %v271 = vpack.c.bf16 %v242, %v240
  %v272 = vpack.c.bf16 %v247, %v245
  %v273 = vpack.c.bf16 %v252, %v250
  %v274 = vpack.c.bf16 %v257, %v255
  %v275 = vpack.c.bf16 %v262, %v260
  %v276 = vpack.c.bf16 %v267, %v265
  %v277 = vld [vmem:[%s1] sm:$0xff]
  %v278 = vld [vmem:[%s1 + $0x8] sm:$0xff]
  %v279 = vld [vmem:[%s1 + $0x10] sm:$0xff]
  %v280 = vld [vmem:[%s1 + $0x18] sm:$0xff]
  %v281 = vld [vmem:[%s1 + $0x20] sm:$0xff]
  %v282 = vld [vmem:[%s1 + $0x28] sm:$0xff]
  %v283 = vld [vmem:[%s1 + $0x30] sm:$0xff]
  %v284 = vld [vmem:[%s1 + $0x38] sm:$0xff]
  %v285 = vld [vmem:[%s1 + $0x40] sm:$0xff]
  %v286 = vld [vmem:[%s1 + $0x48] sm:$0xff]
  %v287 = vld [vmem:[%s1 + $0x50] sm:$0xff]
  %v288 = vld [vmem:[%s1 + $0x58] sm:$0xff]
  %v289 = vld [vmem:[%s1 + $0x60] sm:$0xff]
  %v290 = vld [vmem:[%s1 + $0x68] sm:$0xff]
  %v291 = vld [vmem:[%s1 + $0x70] sm:$0xff]
  %v292 = vld [vmem:[%s1 + $0x78] sm:$0xff]
  %293 = vset.pattern.permute.xlu0 0
  %294 = vperm.xlu0 %293, %v277
  %v295 = vpop.permute.xlu0 %294
  %296 = vset.pattern.permute.xlu0 0
  %297 = vperm.xlu0 %296, %v278
  %v298 = vpop.permute.xlu0 %297
  %299 = vset.pattern.permute.xlu0 0
  %300 = vperm.xlu0 %299, %v279
  %v301 = vpop.permute.xlu0 %300
  %302 = vset.pattern.permute.xlu0 0
  %303 = vperm.xlu0 %302, %v280
  %v304 = vpop.permute.xlu0 %303
  %305 = vset.pattern.permute.xlu0 0
  %306 = vperm.xlu0 %305, %v281
  %v307 = vpop.permute.xlu0 %306
  %308 = vset.pattern.permute.xlu0 0
  %309 = vperm.xlu0 %308, %v282
  %v310 = vpop.permute.xlu0 %309
  %311 = vset.pattern.permute.xlu0 0
  %312 = vperm.xlu0 %311, %v283
  %v313 = vpop.permute.xlu0 %312
  %314 = vset.pattern.permute.xlu0 0
  %315 = vperm.xlu0 %314, %v284
  %v316 = vpop.permute.xlu0 %315
  %317 = vset.pattern.permute.xlu0 0
  %318 = vperm.xlu0 %317, %v285
  %v319 = vpop.permute.xlu0 %318
  %320 = vset.pattern.permute.xlu0 0
  %321 = vperm.xlu0 %320, %v286
  %v322 = vpop.permute.xlu0 %321
  %323 = vset.pattern.permute.xlu0 0
  %324 = vperm.xlu0 %323, %v287
  %v325 = vpop.permute.xlu0 %324
  %326 = vset.pattern.permute.xlu0 0
  %327 = vperm.xlu0 %326, %v288
  %v328 = vpop.permute.xlu0 %327
  %329 = vset.pattern.permute.xlu0 0
  %330 = vperm.xlu0 %329, %v289
  %v331 = vpop.permute.xlu0 %330
  %332 = vset.pattern.permute.xlu0 0
  %333 = vperm.xlu0 %332, %v290
  %v334 = vpop.permute.xlu0 %333
  %335 = vset.pattern.permute.xlu0 0
  %336 = vperm.xlu0 %335, %v291
  %v337 = vpop.permute.xlu0 %336
  %338 = vset.pattern.permute.xlu0 0
  %339 = vperm.xlu0 %338, %v292
  %v340 = vpop.permute.xlu0 %339
  %vm341 = vcmp.eq.s32.totalorder %v35, %v295
  %vm342 = vcmp.eq.s32.totalorder %v35, %v298
  %vm343 = vcmp.eq.s32.totalorder %v35, %v301
  %vm344 = vcmp.eq.s32.totalorder %v35, %v304
  %vm345 = vcmp.eq.s32.totalorder %v35, %v307
  %vm346 = vcmp.eq.s32.totalorder %v35, %v310
  %vm347 = vcmp.eq.s32.totalorder %v35, %v313
  %vm348 = vcmp.eq.s32.totalorder %v35, %v316
  %vm349 = vcmp.eq.s32.totalorder %v35, %v319
  %vm350 = vcmp.eq.s32.totalorder %v35, %v322
  %vm351 = vcmp.eq.s32.totalorder %v35, %v325
  %vm352 = vcmp.eq.s32.totalorder %v35, %v328
  %vm353 = vcmp.eq.s32.totalorder %v35, %v331
  %vm354 = vcmp.eq.s32.totalorder %v35, %v334
  %vm355 = vcmp.eq.s32.totalorder %v35, %v337
  %vm356 = vcmp.eq.s32.totalorder %v35, %v340
  %v357 = vsel %vm341, 1, 0
  %v358 = vsel %vm342, 1, 0
  %v359 = vsel %vm343, 1, 0
  %v360 = vsel %vm344, 1, 0
  %v361 = vsel %vm345, 1, 0
  %v362 = vsel %vm346, 1, 0
  %v363 = vsel %vm347, 1, 0
  %v364 = vsel %vm348, 1, 0
  %v365 = vsel %vm349, 1, 0
  %v366 = vsel %vm350, 1, 0
  %v367 = vsel %vm351, 1, 0
  %v368 = vsel %vm352, 1, 0
  %v369 = vsel %vm353, 1, 0
  %v370 = vsel %vm354, 1, 0
  %v371 = vsel %vm355, 1, 0
  %v372 = vsel %vm356, 1, 0
  %v373 = vcvt.s32.f32 %v357
  %v374 = vcvt.s32.f32 %v358
  %v375 = vcvt.s32.f32 %v359
  %v376 = vcvt.s32.f32 %v360
  %v377 = vcvt.s32.f32 %v361
  %v378 = vcvt.s32.f32 %v362
  %v379 = vcvt.s32.f32 %v363
  %v380 = vcvt.s32.f32 %v364
  %v381 = vcvt.s32.f32 %v365
  %v382 = vcvt.s32.f32 %v366
  %v383 = vcvt.s32.f32 %v367
  %v384 = vcvt.s32.f32 %v368
  %v385 = vcvt.s32.f32 %v369
  %v386 = vcvt.s32.f32 %v370
  %v387 = vcvt.s32.f32 %v371
  %v388 = vcvt.s32.f32 %v372
  %v389 = vpack.c.bf16 %v374, %v373
  %v390 = vpack.c.bf16 %v376, %v375
  %v391 = vpack.c.bf16 %v378, %v377
  %v392 = vpack.c.bf16 %v380, %v379
  %v393 = vpack.c.bf16 %v382, %v381
  %v394 = vpack.c.bf16 %v384, %v383
  %v395 = vpack.c.bf16 %v386, %v385
  %v396 = vpack.c.bf16 %v388, %v387
  %397 = vmatpush.bf16.msra.mxu0 %v211
  %398 = vmatpush.bf16.msra.mxu0 %v210
  %399 = vmatpush.bf16.msra.mxu0 %v209
  %400 = vmatpush.bf16.msra.mxu0 %v208
  %401 = vmatpush.bf16.msra.mxu0 %v207
  %402 = vmatpush.bf16.msra.mxu0 %v206
  %403 = vmatpush.bf16.msra.mxu0 %v205
  %404 = vmatpush.bf16.msra.mxu0 %v204
  %405 = vmatmul.bf16.gmra.mxu0 %v389
  %v406 = vpop.f32.mrf.mxu0
  %v407 = vadd.f32 0.0, %v406
  %v408 = vpop.f32.mrf.mxu0
  %v409 = vadd.f32 0.0, %v408
  %410 = vmatmul.bf16.gmra.mxu0 %v390
  %v411 = vpop.f32.mrf.mxu0
  %v412 = vadd.f32 0.0, %v411
  %v413 = vpop.f32.mrf.mxu0
  %v414 = vadd.f32 0.0, %v413
  %415 = vmatmul.bf16.gmra.mxu0 %v391
  %v416 = vpop.f32.mrf.mxu0
  %v417 = vadd.f32 0.0, %v416
  %v418 = vpop.f32.mrf.mxu0
  %v419 = vadd.f32 0.0, %v418
  %420 = vmatmul.bf16.gmra.mxu0 %v392
  %v421 = vpop.f32.mrf.mxu0
  %v422 = vadd.f32 0.0, %v421
  %v423 = vpop.f32.mrf.mxu0
  %v424 = vadd.f32 0.0, %v423
  %425 = vmatmul.bf16.gmra.mxu0 %v393
  %v426 = vpop.f32.mrf.mxu0
  %v427 = vadd.f32 0.0, %v426
  %v428 = vpop.f32.mrf.mxu0
  %v429 = vadd.f32 0.0, %v428
  %430 = vmatmul.bf16.gmra.mxu0 %v394
  %v431 = vpop.f32.mrf.mxu0
  %v432 = vadd.f32 0.0, %v431
  %v433 = vpop.f32.mrf.mxu0
  %v434 = vadd.f32 0.0, %v433
  %435 = vmatmul.bf16.gmra.mxu0 %v395
  %v436 = vpop.f32.mrf.mxu0
  %v437 = vadd.f32 0.0, %v436
  %v438 = vpop.f32.mrf.mxu0
  %v439 = vadd.f32 0.0, %v438
  %440 = vmatmul.bf16.gmra.mxu0 %v396
  %v441 = vpop.f32.mrf.mxu0
  %v442 = vadd.f32 0.0, %v441
  %v443 = vpop.f32.mrf.mxu0
  %v444 = vadd.f32 0.0, %v443
  %445 = vdwg.mxu0
  %v446 = vpack.c.bf16 %v409, %v407
  %v447 = vpack.c.bf16 %v414, %v412
  %v448 = vpack.c.bf16 %v419, %v417
  %v449 = vpack.c.bf16 %v424, %v422
  %v450 = vpack.c.bf16 %v429, %v427
  %v451 = vpack.c.bf16 %v434, %v432
  %v452 = vpack.c.bf16 %v439, %v437
  %v453 = vpack.c.bf16 %v444, %v442
  %v454 = vld [vmem:[%s2] sm:$0xff]
  %v455 = vld [vmem:[%s2 + $0x8] sm:$0xff]
  %v456 = vld [vmem:[%s2 + $0x10] sm:$0xff]
  %v457 = vld [vmem:[%s2 + $0x18] sm:$0xff]
  %v458 = vld [vmem:[%s2 + $0x20] sm:$0xff]
  %v459 = vld [vmem:[%s2 + $0x28] sm:$0xff]
  %v460 = vld [vmem:[%s2 + $0x30] sm:$0xff]
  %v461 = vld [vmem:[%s2 + $0x38] sm:$0xff]
  %v462 = vld [vmem:[%s2 + $0x40] sm:$0xff]
  %v463 = vld [vmem:[%s2 + $0x48] sm:$0xff]
  %v464 = vld [vmem:[%s2 + $0x50] sm:$0xff]
  %v465 = vld [vmem:[%s2 + $0x58] sm:$0xff]
  %v466 = vld [vmem:[%s2 + $0x60] sm:$0xff]
  %v467 = vld [vmem:[%s2 + $0x68] sm:$0xff]
  %v468 = vld [vmem:[%s2 + $0x70] sm:$0xff]
  %v469 = vld [vmem:[%s2 + $0x78] sm:$0xff]
  %470 = vset.pattern.permute.xlu0 0
  %471 = vperm.xlu0 %470, %v454
  %v472 = vpop.permute.xlu0 %471
  %473 = vset.pattern.permute.xlu0 0
  %474 = vperm.xlu0 %473, %v455
  %v475 = vpop.permute.xlu0 %474
  %476 = vset.pattern.permute.xlu0 0
  %477 = vperm.xlu0 %476, %v456
  %v478 = vpop.permute.xlu0 %477
  %479 = vset.pattern.permute.xlu0 0
  %480 = vperm.xlu0 %479, %v457
  %v481 = vpop.permute.xlu0 %480
  %482 = vset.pattern.permute.xlu0 0
  %483 = vperm.xlu0 %482, %v458
  %v484 = vpop.permute.xlu0 %483
  %485 = vset.pattern.permute.xlu0 0
  %486 = vperm.xlu0 %485, %v459
  %v487 = vpop.permute.xlu0 %486
  %488 = vset.pattern.permute.xlu0 0
  %489 = vperm.xlu0 %488, %v460
  %v490 = vpop.permute.xlu0 %489
  %491 = vset.pattern.permute.xlu0 0
  %492 = vperm.xlu0 %491, %v461
  %v493 = vpop.permute.xlu0 %492
  %494 = vset.pattern.permute.xlu0 0
  %495 = vperm.xlu0 %494, %v462
  %v496 = vpop.permute.xlu0 %495
  %497 = vset.pattern.permute.xlu0 0
  %498 = vperm.xlu0 %497, %v463
  %v499 = vpop.permute.xlu0 %498
  %500 = vset.pattern.permute.xlu0 0
  %501 = vperm.xlu0 %500, %v464
  %v502 = vpop.permute.xlu0 %501
  %503 = vset.pattern.permute.xlu0 0
  %504 = vperm.xlu0 %503, %v465
  %v505 = vpop.permute.xlu0 %504
  %506 = vset.pattern.permute.xlu0 0
  %507 = vperm.xlu0 %506, %v466
  %v508 = vpop.permute.xlu0 %507
  %509 = vset.pattern.permute.xlu0 0
  %510 = vperm.xlu0 %509, %v467
  %v511 = vpop.permute.xlu0 %510
  %512 = vset.pattern.permute.xlu0 0
  %513 = vperm.xlu0 %512, %v468
  %v514 = vpop.permute.xlu0 %513
  %515 = vset.pattern.permute.xlu0 0
  %516 = vperm.xlu0 %515, %v469
  %v517 = vpop.permute.xlu0 %516
  %vm518 = vcmp.eq.s32.totalorder %v35, %v472
  %vm519 = vcmp.eq.s32.totalorder %v35, %v475
  %vm520 = vcmp.eq.s32.totalorder %v35, %v478
  %vm521 = vcmp.eq.s32.totalorder %v35, %v481
  %vm522 = vcmp.eq.s32.totalorder %v35, %v484
  %vm523 = vcmp.eq.s32.totalorder %v35, %v487
  %vm524 = vcmp.eq.s32.totalorder %v35, %v490
  %vm525 = vcmp.eq.s32.totalorder %v35, %v493
  %vm526 = vcmp.eq.s32.totalorder %v35, %v496
  %vm527 = vcmp.eq.s32.totalorder %v35, %v499
  %vm528 = vcmp.eq.s32.totalorder %v35, %v502
  %vm529 = vcmp.eq.s32.totalorder %v35, %v505
  %vm530 = vcmp.eq.s32.totalorder %v35, %v508
  %vm531 = vcmp.eq.s32.totalorder %v35, %v511
  %vm532 = vcmp.eq.s32.totalorder %v35, %v514
  %vm533 = vcmp.eq.s32.totalorder %v35, %v517
  %v534 = vsel %vm518, 1, 0
  %v535 = vsel %vm519, 1, 0
  %v536 = vsel %vm520, 1, 0
  %v537 = vsel %vm521, 1, 0
  %v538 = vsel %vm522, 1, 0
  %v539 = vsel %vm523, 1, 0
  %v540 = vsel %vm524, 1, 0
  %v541 = vsel %vm525, 1, 0
  %v542 = vsel %vm526, 1, 0
  %v543 = vsel %vm527, 1, 0
  %v544 = vsel %vm528, 1, 0
  %v545 = vsel %vm529, 1, 0
  %v546 = vsel %vm530, 1, 0
  %v547 = vsel %vm531, 1, 0
  %v548 = vsel %vm532, 1, 0
  %v549 = vsel %vm533, 1, 0
  %v550 = vcvt.s32.f32 %v534
  %v551 = vcvt.s32.f32 %v535
  %v552 = vcvt.s32.f32 %v536
  %v553 = vcvt.s32.f32 %v537
  %v554 = vcvt.s32.f32 %v538
  %v555 = vcvt.s32.f32 %v539
  %v556 = vcvt.s32.f32 %v540
  %v557 = vcvt.s32.f32 %v541
  %v558 = vcvt.s32.f32 %v542
  %v559 = vcvt.s32.f32 %v543
  %v560 = vcvt.s32.f32 %v544
  %v561 = vcvt.s32.f32 %v545
  %v562 = vcvt.s32.f32 %v546
  %v563 = vcvt.s32.f32 %v547
  %v564 = vcvt.s32.f32 %v548
  %v565 = vcvt.s32.f32 %v549
  %v566 = vpack.c.bf16 %v551, %v550
  %v567 = vpack.c.bf16 %v553, %v552
  %v568 = vpack.c.bf16 %v555, %v554
  %v569 = vpack.c.bf16 %v557, %v556
  %v570 = vpack.c.bf16 %v559, %v558
  %v571 = vpack.c.bf16 %v561, %v560
  %v572 = vpack.c.bf16 %v563, %v562
  %v573 = vpack.c.bf16 %v565, %v564
  %v574 = vld [vmem:[%s4] sm:$0xf]
  %v575 = vld [vmem:[%s4 + $0x4] sm:$0xf]
  %v576 = vld [vmem:[%s4 + $0x8] sm:$0xf]
  %v577 = vld [vmem:[%s4 + $0xc] sm:$0xf]
  %v578 = vld [vmem:[%s4 + $0x10] sm:$0xf]
  %v579 = vld [vmem:[%s4 + $0x14] sm:$0xf]
  %v580 = vld [vmem:[%s4 + $0x18] sm:$0xf]
  %v581 = vld [vmem:[%s4 + $0x1c] sm:$0xf]
  %v582 = vld [vmem:[%s4 + $0x20] sm:$0xf]
  %v583 = vld [vmem:[%s4 + $0x24] sm:$0xf]
  %v584 = vld [vmem:[%s4 + $0x28] sm:$0xf]
  %v585 = vld [vmem:[%s4 + $0x2c] sm:$0xf]
  %v586 = vld [vmem:[%s4 + $0x30] sm:$0xf]
  %v587 = vld [vmem:[%s4 + $0x34] sm:$0xf]
  %v588 = vld [vmem:[%s4 + $0x38] sm:$0xf]
  %v589 = vld [vmem:[%s4 + $0x3c] sm:$0xf]
  %v606 = vunpack.c.l.b16 %v574
  %v607 = vunpack.c.l.b16 %v575
  %v608 = vunpack.c.l.b16 %v576
  %v609 = vunpack.c.l.b16 %v577
  %v610 = vunpack.c.l.b16 %v578
  %v611 = vunpack.c.l.b16 %v579
  %v612 = vunpack.c.l.b16 %v580
  %v613 = vunpack.c.l.b16 %v581
  %v614 = vunpack.c.l.b16 %v582
  %v615 = vunpack.c.l.b16 %v583
  %v616 = vunpack.c.l.b16 %v584
  %v617 = vunpack.c.l.b16 %v585
  %v618 = vunpack.c.l.b16 %v586
  %v619 = vunpack.c.l.b16 %v587
  %v620 = vunpack.c.l.b16 %v588
  %v621 = vunpack.c.l.b16 %v589
  %v622 = vpack.c.b16 %v607, %v606
  %v623 = vpack.c.b16 %v609, %v608
  %v624 = vpack.c.b16 %v611, %v610
  %v625 = vpack.c.b16 %v613, %v612
  %v626 = vpack.c.b16 %v615, %v614
  %v627 = vpack.c.b16 %v617, %v616
  %v628 = vpack.c.b16 %v619, %v618
  %v629 = vpack.c.b16 %v621, %v620
  %638 = vmatpush.bf16.msra.mxu0 %v629
  %639 = vmatpush.bf16.msra.mxu0 %v628
  %640 = vmatpush.bf16.msra.mxu0 %v627
  %641 = vmatpush.bf16.msra.mxu0 %v626
  %642 = vmatpush.bf16.msra.mxu0 %v625
  %643 = vmatpush.bf16.msra.mxu0 %v624
  %644 = vmatpush.bf16.msra.mxu0 %v623
  %645 = vmatpush.bf16.msra.mxu0 %v622
  %646 = vmatmul.bf16.gmra.mxu0 %v566
  %v647 = vpop.f32.mrf.mxu0
  %v648 = vadd.f32 0.0, %v647
  %v649 = vpop.f32.mrf.mxu0
  %v650 = vadd.f32 0.0, %v649
  %651 = vmatmul.bf16.gmra.mxu0 %v567
  %v652 = vpop.f32.mrf.mxu0
  %v653 = vadd.f32 0.0, %v652
  %v654 = vpop.f32.mrf.mxu0
  %v655 = vadd.f32 0.0, %v654
  %656 = vmatmul.bf16.gmra.mxu0 %v568
  %v657 = vpop.f32.mrf.mxu0
  %v658 = vadd.f32 0.0, %v657
  %v659 = vpop.f32.mrf.mxu0
  %v660 = vadd.f32 0.0, %v659
  %661 = vmatmul.bf16.gmra.mxu0 %v569
  %v662 = vpop.f32.mrf.mxu0
  %v663 = vadd.f32 0.0, %v662
  %v664 = vpop.f32.mrf.mxu0
  %v665 = vadd.f32 0.0, %v664
  %666 = vmatmul.bf16.gmra.mxu0 %v570
  %v667 = vpop.f32.mrf.mxu0
  %v668 = vadd.f32 0.0, %v667
  %v669 = vpop.f32.mrf.mxu0
  %v670 = vadd.f32 0.0, %v669
  %671 = vmatmul.bf16.gmra.mxu0 %v571
  %v672 = vpop.f32.mrf.mxu0
  %v673 = vadd.f32 0.0, %v672
  %v674 = vpop.f32.mrf.mxu0
  %v675 = vadd.f32 0.0, %v674
  %676 = vmatmul.bf16.gmra.mxu0 %v572
  %v677 = vpop.f32.mrf.mxu0
  %v678 = vadd.f32 0.0, %v677
  %v679 = vpop.f32.mrf.mxu0
  %v680 = vadd.f32 0.0, %v679
  %681 = vmatmul.bf16.gmra.mxu0 %v573
  %v682 = vpop.f32.mrf.mxu0
  %v683 = vadd.f32 0.0, %v682
  %v684 = vpop.f32.mrf.mxu0
  %v685 = vadd.f32 0.0, %v684
  %686 = vdwg.mxu0
  %v687 = vpack.c.bf16 %v650, %v648
  %v688 = vpack.c.bf16 %v655, %v653
  %v689 = vpack.c.bf16 %v660, %v658
  %v690 = vpack.c.bf16 %v665, %v663
  %v691 = vpack.c.bf16 %v670, %v668
  %v692 = vpack.c.bf16 %v675, %v673
  %v693 = vpack.c.bf16 %v680, %v678
  %v694 = vpack.c.bf16 %v685, %v683
  %v695 = vld [vmem:[%s5] sm:$0xff]
  %v696 = vld [vmem:[%s5 + $0x8] sm:$0xff]
  %v697 = vld [vmem:[%s5 + $0x10] sm:$0xff]
  %v698 = vld [vmem:[%s5 + $0x18] sm:$0xff]
  %v699 = vld [vmem:[%s5 + $0x20] sm:$0xff]
  %v700 = vld [vmem:[%s5 + $0x28] sm:$0xff]
  %v701 = vld [vmem:[%s5 + $0x30] sm:$0xff]
  %v702 = vld [vmem:[%s5 + $0x38] sm:$0xff]
  %v703 = vld [vmem:[%s5 + $0x40] sm:$0xff]
  %v704 = vld [vmem:[%s5 + $0x48] sm:$0xff]
  %v705 = vld [vmem:[%s5 + $0x50] sm:$0xff]
  %v706 = vld [vmem:[%s5 + $0x58] sm:$0xff]
  %v707 = vld [vmem:[%s5 + $0x60] sm:$0xff]
  %v708 = vld [vmem:[%s5 + $0x68] sm:$0xff]
  %v709 = vld [vmem:[%s5 + $0x70] sm:$0xff]
  %v710 = vld [vmem:[%s5 + $0x78] sm:$0xff]
  %v711 = vld [vmem:[%s5 + $0x80] sm:$0xff]
  %v712 = vld [vmem:[%s5 + $0x88] sm:$0xff]
  %v713 = vld [vmem:[%s5 + $0x90] sm:$0xff]
  %v714 = vld [vmem:[%s5 + $0x98] sm:$0xff]
  %v715 = vld [vmem:[%s5 + $0xa0] sm:$0xff]
  %v716 = vld [vmem:[%s5 + $0xa8] sm:$0xff]
  %v717 = vld [vmem:[%s5 + $0xb0] sm:$0xff]
  %v718 = vld [vmem:[%s5 + $0xb8] sm:$0xff]
  %v719 = vld [vmem:[%s5 + $0xc0] sm:$0xff]
  %v720 = vld [vmem:[%s5 + $0xc8] sm:$0xff]
  %v721 = vld [vmem:[%s5 + $0xd0] sm:$0xff]
  %v722 = vld [vmem:[%s5 + $0xd8] sm:$0xff]
  %v723 = vld [vmem:[%s5 + $0xe0] sm:$0xff]
  %v724 = vld [vmem:[%s5 + $0xe8] sm:$0xff]
  %v725 = vld [vmem:[%s5 + $0xf0] sm:$0xff]
  %v726 = vld [vmem:[%s5 + $0xf8] sm:$0xff]
  %v727 = vld [vmem:[%s5 + $0x100] sm:$0xff]
  %v728 = vld [vmem:[%s5 + $0x108] sm:$0xff]
  %v729 = vld [vmem:[%s5 + $0x110] sm:$0xff]
  %v730 = vld [vmem:[%s5 + $0x118] sm:$0xff]
  %v731 = vld [vmem:[%s5 + $0x120] sm:$0xff]
  %v732 = vld [vmem:[%s5 + $0x128] sm:$0xff]
  %v733 = vld [vmem:[%s5 + $0x130] sm:$0xff]
  %v734 = vld [vmem:[%s5 + $0x138] sm:$0xff]
  %v735 = vld [vmem:[%s5 + $0x140] sm:$0xff]
  %v736 = vld [vmem:[%s5 + $0x148] sm:$0xff]
  %v737 = vld [vmem:[%s5 + $0x150] sm:$0xff]
  %v738 = vld [vmem:[%s5 + $0x158] sm:$0xff]
  %v739 = vld [vmem:[%s5 + $0x160] sm:$0xff]
  %v740 = vld [vmem:[%s5 + $0x168] sm:$0xff]
  %v741 = vld [vmem:[%s5 + $0x170] sm:$0xff]
  %v742 = vld [vmem:[%s5 + $0x178] sm:$0xff]
  %v743 = vld [vmem:[%s5 + $0x180] sm:$0xff]
  %v744 = vld [vmem:[%s5 + $0x188] sm:$0xff]
  %v745 = vld [vmem:[%s5 + $0x190] sm:$0xff]
  %v746 = vld [vmem:[%s5 + $0x198] sm:$0xff]
  %v747 = vld [vmem:[%s5 + $0x1a0] sm:$0xff]
  %v748 = vld [vmem:[%s5 + $0x1a8] sm:$0xff]
  %v749 = vld [vmem:[%s5 + $0x1b0] sm:$0xff]
  %v750 = vld [vmem:[%s5 + $0x1b8] sm:$0xff]
  %v751 = vld [vmem:[%s5 + $0x1c0] sm:$0xff]
  %v752 = vld [vmem:[%s5 + $0x1c8] sm:$0xff]
  %v753 = vld [vmem:[%s5 + $0x1d0] sm:$0xff]
  %v754 = vld [vmem:[%s5 + $0x1d8] sm:$0xff]
  %v755 = vld [vmem:[%s5 + $0x1e0] sm:$0xff]
  %v756 = vld [vmem:[%s5 + $0x1e8] sm:$0xff]
  %v757 = vld [vmem:[%s5 + $0x1f0] sm:$0xff]
  %v758 = vld [vmem:[%s5 + $0x1f8] sm:$0xff]
  %v759 = vld [vmem:[%s5 + $0x200] sm:$0xff]
  %v760 = vld [vmem:[%s5 + $0x208] sm:$0xff]
  %v761 = vld [vmem:[%s5 + $0x210] sm:$0xff]
  %v762 = vld [vmem:[%s5 + $0x218] sm:$0xff]
  %v763 = vld [vmem:[%s5 + $0x220] sm:$0xff]
  %v764 = vld [vmem:[%s5 + $0x228] sm:$0xff]
  %v765 = vld [vmem:[%s5 + $0x230] sm:$0xff]
  %v766 = vld [vmem:[%s5 + $0x238] sm:$0xff]
  %v767 = vld [vmem:[%s5 + $0x240] sm:$0xff]
  %v768 = vld [vmem:[%s5 + $0x248] sm:$0xff]
  %v769 = vld [vmem:[%s5 + $0x250] sm:$0xff]
  %v770 = vld [vmem:[%s5 + $0x258] sm:$0xff]
  %v771 = vld [vmem:[%s5 + $0x260] sm:$0xff]
  %v772 = vld [vmem:[%s5 + $0x268] sm:$0xff]
  %v773 = vld [vmem:[%s5 + $0x270] sm:$0xff]
  %v774 = vld [vmem:[%s5 + $0x278] sm:$0xff]
  %v775 = vld [vmem:[%s5 + $0x280] sm:$0xff]
  %v776 = vld [vmem:[%s5 + $0x288] sm:$0xff]
  %v777 = vld [vmem:[%s5 + $0x290] sm:$0xff]
  %v778 = vld [vmem:[%s5 + $0x298] sm:$0xff]
  %v779 = vld [vmem:[%s5 + $0x2a0] sm:$0xff]
  %v780 = vld [vmem:[%s5 + $0x2a8] sm:$0xff]
  %v781 = vld [vmem:[%s5 + $0x2b0] sm:$0xff]
  %v782 = vld [vmem:[%s5 + $0x2b8] sm:$0xff]
  %v783 = vld [vmem:[%s5 + $0x2c0] sm:$0xff]
  %v784 = vld [vmem:[%s5 + $0x2c8] sm:$0xff]
  %v785 = vld [vmem:[%s5 + $0x2d0] sm:$0xff]
  %v786 = vld [vmem:[%s5 + $0x2d8] sm:$0xff]
  %v787 = vld [vmem:[%s5 + $0x2e0] sm:$0xff]
  %v788 = vld [vmem:[%s5 + $0x2e8] sm:$0xff]
  %v789 = vld [vmem:[%s5 + $0x2f0] sm:$0xff]
  %v790 = vld [vmem:[%s5 + $0x2f8] sm:$0xff]
  %v791 = vld [vmem:[%s5 + $0x300] sm:$0xff]
  %v792 = vld [vmem:[%s5 + $0x308] sm:$0xff]
  %v793 = vld [vmem:[%s5 + $0x310] sm:$0xff]
  %v794 = vld [vmem:[%s5 + $0x318] sm:$0xff]
  %v795 = vld [vmem:[%s5 + $0x320] sm:$0xff]
  %v796 = vld [vmem:[%s5 + $0x328] sm:$0xff]
  %v797 = vld [vmem:[%s5 + $0x330] sm:$0xff]
  %v798 = vld [vmem:[%s5 + $0x338] sm:$0xff]
  %v799 = vld [vmem:[%s5 + $0x340] sm:$0xff]
  %v800 = vld [vmem:[%s5 + $0x348] sm:$0xff]
  %v801 = vld [vmem:[%s5 + $0x350] sm:$0xff]
  %v802 = vld [vmem:[%s5 + $0x358] sm:$0xff]
  %v803 = vld [vmem:[%s5 + $0x360] sm:$0xff]
  %v804 = vld [vmem:[%s5 + $0x368] sm:$0xff]
  %v805 = vld [vmem:[%s5 + $0x370] sm:$0xff]
  %v806 = vld [vmem:[%s5 + $0x378] sm:$0xff]
  %v807 = vld [vmem:[%s5 + $0x380] sm:$0xff]
  %v808 = vld [vmem:[%s5 + $0x388] sm:$0xff]
  %v809 = vld [vmem:[%s5 + $0x390] sm:$0xff]
  %v810 = vld [vmem:[%s5 + $0x398] sm:$0xff]
  %v811 = vld [vmem:[%s5 + $0x3a0] sm:$0xff]
  %v812 = vld [vmem:[%s5 + $0x3a8] sm:$0xff]
  %v813 = vld [vmem:[%s5 + $0x3b0] sm:$0xff]
  %v814 = vld [vmem:[%s5 + $0x3b8] sm:$0xff]
  %v815 = vld [vmem:[%s5 + $0x3c0] sm:$0xff]
  %v816 = vld [vmem:[%s5 + $0x3c8] sm:$0xff]
  %v817 = vld [vmem:[%s5 + $0x3d0] sm:$0xff]
  %v818 = vld [vmem:[%s5 + $0x3d8] sm:$0xff]
  %v819 = vld [vmem:[%s5 + $0x3e0] sm:$0xff]
  %v820 = vld [vmem:[%s5 + $0x3e8] sm:$0xff]
  %v821 = vld [vmem:[%s5 + $0x3f0] sm:$0xff]
  %v822 = vld [vmem:[%s5 + $0x3f8] sm:$0xff]
  %v887 = vunpack.c.l.b16 %v759
  %v888 = vunpack.c.h.b16 %v759
  %v889 = vunpack.c.l.b16 %v760
  %v890 = vunpack.c.h.b16 %v760
  %v891 = vunpack.c.l.b16 %v761
  %v892 = vunpack.c.h.b16 %v761
  %v893 = vunpack.c.l.b16 %v762
  %v894 = vunpack.c.h.b16 %v762
  %v895 = vunpack.c.l.b16 %v763
  %v896 = vunpack.c.h.b16 %v763
  %v897 = vunpack.c.l.b16 %v764
  %v898 = vunpack.c.h.b16 %v764
  %v899 = vunpack.c.l.b16 %v765
  %v900 = vunpack.c.h.b16 %v765
  %v901 = vunpack.c.l.b16 %v766
  %v902 = vunpack.c.h.b16 %v766
  %v903 = vunpack.c.l.b16 %v767
  %v904 = vunpack.c.h.b16 %v767
  %v905 = vunpack.c.l.b16 %v768
  %v906 = vunpack.c.h.b16 %v768
  %v907 = vunpack.c.l.b16 %v769
  %v908 = vunpack.c.h.b16 %v769
  %v909 = vunpack.c.l.b16 %v770
  %v910 = vunpack.c.h.b16 %v770
  %v911 = vunpack.c.l.b16 %v771
  %v912 = vunpack.c.h.b16 %v771
  %v913 = vunpack.c.l.b16 %v772
  %v914 = vunpack.c.h.b16 %v772
  %v915 = vunpack.c.l.b16 %v773
  %v916 = vunpack.c.h.b16 %v773
  %v917 = vunpack.c.l.b16 %v774
  %v918 = vunpack.c.h.b16 %v774
  %v919 = vunpack.c.l.b16 %v775
  %v920 = vunpack.c.h.b16 %v775
  %v921 = vunpack.c.l.b16 %v776
  %v922 = vunpack.c.h.b16 %v776
  %v923 = vunpack.c.l.b16 %v777
  %v924 = vunpack.c.h.b16 %v777
  %v925 = vunpack.c.l.b16 %v778
  %v926 = vunpack.c.h.b16 %v778
  %v927 = vunpack.c.l.b16 %v779
  %v928 = vunpack.c.h.b16 %v779
  %v929 = vunpack.c.l.b16 %v780
  %v930 = vunpack.c.h.b16 %v780
  %v931 = vunpack.c.l.b16 %v781
  %v932 = vunpack.c.h.b16 %v781
  %v933 = vunpack.c.l.b16 %v782
  %v934 = vunpack.c.h.b16 %v782
  %v935 = vunpack.c.l.b16 %v783
  %v936 = vunpack.c.h.b16 %v783
  %v937 = vunpack.c.l.b16 %v784
  %v938 = vunpack.c.h.b16 %v784
  %v939 = vunpack.c.l.b16 %v785
  %v940 = vunpack.c.h.b16 %v785
  %v941 = vunpack.c.l.b16 %v786
  %v942 = vunpack.c.h.b16 %v786
  %v943 = vunpack.c.l.b16 %v787
  %v944 = vunpack.c.h.b16 %v787
  %v945 = vunpack.c.l.b16 %v788
  %v946 = vunpack.c.h.b16 %v788
  %v947 = vunpack.c.l.b16 %v789
  %v948 = vunpack.c.h.b16 %v789
  %v949 = vunpack.c.l.b16 %v790
  %v950 = vunpack.c.h.b16 %v790
  %v951 = vunpack.c.l.b16 %v791
  %v952 = vunpack.c.h.b16 %v791
  %v953 = vunpack.c.l.b16 %v792
  %v954 = vunpack.c.h.b16 %v792
  %v955 = vunpack.c.l.b16 %v793
  %v956 = vunpack.c.h.b16 %v793
  %v957 = vunpack.c.l.b16 %v794
  %v958 = vunpack.c.h.b16 %v794
  %v959 = vunpack.c.l.b16 %v795
  %v960 = vunpack.c.h.b16 %v795
  %v961 = vunpack.c.l.b16 %v796
  %v962 = vunpack.c.h.b16 %v796
  %v963 = vunpack.c.l.b16 %v797
  %v964 = vunpack.c.h.b16 %v797
  %v965 = vunpack.c.l.b16 %v798
  %v966 = vunpack.c.h.b16 %v798
  %v967 = vunpack.c.l.b16 %v799
  %v968 = vunpack.c.h.b16 %v799
  %v969 = vunpack.c.l.b16 %v800
  %v970 = vunpack.c.h.b16 %v800
  %v971 = vunpack.c.l.b16 %v801
  %v972 = vunpack.c.h.b16 %v801
  %v973 = vunpack.c.l.b16 %v802
  %v974 = vunpack.c.h.b16 %v802
  %v975 = vunpack.c.l.b16 %v803
  %v976 = vunpack.c.h.b16 %v803
  %v977 = vunpack.c.l.b16 %v804
  %v978 = vunpack.c.h.b16 %v804
  %v979 = vunpack.c.l.b16 %v805
  %v980 = vunpack.c.h.b16 %v805
  %v981 = vunpack.c.l.b16 %v806
  %v982 = vunpack.c.h.b16 %v806
  %v983 = vunpack.c.l.b16 %v807
  %v984 = vunpack.c.h.b16 %v807
  %v985 = vunpack.c.l.b16 %v808
  %v986 = vunpack.c.h.b16 %v808
  %v987 = vunpack.c.l.b16 %v809
  %v988 = vunpack.c.h.b16 %v809
  %v989 = vunpack.c.l.b16 %v810
  %v990 = vunpack.c.h.b16 %v810
  %v991 = vunpack.c.l.b16 %v811
  %v992 = vunpack.c.h.b16 %v811
  %v993 = vunpack.c.l.b16 %v812
  %v994 = vunpack.c.h.b16 %v812
  %v995 = vunpack.c.l.b16 %v813
  %v996 = vunpack.c.h.b16 %v813
  %v997 = vunpack.c.l.b16 %v814
  %v998 = vunpack.c.h.b16 %v814
  %v999 = vunpack.c.l.b16 %v815
  %v1000 = vunpack.c.h.b16 %v815
  %v1001 = vunpack.c.l.b16 %v816
  %v1002 = vunpack.c.h.b16 %v816
  %v1003 = vunpack.c.l.b16 %v817
  %v1004 = vunpack.c.h.b16 %v817
  %v1005 = vunpack.c.l.b16 %v818
  %v1006 = vunpack.c.h.b16 %v818
  %v1007 = vunpack.c.l.b16 %v819
  %v1008 = vunpack.c.h.b16 %v819
  %v1009 = vunpack.c.l.b16 %v820
  %v1010 = vunpack.c.h.b16 %v820
  %v1011 = vunpack.c.l.b16 %v821
  %v1012 = vunpack.c.h.b16 %v821
  %v1013 = vunpack.c.l.b16 %v822
  %v1014 = vunpack.c.h.b16 %v822
  %v1015 = vpack.c.b16 %v895, %v887
  %v1016 = vpack.c.b16 %v896, %v888
  %v1017 = vpack.c.b16 %v897, %v889
  %v1018 = vpack.c.b16 %v898, %v890
  %v1019 = vpack.c.b16 %v899, %v891
  %v1020 = vpack.c.b16 %v900, %v892
  %v1021 = vpack.c.b16 %v901, %v893
  %v1022 = vpack.c.b16 %v902, %v894
  %v1023 = vpack.c.b16 %v911, %v903
  %v1024 = vpack.c.b16 %v912, %v904
  %v1025 = vpack.c.b16 %v913, %v905
  %v1026 = vpack.c.b16 %v914, %v906
  %v1027 = vpack.c.b16 %v915, %v907
  %v1028 = vpack.c.b16 %v916, %v908
  %v1029 = vpack.c.b16 %v917, %v909
  %v1030 = vpack.c.b16 %v918, %v910
  %v1031 = vpack.c.b16 %v927, %v919
  %v1032 = vpack.c.b16 %v928, %v920
  %v1033 = vpack.c.b16 %v929, %v921
  %v1034 = vpack.c.b16 %v930, %v922
  %v1035 = vpack.c.b16 %v931, %v923
  %v1036 = vpack.c.b16 %v932, %v924
  %v1037 = vpack.c.b16 %v933, %v925
  %v1038 = vpack.c.b16 %v934, %v926
  %v1039 = vpack.c.b16 %v943, %v935
  %v1040 = vpack.c.b16 %v944, %v936
  %v1041 = vpack.c.b16 %v945, %v937
  %v1042 = vpack.c.b16 %v946, %v938
  %v1043 = vpack.c.b16 %v947, %v939
  %v1044 = vpack.c.b16 %v948, %v940
  %v1045 = vpack.c.b16 %v949, %v941
  %v1046 = vpack.c.b16 %v950, %v942
  %v1047 = vpack.c.b16 %v959, %v951
  %v1048 = vpack.c.b16 %v960, %v952
  %v1049 = vpack.c.b16 %v961, %v953
  %v1050 = vpack.c.b16 %v962, %v954
  %v1051 = vpack.c.b16 %v963, %v955
  %v1052 = vpack.c.b16 %v964, %v956
  %v1053 = vpack.c.b16 %v965, %v957
  %v1054 = vpack.c.b16 %v966, %v958
  %v1055 = vpack.c.b16 %v975, %v967
  %v1056 = vpack.c.b16 %v976, %v968
  %v1057 = vpack.c.b16 %v977, %v969
  %v1058 = vpack.c.b16 %v978, %v970
  %v1059 = vpack.c.b16 %v979, %v971
  %v1060 = vpack.c.b16 %v980, %v972
  %v1061 = vpack.c.b16 %v981, %v973
  %v1062 = vpack.c.b16 %v982, %v974
  %v1063 = vpack.c.b16 %v991, %v983
  %v1064 = vpack.c.b16 %v992, %v984
  %v1065 = vpack.c.b16 %v993, %v985
  %v1066 = vpack.c.b16 %v994, %v986
  %v1067 = vpack.c.b16 %v995, %v987
  %v1068 = vpack.c.b16 %v996, %v988
  %v1069 = vpack.c.b16 %v997, %v989
  %v1070 = vpack.c.b16 %v998, %v990
  %v1071 = vpack.c.b16 %v1007, %v999
  %v1072 = vpack.c.b16 %v1008, %v1000
  %v1073 = vpack.c.b16 %v1009, %v1001
  %v1074 = vpack.c.b16 %v1010, %v1002
  %v1075 = vpack.c.b16 %v1011, %v1003
  %v1076 = vpack.c.b16 %v1012, %v1004
  %v1077 = vpack.c.b16 %v1013, %v1005
  %v1078 = vpack.c.b16 %v1014, %v1006
  %1143 = vmatpush.bf16.msra.mxu0 %v1071
  %1144 = vmatpush.bf16.msra.mxu0 %v1063
  %1145 = vmatpush.bf16.msra.mxu0 %v1055
  %1146 = vmatpush.bf16.msra.mxu0 %v1047
  %1147 = vmatpush.bf16.msra.mxu0 %v1039
  %1148 = vmatpush.bf16.msra.mxu0 %v1031
  %1149 = vmatpush.bf16.msra.mxu0 %v1023
  %1150 = vmatpush.bf16.msra.mxu0 %v1015
  %1151 = vmatmul.bf16.gmra.mxu0 %v446
  %v1152 = vpop.f32.mrf.mxu0
  %v1153 = vadd.f32 0.0, %v1152
  %v1154 = vpop.f32.mrf.mxu0
  %v1155 = vadd.f32 0.0, %v1154
  %1156 = vmatmul.bf16.gmra.mxu0 %v447
  %v1157 = vpop.f32.mrf.mxu0
  %v1158 = vadd.f32 0.0, %v1157
  %v1159 = vpop.f32.mrf.mxu0
  %v1160 = vadd.f32 0.0, %v1159
  %1161 = vmatmul.bf16.gmra.mxu0 %v448
  %v1162 = vpop.f32.mrf.mxu0
  %v1163 = vadd.f32 0.0, %v1162
  %v1164 = vpop.f32.mrf.mxu0
  %v1165 = vadd.f32 0.0, %v1164
  %1166 = vmatmul.bf16.gmra.mxu0 %v449
  %v1167 = vpop.f32.mrf.mxu0
  %v1168 = vadd.f32 0.0, %v1167
  %v1169 = vpop.f32.mrf.mxu0
  %v1170 = vadd.f32 0.0, %v1169
  %1171 = vmatmul.bf16.gmra.mxu0 %v450
  %v1172 = vpop.f32.mrf.mxu0
  %v1173 = vadd.f32 0.0, %v1172
  %v1174 = vpop.f32.mrf.mxu0
  %v1175 = vadd.f32 0.0, %v1174
  %1176 = vmatmul.bf16.gmra.mxu0 %v451
  %v1177 = vpop.f32.mrf.mxu0
  %v1178 = vadd.f32 0.0, %v1177
  %v1179 = vpop.f32.mrf.mxu0
  %v1180 = vadd.f32 0.0, %v1179
  %1181 = vmatmul.bf16.gmra.mxu0 %v452
  %v1182 = vpop.f32.mrf.mxu0
  %v1183 = vadd.f32 0.0, %v1182
  %v1184 = vpop.f32.mrf.mxu0
  %v1185 = vadd.f32 0.0, %v1184
  %1186 = vmatmul.bf16.gmra.mxu0 %v453
  %v1187 = vpop.f32.mrf.mxu0
  %v1188 = vadd.f32 0.0, %v1187
  %v1189 = vpop.f32.mrf.mxu0
  %v1190 = vadd.f32 0.0, %v1189
  %1191 = vdwg.mxu0
  %1192 = vmatpush.bf16.msra.mxu0 %v1072
  %1193 = vmatpush.bf16.msra.mxu0 %v1064
  %1194 = vmatpush.bf16.msra.mxu0 %v1056
  %1195 = vmatpush.bf16.msra.mxu0 %v1048
  %1196 = vmatpush.bf16.msra.mxu0 %v1040
  %1197 = vmatpush.bf16.msra.mxu0 %v1032
  %1198 = vmatpush.bf16.msra.mxu0 %v1024
  %1199 = vmatpush.bf16.msra.mxu0 %v1016
  %1200 = vmatmul.bf16.gmra.mxu0 %v446
  %v1201 = vpop.f32.mrf.mxu0
  %v1202 = vadd.f32 0.0, %v1201
  %v1203 = vpop.f32.mrf.mxu0
  %v1204 = vadd.f32 0.0, %v1203
  %1205 = vmatmul.bf16.gmra.mxu0 %v447
  %v1206 = vpop.f32.mrf.mxu0
  %v1207 = vadd.f32 0.0, %v1206
  %v1208 = vpop.f32.mrf.mxu0
  %v1209 = vadd.f32 0.0, %v1208
  %1210 = vmatmul.bf16.gmra.mxu0 %v448
  %v1211 = vpop.f32.mrf.mxu0
  %v1212 = vadd.f32 0.0, %v1211
  %v1213 = vpop.f32.mrf.mxu0
  %v1214 = vadd.f32 0.0, %v1213
  %1215 = vmatmul.bf16.gmra.mxu0 %v449
  %v1216 = vpop.f32.mrf.mxu0
  %v1217 = vadd.f32 0.0, %v1216
  %v1218 = vpop.f32.mrf.mxu0
  %v1219 = vadd.f32 0.0, %v1218
  %1220 = vmatmul.bf16.gmra.mxu0 %v450
  %v1221 = vpop.f32.mrf.mxu0
  %v1222 = vadd.f32 0.0, %v1221
  %v1223 = vpop.f32.mrf.mxu0
  %v1224 = vadd.f32 0.0, %v1223
  %1225 = vmatmul.bf16.gmra.mxu0 %v451
  %v1226 = vpop.f32.mrf.mxu0
  %v1227 = vadd.f32 0.0, %v1226
  %v1228 = vpop.f32.mrf.mxu0
  %v1229 = vadd.f32 0.0, %v1228
  %1230 = vmatmul.bf16.gmra.mxu0 %v452
  %v1231 = vpop.f32.mrf.mxu0
  %v1232 = vadd.f32 0.0, %v1231
  %v1233 = vpop.f32.mrf.mxu0
  %v1234 = vadd.f32 0.0, %v1233
  %1235 = vmatmul.bf16.gmra.mxu0 %v453
  %v1236 = vpop.f32.mrf.mxu0
  %v1237 = vadd.f32 0.0, %v1236
  %v1238 = vpop.f32.mrf.mxu0
  %v1239 = vadd.f32 0.0, %v1238
  %1240 = vdwg.mxu0
  %1241 = vmatpush.bf16.msra.mxu0 %v1073
  %1242 = vmatpush.bf16.msra.mxu0 %v1065
  %1243 = vmatpush.bf16.msra.mxu0 %v1057
  %1244 = vmatpush.bf16.msra.mxu0 %v1049
  %1245 = vmatpush.bf16.msra.mxu0 %v1041
  %1246 = vmatpush.bf16.msra.mxu0 %v1033
  %1247 = vmatpush.bf16.msra.mxu0 %v1025
  %1248 = vmatpush.bf16.msra.mxu0 %v1017
  %1249 = vmatmul.bf16.gmra.mxu0 %v446
  %v1250 = vpop.f32.mrf.mxu0
  %v1251 = vadd.f32 0.0, %v1250
  %v1252 = vpop.f32.mrf.mxu0
  %v1253 = vadd.f32 0.0, %v1252
  %1254 = vmatmul.bf16.gmra.mxu0 %v447
  %v1255 = vpop.f32.mrf.mxu0
  %v1256 = vadd.f32 0.0, %v1255
  %v1257 = vpop.f32.mrf.mxu0
  %v1258 = vadd.f32 0.0, %v1257
  %1259 = vmatmul.bf16.gmra.mxu0 %v448
  %v1260 = vpop.f32.mrf.mxu0
  %v1261 = vadd.f32 0.0, %v1260
  %v1262 = vpop.f32.mrf.mxu0
  %v1263 = vadd.f32 0.0, %v1262
  %1264 = vmatmul.bf16.gmra.mxu0 %v449
  %v1265 = vpop.f32.mrf.mxu0
  %v1266 = vadd.f32 0.0, %v1265
  %v1267 = vpop.f32.mrf.mxu0
  %v1268 = vadd.f32 0.0, %v1267
  %1269 = vmatmul.bf16.gmra.mxu0 %v450
  %v1270 = vpop.f32.mrf.mxu0
  %v1271 = vadd.f32 0.0, %v1270
  %v1272 = vpop.f32.mrf.mxu0
  %v1273 = vadd.f32 0.0, %v1272
  %1274 = vmatmul.bf16.gmra.mxu0 %v451
  %v1275 = vpop.f32.mrf.mxu0
  %v1276 = vadd.f32 0.0, %v1275
  %v1277 = vpop.f32.mrf.mxu0
  %v1278 = vadd.f32 0.0, %v1277
  %1279 = vmatmul.bf16.gmra.mxu0 %v452
  %v1280 = vpop.f32.mrf.mxu0
  %v1281 = vadd.f32 0.0, %v1280
  %v1282 = vpop.f32.mrf.mxu0
  %v1283 = vadd.f32 0.0, %v1282
  %1284 = vmatmul.bf16.gmra.mxu0 %v453
  %v1285 = vpop.f32.mrf.mxu0
  %v1286 = vadd.f32 0.0, %v1285
  %v1287 = vpop.f32.mrf.mxu0
  %v1288 = vadd.f32 0.0, %v1287
  %1289 = vdwg.mxu0
  %1290 = vmatpush.bf16.msra.mxu0 %v1074
  %1291 = vmatpush.bf16.msra.mxu0 %v1066
  %1292 = vmatpush.bf16.msra.mxu0 %v1058
  %1293 = vmatpush.bf16.msra.mxu0 %v1050
  %1294 = vmatpush.bf16.msra.mxu0 %v1042
  %1295 = vmatpush.bf16.msra.mxu0 %v1034
  %1296 = vmatpush.bf16.msra.mxu0 %v1026
  %1297 = vmatpush.bf16.msra.mxu0 %v1018
  %1298 = vmatmul.bf16.gmra.mxu0 %v446
  %v1299 = vpop.f32.mrf.mxu0
  %v1300 = vadd.f32 0.0, %v1299
  %v1301 = vpop.f32.mrf.mxu0
  %v1302 = vadd.f32 0.0, %v1301
  %1303 = vmatmul.bf16.gmra.mxu0 %v447
  %v1304 = vpop.f32.mrf.mxu0
  %v1305 = vadd.f32 0.0, %v1304
  %v1306 = vpop.f32.mrf.mxu0
  %v1307 = vadd.f32 0.0, %v1306
  %1308 = vmatmul.bf16.gmra.mxu0 %v448
  %v1309 = vpop.f32.mrf.mxu0
  %v1310 = vadd.f32 0.0, %v1309
  %v1311 = vpop.f32.mrf.mxu0
  %v1312 = vadd.f32 0.0, %v1311
  %1313 = vmatmul.bf16.gmra.mxu0 %v449
  %v1314 = vpop.f32.mrf.mxu0
  %v1315 = vadd.f32 0.0, %v1314
  %v1316 = vpop.f32.mrf.mxu0
  %v1317 = vadd.f32 0.0, %v1316
  %1318 = vmatmul.bf16.gmra.mxu0 %v450
  %v1319 = vpop.f32.mrf.mxu0
  %v1320 = vadd.f32 0.0, %v1319
  %v1321 = vpop.f32.mrf.mxu0
  %v1322 = vadd.f32 0.0, %v1321
  %1323 = vmatmul.bf16.gmra.mxu0 %v451
  %v1324 = vpop.f32.mrf.mxu0
  %v1325 = vadd.f32 0.0, %v1324
  %v1326 = vpop.f32.mrf.mxu0
  %v1327 = vadd.f32 0.0, %v1326
  %1328 = vmatmul.bf16.gmra.mxu0 %v452
  %v1329 = vpop.f32.mrf.mxu0
  %v1330 = vadd.f32 0.0, %v1329
  %v1331 = vpop.f32.mrf.mxu0
  %v1332 = vadd.f32 0.0, %v1331
  %1333 = vmatmul.bf16.gmra.mxu0 %v453
  %v1334 = vpop.f32.mrf.mxu0
  %v1335 = vadd.f32 0.0, %v1334
  %v1336 = vpop.f32.mrf.mxu0
  %v1337 = vadd.f32 0.0, %v1336
  %1338 = vdwg.mxu0
  %1339 = vmatpush.bf16.msra.mxu0 %v1075
  %1340 = vmatpush.bf16.msra.mxu0 %v1067
  %1341 = vmatpush.bf16.msra.mxu0 %v1059
  %1342 = vmatpush.bf16.msra.mxu0 %v1051
  %1343 = vmatpush.bf16.msra.mxu0 %v1043
  %1344 = vmatpush.bf16.msra.mxu0 %v1035
  %1345 = vmatpush.bf16.msra.mxu0 %v1027
  %1346 = vmatpush.bf16.msra.mxu0 %v1019
  %1347 = vmatmul.bf16.gmra.mxu0 %v446
  %v1348 = vpop.f32.mrf.mxu0
  %v1349 = vadd.f32 0.0, %v1348
  %v1350 = vpop.f32.mrf.mxu0
  %v1351 = vadd.f32 0.0, %v1350
  %1352 = vmatmul.bf16.gmra.mxu0 %v447
  %v1353 = vpop.f32.mrf.mxu0
  %v1354 = vadd.f32 0.0, %v1353
  %v1355 = vpop.f32.mrf.mxu0
  %v1356 = vadd.f32 0.0, %v1355
  %1357 = vmatmul.bf16.gmra.mxu0 %v448
  %v1358 = vpop.f32.mrf.mxu0
  %v1359 = vadd.f32 0.0, %v1358
  %v1360 = vpop.f32.mrf.mxu0
  %v1361 = vadd.f32 0.0, %v1360
  %1362 = vmatmul.bf16.gmra.mxu0 %v449
  %v1363 = vpop.f32.mrf.mxu0
  %v1364 = vadd.f32 0.0, %v1363
  %v1365 = vpop.f32.mrf.mxu0
  %v1366 = vadd.f32 0.0, %v1365
  %1367 = vmatmul.bf16.gmra.mxu0 %v450
  %v1368 = vpop.f32.mrf.mxu0
  %v1369 = vadd.f32 0.0, %v1368
  %v1370 = vpop.f32.mrf.mxu0
  %v1371 = vadd.f32 0.0, %v1370
  %1372 = vmatmul.bf16.gmra.mxu0 %v451
  %v1373 = vpop.f32.mrf.mxu0
  %v1374 = vadd.f32 0.0, %v1373
  %v1375 = vpop.f32.mrf.mxu0
  %v1376 = vadd.f32 0.0, %v1375
  %1377 = vmatmul.bf16.gmra.mxu0 %v452
  %v1378 = vpop.f32.mrf.mxu0
  %v1379 = vadd.f32 0.0, %v1378
  %v1380 = vpop.f32.mrf.mxu0
  %v1381 = vadd.f32 0.0, %v1380
  %1382 = vmatmul.bf16.gmra.mxu0 %v453
  %v1383 = vpop.f32.mrf.mxu0
  %v1384 = vadd.f32 0.0, %v1383
  %v1385 = vpop.f32.mrf.mxu0
  %v1386 = vadd.f32 0.0, %v1385
  %1387 = vdwg.mxu0
  %1388 = vmatpush.bf16.msra.mxu0 %v1076
  %1389 = vmatpush.bf16.msra.mxu0 %v1068
  %1390 = vmatpush.bf16.msra.mxu0 %v1060
  %1391 = vmatpush.bf16.msra.mxu0 %v1052
  %1392 = vmatpush.bf16.msra.mxu0 %v1044
  %1393 = vmatpush.bf16.msra.mxu0 %v1036
  %1394 = vmatpush.bf16.msra.mxu0 %v1028
  %1395 = vmatpush.bf16.msra.mxu0 %v1020
  %1396 = vmatmul.bf16.gmra.mxu0 %v446
  %v1397 = vpop.f32.mrf.mxu0
  %v1398 = vadd.f32 0.0, %v1397
  %v1399 = vpop.f32.mrf.mxu0
  %v1400 = vadd.f32 0.0, %v1399
  %1401 = vmatmul.bf16.gmra.mxu0 %v447
  %v1402 = vpop.f32.mrf.mxu0
  %v1403 = vadd.f32 0.0, %v1402
  %v1404 = vpop.f32.mrf.mxu0
  %v1405 = vadd.f32 0.0, %v1404
  %1406 = vmatmul.bf16.gmra.mxu0 %v448
  %v1407 = vpop.f32.mrf.mxu0
  %v1408 = vadd.f32 0.0, %v1407
  %v1409 = vpop.f32.mrf.mxu0
  %v1410 = vadd.f32 0.0, %v1409
  %1411 = vmatmul.bf16.gmra.mxu0 %v449
  %v1412 = vpop.f32.mrf.mxu0
  %v1413 = vadd.f32 0.0, %v1412
  %v1414 = vpop.f32.mrf.mxu0
  %v1415 = vadd.f32 0.0, %v1414
  %1416 = vmatmul.bf16.gmra.mxu0 %v450
  %v1417 = vpop.f32.mrf.mxu0
  %v1418 = vadd.f32 0.0, %v1417
  %v1419 = vpop.f32.mrf.mxu0
  %v1420 = vadd.f32 0.0, %v1419
  %1421 = vmatmul.bf16.gmra.mxu0 %v451
  %v1422 = vpop.f32.mrf.mxu0
  %v1423 = vadd.f32 0.0, %v1422
  %v1424 = vpop.f32.mrf.mxu0
  %v1425 = vadd.f32 0.0, %v1424
  %1426 = vmatmul.bf16.gmra.mxu0 %v452
  %v1427 = vpop.f32.mrf.mxu0
  %v1428 = vadd.f32 0.0, %v1427
  %v1429 = vpop.f32.mrf.mxu0
  %v1430 = vadd.f32 0.0, %v1429
  %1431 = vmatmul.bf16.gmra.mxu0 %v453
  %v1432 = vpop.f32.mrf.mxu0
  %v1433 = vadd.f32 0.0, %v1432
  %v1434 = vpop.f32.mrf.mxu0
  %v1435 = vadd.f32 0.0, %v1434
  %1436 = vdwg.mxu0
  %1437 = vmatpush.bf16.msra.mxu0 %v1077
  %1438 = vmatpush.bf16.msra.mxu0 %v1069
  %1439 = vmatpush.bf16.msra.mxu0 %v1061
  %1440 = vmatpush.bf16.msra.mxu0 %v1053
  %1441 = vmatpush.bf16.msra.mxu0 %v1045
  %1442 = vmatpush.bf16.msra.mxu0 %v1037
  %1443 = vmatpush.bf16.msra.mxu0 %v1029
  %1444 = vmatpush.bf16.msra.mxu0 %v1021
  %1445 = vmatmul.bf16.gmra.mxu0 %v446
  %v1446 = vpop.f32.mrf.mxu0
  %v1447 = vadd.f32 0.0, %v1446
  %v1448 = vpop.f32.mrf.mxu0
  %v1449 = vadd.f32 0.0, %v1448
  %1450 = vmatmul.bf16.gmra.mxu0 %v447
  %v1451 = vpop.f32.mrf.mxu0
  %v1452 = vadd.f32 0.0, %v1451
  %v1453 = vpop.f32.mrf.mxu0
  %v1454 = vadd.f32 0.0, %v1453
  %1455 = vmatmul.bf16.gmra.mxu0 %v448
  %v1456 = vpop.f32.mrf.mxu0
  %v1457 = vadd.f32 0.0, %v1456
  %v1458 = vpop.f32.mrf.mxu0
  %v1459 = vadd.f32 0.0, %v1458
  %1460 = vmatmul.bf16.gmra.mxu0 %v449
  %v1461 = vpop.f32.mrf.mxu0
  %v1462 = vadd.f32 0.0, %v1461
  %v1463 = vpop.f32.mrf.mxu0
  %v1464 = vadd.f32 0.0, %v1463
  %1465 = vmatmul.bf16.gmra.mxu0 %v450
  %v1466 = vpop.f32.mrf.mxu0
  %v1467 = vadd.f32 0.0, %v1466
  %v1468 = vpop.f32.mrf.mxu0
  %v1469 = vadd.f32 0.0, %v1468
  %1470 = vmatmul.bf16.gmra.mxu0 %v451
  %v1471 = vpop.f32.mrf.mxu0
  %v1472 = vadd.f32 0.0, %v1471
  %v1473 = vpop.f32.mrf.mxu0
  %v1474 = vadd.f32 0.0, %v1473
  %1475 = vmatmul.bf16.gmra.mxu0 %v452
  %v1476 = vpop.f32.mrf.mxu0
  %v1477 = vadd.f32 0.0, %v1476
  %v1478 = vpop.f32.mrf.mxu0
  %v1479 = vadd.f32 0.0, %v1478
  %1480 = vmatmul.bf16.gmra.mxu0 %v453
  %v1481 = vpop.f32.mrf.mxu0
  %v1482 = vadd.f32 0.0, %v1481
  %v1483 = vpop.f32.mrf.mxu0
  %v1484 = vadd.f32 0.0, %v1483
  %1485 = vdwg.mxu0
  %1486 = vmatpush.bf16.msra.mxu0 %v1078
  %1487 = vmatpush.bf16.msra.mxu0 %v1070
  %1488 = vmatpush.bf16.msra.mxu0 %v1062
  %1489 = vmatpush.bf16.msra.mxu0 %v1054
  %1490 = vmatpush.bf16.msra.mxu0 %v1046
  %1491 = vmatpush.bf16.msra.mxu0 %v1038
  %1492 = vmatpush.bf16.msra.mxu0 %v1030
  %1493 = vmatpush.bf16.msra.mxu0 %v1022
  %1494 = vmatmul.bf16.gmra.mxu0 %v446
  %v1495 = vpop.f32.mrf.mxu0
  %v1496 = vadd.f32 0.0, %v1495
  %v1497 = vpop.f32.mrf.mxu0
  %v1498 = vadd.f32 0.0, %v1497
  %1499 = vmatmul.bf16.gmra.mxu0 %v447
  %v1500 = vpop.f32.mrf.mxu0
  %v1501 = vadd.f32 0.0, %v1500
  %v1502 = vpop.f32.mrf.mxu0
  %v1503 = vadd.f32 0.0, %v1502
  %1504 = vmatmul.bf16.gmra.mxu0 %v448
  %v1505 = vpop.f32.mrf.mxu0
  %v1506 = vadd.f32 0.0, %v1505
  %v1507 = vpop.f32.mrf.mxu0
  %v1508 = vadd.f32 0.0, %v1507
  %1509 = vmatmul.bf16.gmra.mxu0 %v449
  %v1510 = vpop.f32.mrf.mxu0
  %v1511 = vadd.f32 0.0, %v1510
  %v1512 = vpop.f32.mrf.mxu0
  %v1513 = vadd.f32 0.0, %v1512
  %1514 = vmatmul.bf16.gmra.mxu0 %v450
  %v1515 = vpop.f32.mrf.mxu0
  %v1516 = vadd.f32 0.0, %v1515
  %v1517 = vpop.f32.mrf.mxu0
  %v1518 = vadd.f32 0.0, %v1517
  %1519 = vmatmul.bf16.gmra.mxu0 %v451
  %v1520 = vpop.f32.mrf.mxu0
  %v1521 = vadd.f32 0.0, %v1520
  %v1522 = vpop.f32.mrf.mxu0
  %v1523 = vadd.f32 0.0, %v1522
  %1524 = vmatmul.bf16.gmra.mxu0 %v452
  %v1525 = vpop.f32.mrf.mxu0
  %v1526 = vadd.f32 0.0, %v1525
  %v1527 = vpop.f32.mrf.mxu0
  %v1528 = vadd.f32 0.0, %v1527
  %1529 = vmatmul.bf16.gmra.mxu0 %v453
  %v1530 = vpop.f32.mrf.mxu0
  %v1531 = vadd.f32 0.0, %v1530
  %v1532 = vpop.f32.mrf.mxu0
  %v1533 = vadd.f32 0.0, %v1532
  %1534 = vdwg.mxu0
  %v1599 = vunpack.c.l.b16 %v695
  %v1600 = vunpack.c.h.b16 %v695
  %v1601 = vunpack.c.l.b16 %v696
  %v1602 = vunpack.c.h.b16 %v696
  %v1603 = vunpack.c.l.b16 %v697
  %v1604 = vunpack.c.h.b16 %v697
  %v1605 = vunpack.c.l.b16 %v698
  %v1606 = vunpack.c.h.b16 %v698
  %v1607 = vunpack.c.l.b16 %v699
  %v1608 = vunpack.c.h.b16 %v699
  %v1609 = vunpack.c.l.b16 %v700
  %v1610 = vunpack.c.h.b16 %v700
  %v1611 = vunpack.c.l.b16 %v701
  %v1612 = vunpack.c.h.b16 %v701
  %v1613 = vunpack.c.l.b16 %v702
  %v1614 = vunpack.c.h.b16 %v702
  %v1615 = vunpack.c.l.b16 %v703
  %v1616 = vunpack.c.h.b16 %v703
  %v1617 = vunpack.c.l.b16 %v704
  %v1618 = vunpack.c.h.b16 %v704
  %v1619 = vunpack.c.l.b16 %v705
  %v1620 = vunpack.c.h.b16 %v705
  %v1621 = vunpack.c.l.b16 %v706
  %v1622 = vunpack.c.h.b16 %v706
  %v1623 = vunpack.c.l.b16 %v707
  %v1624 = vunpack.c.h.b16 %v707
  %v1625 = vunpack.c.l.b16 %v708
  %v1626 = vunpack.c.h.b16 %v708
  %v1627 = vunpack.c.l.b16 %v709
  %v1628 = vunpack.c.h.b16 %v709
  %v1629 = vunpack.c.l.b16 %v710
  %v1630 = vunpack.c.h.b16 %v710
  %v1631 = vunpack.c.l.b16 %v711
  %v1632 = vunpack.c.h.b16 %v711
  %v1633 = vunpack.c.l.b16 %v712
  %v1634 = vunpack.c.h.b16 %v712
  %v1635 = vunpack.c.l.b16 %v713
  %v1636 = vunpack.c.h.b16 %v713
  %v1637 = vunpack.c.l.b16 %v714
  %v1638 = vunpack.c.h.b16 %v714
  %v1639 = vunpack.c.l.b16 %v715
  %v1640 = vunpack.c.h.b16 %v715
  %v1641 = vunpack.c.l.b16 %v716
  %v1642 = vunpack.c.h.b16 %v716
  %v1643 = vunpack.c.l.b16 %v717
  %v1644 = vunpack.c.h.b16 %v717
  %v1645 = vunpack.c.l.b16 %v718
  %v1646 = vunpack.c.h.b16 %v718
  %v1647 = vunpack.c.l.b16 %v719
  %v1648 = vunpack.c.h.b16 %v719
  %v1649 = vunpack.c.l.b16 %v720
  %v1650 = vunpack.c.h.b16 %v720
  %v1651 = vunpack.c.l.b16 %v721
  %v1652 = vunpack.c.h.b16 %v721
  %v1653 = vunpack.c.l.b16 %v722
  %v1654 = vunpack.c.h.b16 %v722
  %v1655 = vunpack.c.l.b16 %v723
  %v1656 = vunpack.c.h.b16 %v723
  %v1657 = vunpack.c.l.b16 %v724
  %v1658 = vunpack.c.h.b16 %v724
  %v1659 = vunpack.c.l.b16 %v725
  %v1660 = vunpack.c.h.b16 %v725
  %v1661 = vunpack.c.l.b16 %v726
  %v1662 = vunpack.c.h.b16 %v726
  %v1663 = vunpack.c.l.b16 %v727
  %v1664 = vunpack.c.h.b16 %v727
  %v1665 = vunpack.c.l.b16 %v728
  %v1666 = vunpack.c.h.b16 %v728
  %v1667 = vunpack.c.l.b16 %v729
  %v1668 = vunpack.c.h.b16 %v729
  %v1669 = vunpack.c.l.b16 %v730
  %v1670 = vunpack.c.h.b16 %v730
  %v1671 = vunpack.c.l.b16 %v731
  %v1672 = vunpack.c.h.b16 %v731
  %v1673 = vunpack.c.l.b16 %v732
  %v1674 = vunpack.c.h.b16 %v732
  %v1675 = vunpack.c.l.b16 %v733
  %v1676 = vunpack.c.h.b16 %v733
  %v1677 = vunpack.c.l.b16 %v734
  %v1678 = vunpack.c.h.b16 %v734
  %v1679 = vunpack.c.l.b16 %v735
  %v1680 = vunpack.c.h.b16 %v735
  %v1681 = vunpack.c.l.b16 %v736
  %v1682 = vunpack.c.h.b16 %v736
  %v1683 = vunpack.c.l.b16 %v737
  %v1684 = vunpack.c.h.b16 %v737
  %v1685 = vunpack.c.l.b16 %v738
  %v1686 = vunpack.c.h.b16 %v738
  %v1687 = vunpack.c.l.b16 %v739
  %v1688 = vunpack.c.h.b16 %v739
  %v1689 = vunpack.c.l.b16 %v740
  %v1690 = vunpack.c.h.b16 %v740
  %v1691 = vunpack.c.l.b16 %v741
  %v1692 = vunpack.c.h.b16 %v741
  %v1693 = vunpack.c.l.b16 %v742
  %v1694 = vunpack.c.h.b16 %v742
  %v1695 = vunpack.c.l.b16 %v743
  %v1696 = vunpack.c.h.b16 %v743
  %v1697 = vunpack.c.l.b16 %v744
  %v1698 = vunpack.c.h.b16 %v744
  %v1699 = vunpack.c.l.b16 %v745
  %v1700 = vunpack.c.h.b16 %v745
  %v1701 = vunpack.c.l.b16 %v746
  %v1702 = vunpack.c.h.b16 %v746
  %v1703 = vunpack.c.l.b16 %v747
  %v1704 = vunpack.c.h.b16 %v747
  %v1705 = vunpack.c.l.b16 %v748
  %v1706 = vunpack.c.h.b16 %v748
  %v1707 = vunpack.c.l.b16 %v749
  %v1708 = vunpack.c.h.b16 %v749
  %v1709 = vunpack.c.l.b16 %v750
  %v1710 = vunpack.c.h.b16 %v750
  %v1711 = vunpack.c.l.b16 %v751
  %v1712 = vunpack.c.h.b16 %v751
  %v1713 = vunpack.c.l.b16 %v752
  %v1714 = vunpack.c.h.b16 %v752
  %v1715 = vunpack.c.l.b16 %v753
  %v1716 = vunpack.c.h.b16 %v753
  %v1717 = vunpack.c.l.b16 %v754
  %v1718 = vunpack.c.h.b16 %v754
  %v1719 = vunpack.c.l.b16 %v755
  %v1720 = vunpack.c.h.b16 %v755
  %v1721 = vunpack.c.l.b16 %v756
  %v1722 = vunpack.c.h.b16 %v756
  %v1723 = vunpack.c.l.b16 %v757
  %v1724 = vunpack.c.h.b16 %v757
  %v1725 = vunpack.c.l.b16 %v758
  %v1726 = vunpack.c.h.b16 %v758
  %v1727 = vpack.c.b16 %v1607, %v1599
  %v1728 = vpack.c.b16 %v1608, %v1600
  %v1729 = vpack.c.b16 %v1609, %v1601
  %v1730 = vpack.c.b16 %v1610, %v1602
  %v1731 = vpack.c.b16 %v1611, %v1603
  %v1732 = vpack.c.b16 %v1612, %v1604
  %v1733 = vpack.c.b16 %v1613, %v1605
  %v1734 = vpack.c.b16 %v1614, %v1606
  %v1735 = vpack.c.b16 %v1623, %v1615
  %v1736 = vpack.c.b16 %v1624, %v1616
  %v1737 = vpack.c.b16 %v1625, %v1617
  %v1738 = vpack.c.b16 %v1626, %v1618
  %v1739 = vpack.c.b16 %v1627, %v1619
  %v1740 = vpack.c.b16 %v1628, %v1620
  %v1741 = vpack.c.b16 %v1629, %v1621
  %v1742 = vpack.c.b16 %v1630, %v1622
  %v1743 = vpack.c.b16 %v1639, %v1631
  %v1744 = vpack.c.b16 %v1640, %v1632
  %v1745 = vpack.c.b16 %v1641, %v1633
  %v1746 = vpack.c.b16 %v1642, %v1634
  %v1747 = vpack.c.b16 %v1643, %v1635
  %v1748 = vpack.c.b16 %v1644, %v1636
  %v1749 = vpack.c.b16 %v1645, %v1637
  %v1750 = vpack.c.b16 %v1646, %v1638
  %v1751 = vpack.c.b16 %v1655, %v1647
  %v1752 = vpack.c.b16 %v1656, %v1648
  %v1753 = vpack.c.b16 %v1657, %v1649
  %v1754 = vpack.c.b16 %v1658, %v1650
  %v1755 = vpack.c.b16 %v1659, %v1651
  %v1756 = vpack.c.b16 %v1660, %v1652
  %v1757 = vpack.c.b16 %v1661, %v1653
  %v1758 = vpack.c.b16 %v1662, %v1654
  %v1759 = vpack.c.b16 %v1671, %v1663
  %v1760 = vpack.c.b16 %v1672, %v1664
  %v1761 = vpack.c.b16 %v1673, %v1665
  %v1762 = vpack.c.b16 %v1674, %v1666
  %v1763 = vpack.c.b16 %v1675, %v1667
  %v1764 = vpack.c.b16 %v1676, %v1668
  %v1765 = vpack.c.b16 %v1677, %v1669
  %v1766 = vpack.c.b16 %v1678, %v1670
  %v1767 = vpack.c.b16 %v1687, %v1679
  %v1768 = vpack.c.b16 %v1688, %v1680
  %v1769 = vpack.c.b16 %v1689, %v1681
  %v1770 = vpack.c.b16 %v1690, %v1682
  %v1771 = vpack.c.b16 %v1691, %v1683
  %v1772 = vpack.c.b16 %v1692, %v1684
  %v1773 = vpack.c.b16 %v1693, %v1685
  %v1774 = vpack.c.b16 %v1694, %v1686
  %v1775 = vpack.c.b16 %v1703, %v1695
  %v1776 = vpack.c.b16 %v1704, %v1696
  %v1777 = vpack.c.b16 %v1705, %v1697
  %v1778 = vpack.c.b16 %v1706, %v1698
  %v1779 = vpack.c.b16 %v1707, %v1699
  %v1780 = vpack.c.b16 %v1708, %v1700
  %v1781 = vpack.c.b16 %v1709, %v1701
  %v1782 = vpack.c.b16 %v1710, %v1702
  %v1783 = vpack.c.b16 %v1719, %v1711
  %v1784 = vpack.c.b16 %v1720, %v1712
  %v1785 = vpack.c.b16 %v1721, %v1713
  %v1786 = vpack.c.b16 %v1722, %v1714
  %v1787 = vpack.c.b16 %v1723, %v1715
  %v1788 = vpack.c.b16 %v1724, %v1716
  %v1789 = vpack.c.b16 %v1725, %v1717
  %v1790 = vpack.c.b16 %v1726, %v1718
  %1855 = vmatpush.bf16.msra.mxu0 %v1783
  %1856 = vmatpush.bf16.msra.mxu0 %v1775
  %1857 = vmatpush.bf16.msra.mxu0 %v1767
  %1858 = vmatpush.bf16.msra.mxu0 %v1759
  %1859 = vmatpush.bf16.msra.mxu0 %v1751
  %1860 = vmatpush.bf16.msra.mxu0 %v1743
  %1861 = vmatpush.bf16.msra.mxu0 %v1735
  %1862 = vmatpush.bf16.msra.mxu0 %v1727
  %1863 = vmatmul.bf16.gmra.mxu0 %v269
  %v1864 = vpop.f32.mrf.mxu0
  %v1865 = vadd.f32 %v1153, %v1864
  %v1866 = vpop.f32.mrf.mxu0
  %v1867 = vadd.f32 %v1155, %v1866
  %1868 = vmatmul.bf16.gmra.mxu0 %v270
  %v1869 = vpop.f32.mrf.mxu0
  %v1870 = vadd.f32 %v1158, %v1869
  %v1871 = vpop.f32.mrf.mxu0
  %v1872 = vadd.f32 %v1160, %v1871
  %1873 = vmatmul.bf16.gmra.mxu0 %v271
  %v1874 = vpop.f32.mrf.mxu0
  %v1875 = vadd.f32 %v1163, %v1874
  %v1876 = vpop.f32.mrf.mxu0
  %v1877 = vadd.f32 %v1165, %v1876
  %1878 = vmatmul.bf16.gmra.mxu0 %v272
  %v1879 = vpop.f32.mrf.mxu0
  %v1880 = vadd.f32 %v1168, %v1879
  %v1881 = vpop.f32.mrf.mxu0
  %v1882 = vadd.f32 %v1170, %v1881
  %1883 = vmatmul.bf16.gmra.mxu0 %v273
  %v1884 = vpop.f32.mrf.mxu0
  %v1885 = vadd.f32 %v1173, %v1884
  %v1886 = vpop.f32.mrf.mxu0
  %v1887 = vadd.f32 %v1175, %v1886
  %1888 = vmatmul.bf16.gmra.mxu0 %v274
  %v1889 = vpop.f32.mrf.mxu0
  %v1890 = vadd.f32 %v1178, %v1889
  %v1891 = vpop.f32.mrf.mxu0
  %v1892 = vadd.f32 %v1180, %v1891
  %1893 = vmatmul.bf16.gmra.mxu0 %v275
  %v1894 = vpop.f32.mrf.mxu0
  %v1895 = vadd.f32 %v1183, %v1894
  %v1896 = vpop.f32.mrf.mxu0
  %v1897 = vadd.f32 %v1185, %v1896
  %1898 = vmatmul.bf16.gmra.mxu0 %v276
  %v1899 = vpop.f32.mrf.mxu0
  %v1900 = vadd.f32 %v1188, %v1899
  %v1901 = vpop.f32.mrf.mxu0
  %v1902 = vadd.f32 %v1190, %v1901
  %1903 = vdwg.mxu0
  %1904 = vmatpush.bf16.msra.mxu0 %v1784
  %1905 = vmatpush.bf16.msra.mxu0 %v1776
  %1906 = vmatpush.bf16.msra.mxu0 %v1768
  %1907 = vmatpush.bf16.msra.mxu0 %v1760
  %1908 = vmatpush.bf16.msra.mxu0 %v1752
  %1909 = vmatpush.bf16.msra.mxu0 %v1744
  %1910 = vmatpush.bf16.msra.mxu0 %v1736
  %1911 = vmatpush.bf16.msra.mxu0 %v1728
  %1912 = vmatmul.bf16.gmra.mxu0 %v269
  %v1913 = vpop.f32.mrf.mxu0
  %v1914 = vadd.f32 %v1202, %v1913
  %v1915 = vpop.f32.mrf.mxu0
  %v1916 = vadd.f32 %v1204, %v1915
  %1917 = vmatmul.bf16.gmra.mxu0 %v270
  %v1918 = vpop.f32.mrf.mxu0
  %v1919 = vadd.f32 %v1207, %v1918
  %v1920 = vpop.f32.mrf.mxu0
  %v1921 = vadd.f32 %v1209, %v1920
  %1922 = vmatmul.bf16.gmra.mxu0 %v271
  %v1923 = vpop.f32.mrf.mxu0
  %v1924 = vadd.f32 %v1212, %v1923
  %v1925 = vpop.f32.mrf.mxu0
  %v1926 = vadd.f32 %v1214, %v1925
  %1927 = vmatmul.bf16.gmra.mxu0 %v272
  %v1928 = vpop.f32.mrf.mxu0
  %v1929 = vadd.f32 %v1217, %v1928
  %v1930 = vpop.f32.mrf.mxu0
  %v1931 = vadd.f32 %v1219, %v1930
  %1932 = vmatmul.bf16.gmra.mxu0 %v273
  %v1933 = vpop.f32.mrf.mxu0
  %v1934 = vadd.f32 %v1222, %v1933
  %v1935 = vpop.f32.mrf.mxu0
  %v1936 = vadd.f32 %v1224, %v1935
  %1937 = vmatmul.bf16.gmra.mxu0 %v274
  %v1938 = vpop.f32.mrf.mxu0
  %v1939 = vadd.f32 %v1227, %v1938
  %v1940 = vpop.f32.mrf.mxu0
  %v1941 = vadd.f32 %v1229, %v1940
  %1942 = vmatmul.bf16.gmra.mxu0 %v275
  %v1943 = vpop.f32.mrf.mxu0
  %v1944 = vadd.f32 %v1232, %v1943
  %v1945 = vpop.f32.mrf.mxu0
  %v1946 = vadd.f32 %v1234, %v1945
  %1947 = vmatmul.bf16.gmra.mxu0 %v276
  %v1948 = vpop.f32.mrf.mxu0
  %v1949 = vadd.f32 %v1237, %v1948
  %v1950 = vpop.f32.mrf.mxu0
  %v1951 = vadd.f32 %v1239, %v1950
  %1952 = vdwg.mxu0
  %1953 = vmatpush.bf16.msra.mxu0 %v1785
  %1954 = vmatpush.bf16.msra.mxu0 %v1777
  %1955 = vmatpush.bf16.msra.mxu0 %v1769
  %1956 = vmatpush.bf16.msra.mxu0 %v1761
  %1957 = vmatpush.bf16.msra.mxu0 %v1753
  %1958 = vmatpush.bf16.msra.mxu0 %v1745
  %1959 = vmatpush.bf16.msra.mxu0 %v1737
  %1960 = vmatpush.bf16.msra.mxu0 %v1729
  %1961 = vmatmul.bf16.gmra.mxu0 %v269
  %v1962 = vpop.f32.mrf.mxu0
  %v1963 = vadd.f32 %v1251, %v1962
  %v1964 = vpop.f32.mrf.mxu0
  %v1965 = vadd.f32 %v1253, %v1964
  %1966 = vmatmul.bf16.gmra.mxu0 %v270
  %v1967 = vpop.f32.mrf.mxu0
  %v1968 = vadd.f32 %v1256, %v1967
  %v1969 = vpop.f32.mrf.mxu0
  %v1970 = vadd.f32 %v1258, %v1969
  %1971 = vmatmul.bf16.gmra.mxu0 %v271
  %v1972 = vpop.f32.mrf.mxu0
  %v1973 = vadd.f32 %v1261, %v1972
  %v1974 = vpop.f32.mrf.mxu0
  %v1975 = vadd.f32 %v1263, %v1974
  %1976 = vmatmul.bf16.gmra.mxu0 %v272
  %v1977 = vpop.f32.mrf.mxu0
  %v1978 = vadd.f32 %v1266, %v1977
  %v1979 = vpop.f32.mrf.mxu0
  %v1980 = vadd.f32 %v1268, %v1979
  %1981 = vmatmul.bf16.gmra.mxu0 %v273
  %v1982 = vpop.f32.mrf.mxu0
  %v1983 = vadd.f32 %v1271, %v1982
  %v1984 = vpop.f32.mrf.mxu0
  %v1985 = vadd.f32 %v1273, %v1984
  %1986 = vmatmul.bf16.gmra.mxu0 %v274
  %v1987 = vpop.f32.mrf.mxu0
  %v1988 = vadd.f32 %v1276, %v1987
  %v1989 = vpop.f32.mrf.mxu0
  %v1990 = vadd.f32 %v1278, %v1989
  %1991 = vmatmul.bf16.gmra.mxu0 %v275
  %v1992 = vpop.f32.mrf.mxu0
  %v1993 = vadd.f32 %v1281, %v1992
  %v1994 = vpop.f32.mrf.mxu0
  %v1995 = vadd.f32 %v1283, %v1994
  %1996 = vmatmul.bf16.gmra.mxu0 %v276
  %v1997 = vpop.f32.mrf.mxu0
  %v1998 = vadd.f32 %v1286, %v1997
  %v1999 = vpop.f32.mrf.mxu0
  %v2000 = vadd.f32 %v1288, %v1999
  %2001 = vdwg.mxu0
  %2002 = vmatpush.bf16.msra.mxu0 %v1786
  %2003 = vmatpush.bf16.msra.mxu0 %v1778
  %2004 = vmatpush.bf16.msra.mxu0 %v1770
  %2005 = vmatpush.bf16.msra.mxu0 %v1762
  %2006 = vmatpush.bf16.msra.mxu0 %v1754
  %2007 = vmatpush.bf16.msra.mxu0 %v1746
  %2008 = vmatpush.bf16.msra.mxu0 %v1738
  %2009 = vmatpush.bf16.msra.mxu0 %v1730
  %2010 = vmatmul.bf16.gmra.mxu0 %v269
  %v2011 = vpop.f32.mrf.mxu0
  %v2012 = vadd.f32 %v1300, %v2011
  %v2013 = vpop.f32.mrf.mxu0
  %v2014 = vadd.f32 %v1302, %v2013
  %2015 = vmatmul.bf16.gmra.mxu0 %v270
  %v2016 = vpop.f32.mrf.mxu0
  %v2017 = vadd.f32 %v1305, %v2016
  %v2018 = vpop.f32.mrf.mxu0
  %v2019 = vadd.f32 %v1307, %v2018
  %2020 = vmatmul.bf16.gmra.mxu0 %v271
  %v2021 = vpop.f32.mrf.mxu0
  %v2022 = vadd.f32 %v1310, %v2021
  %v2023 = vpop.f32.mrf.mxu0
  %v2024 = vadd.f32 %v1312, %v2023
  %2025 = vmatmul.bf16.gmra.mxu0 %v272
  %v2026 = vpop.f32.mrf.mxu0
  %v2027 = vadd.f32 %v1315, %v2026
  %v2028 = vpop.f32.mrf.mxu0
  %v2029 = vadd.f32 %v1317, %v2028
  %2030 = vmatmul.bf16.gmra.mxu0 %v273
  %v2031 = vpop.f32.mrf.mxu0
  %v2032 = vadd.f32 %v1320, %v2031
  %v2033 = vpop.f32.mrf.mxu0
  %v2034 = vadd.f32 %v1322, %v2033
  %2035 = vmatmul.bf16.gmra.mxu0 %v274
  %v2036 = vpop.f32.mrf.mxu0
  %v2037 = vadd.f32 %v1325, %v2036
  %v2038 = vpop.f32.mrf.mxu0
  %v2039 = vadd.f32 %v1327, %v2038
  %2040 = vmatmul.bf16.gmra.mxu0 %v275
  %v2041 = vpop.f32.mrf.mxu0
  %v2042 = vadd.f32 %v1330, %v2041
  %v2043 = vpop.f32.mrf.mxu0
  %v2044 = vadd.f32 %v1332, %v2043
  %2045 = vmatmul.bf16.gmra.mxu0 %v276
  %v2046 = vpop.f32.mrf.mxu0
  %v2047 = vadd.f32 %v1335, %v2046
  %v2048 = vpop.f32.mrf.mxu0
  %v2049 = vadd.f32 %v1337, %v2048
  %2050 = vdwg.mxu0
  %2051 = vmatpush.bf16.msra.mxu0 %v1787
  %2052 = vmatpush.bf16.msra.mxu0 %v1779
  %2053 = vmatpush.bf16.msra.mxu0 %v1771
  %2054 = vmatpush.bf16.msra.mxu0 %v1763
  %2055 = vmatpush.bf16.msra.mxu0 %v1755
  %2056 = vmatpush.bf16.msra.mxu0 %v1747
  %2057 = vmatpush.bf16.msra.mxu0 %v1739
  %2058 = vmatpush.bf16.msra.mxu0 %v1731
  %2059 = vmatmul.bf16.gmra.mxu0 %v269
  %v2060 = vpop.f32.mrf.mxu0
  %v2061 = vadd.f32 %v1349, %v2060
  %v2062 = vpop.f32.mrf.mxu0
  %v2063 = vadd.f32 %v1351, %v2062
  %2064 = vmatmul.bf16.gmra.mxu0 %v270
  %v2065 = vpop.f32.mrf.mxu0
  %v2066 = vadd.f32 %v1354, %v2065
  %v2067 = vpop.f32.mrf.mxu0
  %v2068 = vadd.f32 %v1356, %v2067
  %2069 = vmatmul.bf16.gmra.mxu0 %v271
  %v2070 = vpop.f32.mrf.mxu0
  %v2071 = vadd.f32 %v1359, %v2070
  %v2072 = vpop.f32.mrf.mxu0
  %v2073 = vadd.f32 %v1361, %v2072
  %2074 = vmatmul.bf16.gmra.mxu0 %v272
  %v2075 = vpop.f32.mrf.mxu0
  %v2076 = vadd.f32 %v1364, %v2075
  %v2077 = vpop.f32.mrf.mxu0
  %v2078 = vadd.f32 %v1366, %v2077
  %2079 = vmatmul.bf16.gmra.mxu0 %v273
  %v2080 = vpop.f32.mrf.mxu0
  %v2081 = vadd.f32 %v1369, %v2080
  %v2082 = vpop.f32.mrf.mxu0
  %v2083 = vadd.f32 %v1371, %v2082
  %2084 = vmatmul.bf16.gmra.mxu0 %v274
  %v2085 = vpop.f32.mrf.mxu0
  %v2086 = vadd.f32 %v1374, %v2085
  %v2087 = vpop.f32.mrf.mxu0
  %v2088 = vadd.f32 %v1376, %v2087
  %2089 = vmatmul.bf16.gmra.mxu0 %v275
  %v2090 = vpop.f32.mrf.mxu0
  %v2091 = vadd.f32 %v1379, %v2090
  %v2092 = vpop.f32.mrf.mxu0
  %v2093 = vadd.f32 %v1381, %v2092
  %2094 = vmatmul.bf16.gmra.mxu0 %v276
  %v2095 = vpop.f32.mrf.mxu0
  %v2096 = vadd.f32 %v1384, %v2095
  %v2097 = vpop.f32.mrf.mxu0
  %v2098 = vadd.f32 %v1386, %v2097
  %2099 = vdwg.mxu0
  %2100 = vmatpush.bf16.msra.mxu0 %v1788
  %2101 = vmatpush.bf16.msra.mxu0 %v1780
  %2102 = vmatpush.bf16.msra.mxu0 %v1772
  %2103 = vmatpush.bf16.msra.mxu0 %v1764
  %2104 = vmatpush.bf16.msra.mxu0 %v1756
  %2105 = vmatpush.bf16.msra.mxu0 %v1748
  %2106 = vmatpush.bf16.msra.mxu0 %v1740
  %2107 = vmatpush.bf16.msra.mxu0 %v1732
  %2108 = vmatmul.bf16.gmra.mxu0 %v269
  %v2109 = vpop.f32.mrf.mxu0
  %v2110 = vadd.f32 %v1398, %v2109
  %v2111 = vpop.f32.mrf.mxu0
  %v2112 = vadd.f32 %v1400, %v2111
  %2113 = vmatmul.bf16.gmra.mxu0 %v270
  %v2114 = vpop.f32.mrf.mxu0
  %v2115 = vadd.f32 %v1403, %v2114
  %v2116 = vpop.f32.mrf.mxu0
  %v2117 = vadd.f32 %v1405, %v2116
  %2118 = vmatmul.bf16.gmra.mxu0 %v271
  %v2119 = vpop.f32.mrf.mxu0
  %v2120 = vadd.f32 %v1408, %v2119
  %v2121 = vpop.f32.mrf.mxu0
  %v2122 = vadd.f32 %v1410, %v2121
  %2123 = vmatmul.bf16.gmra.mxu0 %v272
  %v2124 = vpop.f32.mrf.mxu0
  %v2125 = vadd.f32 %v1413, %v2124
  %v2126 = vpop.f32.mrf.mxu0
  %v2127 = vadd.f32 %v1415, %v2126
  %2128 = vmatmul.bf16.gmra.mxu0 %v273
  %v2129 = vpop.f32.mrf.mxu0
  %v2130 = vadd.f32 %v1418, %v2129
  %v2131 = vpop.f32.mrf.mxu0
  %v2132 = vadd.f32 %v1420, %v2131
  %2133 = vmatmul.bf16.gmra.mxu0 %v274
  %v2134 = vpop.f32.mrf.mxu0
  %v2135 = vadd.f32 %v1423, %v2134
  %v2136 = vpop.f32.mrf.mxu0
  %v2137 = vadd.f32 %v1425, %v2136
  %2138 = vmatmul.bf16.gmra.mxu0 %v275
  %v2139 = vpop.f32.mrf.mxu0
  %v2140 = vadd.f32 %v1428, %v2139
  %v2141 = vpop.f32.mrf.mxu0
  %v2142 = vadd.f32 %v1430, %v2141
  %2143 = vmatmul.bf16.gmra.mxu0 %v276
  %v2144 = vpop.f32.mrf.mxu0
  %v2145 = vadd.f32 %v1433, %v2144
  %v2146 = vpop.f32.mrf.mxu0
  %v2147 = vadd.f32 %v1435, %v2146
  %2148 = vdwg.mxu0
  %2149 = vmatpush.bf16.msra.mxu0 %v1789
  %2150 = vmatpush.bf16.msra.mxu0 %v1781
  %2151 = vmatpush.bf16.msra.mxu0 %v1773
  %2152 = vmatpush.bf16.msra.mxu0 %v1765
  %2153 = vmatpush.bf16.msra.mxu0 %v1757
  %2154 = vmatpush.bf16.msra.mxu0 %v1749
  %2155 = vmatpush.bf16.msra.mxu0 %v1741
  %2156 = vmatpush.bf16.msra.mxu0 %v1733
  %2157 = vmatmul.bf16.gmra.mxu0 %v269
  %v2158 = vpop.f32.mrf.mxu0
  %v2159 = vadd.f32 %v1447, %v2158
  %v2160 = vpop.f32.mrf.mxu0
  %v2161 = vadd.f32 %v1449, %v2160
  %2162 = vmatmul.bf16.gmra.mxu0 %v270
  %v2163 = vpop.f32.mrf.mxu0
  %v2164 = vadd.f32 %v1452, %v2163
  %v2165 = vpop.f32.mrf.mxu0
  %v2166 = vadd.f32 %v1454, %v2165
  %2167 = vmatmul.bf16.gmra.mxu0 %v271
  %v2168 = vpop.f32.mrf.mxu0
  %v2169 = vadd.f32 %v1457, %v2168
  %v2170 = vpop.f32.mrf.mxu0
  %v2171 = vadd.f32 %v1459, %v2170
  %2172 = vmatmul.bf16.gmra.mxu0 %v272
  %v2173 = vpop.f32.mrf.mxu0
  %v2174 = vadd.f32 %v1462, %v2173
  %v2175 = vpop.f32.mrf.mxu0
  %v2176 = vadd.f32 %v1464, %v2175
  %2177 = vmatmul.bf16.gmra.mxu0 %v273
  %v2178 = vpop.f32.mrf.mxu0
  %v2179 = vadd.f32 %v1467, %v2178
  %v2180 = vpop.f32.mrf.mxu0
  %v2181 = vadd.f32 %v1469, %v2180
  %2182 = vmatmul.bf16.gmra.mxu0 %v274
  %v2183 = vpop.f32.mrf.mxu0
  %v2184 = vadd.f32 %v1472, %v2183
  %v2185 = vpop.f32.mrf.mxu0
  %v2186 = vadd.f32 %v1474, %v2185
  %2187 = vmatmul.bf16.gmra.mxu0 %v275
  %v2188 = vpop.f32.mrf.mxu0
  %v2189 = vadd.f32 %v1477, %v2188
  %v2190 = vpop.f32.mrf.mxu0
  %v2191 = vadd.f32 %v1479, %v2190
  %2192 = vmatmul.bf16.gmra.mxu0 %v276
  %v2193 = vpop.f32.mrf.mxu0
  %v2194 = vadd.f32 %v1482, %v2193
  %v2195 = vpop.f32.mrf.mxu0
  %v2196 = vadd.f32 %v1484, %v2195
  %2197 = vdwg.mxu0
  %2198 = vmatpush.bf16.msra.mxu0 %v1790
  %2199 = vmatpush.bf16.msra.mxu0 %v1782
  %2200 = vmatpush.bf16.msra.mxu0 %v1774
  %2201 = vmatpush.bf16.msra.mxu0 %v1766
  %2202 = vmatpush.bf16.msra.mxu0 %v1758
  %2203 = vmatpush.bf16.msra.mxu0 %v1750
  %2204 = vmatpush.bf16.msra.mxu0 %v1742
  %2205 = vmatpush.bf16.msra.mxu0 %v1734
  %2206 = vmatmul.bf16.gmra.mxu0 %v269
  %v2207 = vpop.f32.mrf.mxu0
  %v2208 = vadd.f32 %v1496, %v2207
  %v2209 = vpop.f32.mrf.mxu0
  %v2210 = vadd.f32 %v1498, %v2209
  %2211 = vmatmul.bf16.gmra.mxu0 %v270
  %v2212 = vpop.f32.mrf.mxu0
  %v2213 = vadd.f32 %v1501, %v2212
  %v2214 = vpop.f32.mrf.mxu0
  %v2215 = vadd.f32 %v1503, %v2214
  %2216 = vmatmul.bf16.gmra.mxu0 %v271
  %v2217 = vpop.f32.mrf.mxu0
  %v2218 = vadd.f32 %v1506, %v2217
  %v2219 = vpop.f32.mrf.mxu0
  %v2220 = vadd.f32 %v1508, %v2219
  %2221 = vmatmul.bf16.gmra.mxu0 %v272
  %v2222 = vpop.f32.mrf.mxu0
  %v2223 = vadd.f32 %v1511, %v2222
  %v2224 = vpop.f32.mrf.mxu0
  %v2225 = vadd.f32 %v1513, %v2224
  %2226 = vmatmul.bf16.gmra.mxu0 %v273
  %v2227 = vpop.f32.mrf.mxu0
  %v2228 = vadd.f32 %v1516, %v2227
  %v2229 = vpop.f32.mrf.mxu0
  %v2230 = vadd.f32 %v1518, %v2229
  %2231 = vmatmul.bf16.gmra.mxu0 %v274
  %v2232 = vpop.f32.mrf.mxu0
  %v2233 = vadd.f32 %v1521, %v2232
  %v2234 = vpop.f32.mrf.mxu0
  %v2235 = vadd.f32 %v1523, %v2234
  %2236 = vmatmul.bf16.gmra.mxu0 %v275
  %v2237 = vpop.f32.mrf.mxu0
  %v2238 = vadd.f32 %v1526, %v2237
  %v2239 = vpop.f32.mrf.mxu0
  %v2240 = vadd.f32 %v1528, %v2239
  %2241 = vmatmul.bf16.gmra.mxu0 %v276
  %v2242 = vpop.f32.mrf.mxu0
  %v2243 = vadd.f32 %v1531, %v2242
  %v2244 = vpop.f32.mrf.mxu0
  %v2245 = vadd.f32 %v1533, %v2244
  %2246 = vdwg.mxu0
  %v2247 = vld [vmem:[%s5 + $0x400] sm:$0xff]
  %v2248 = vld [vmem:[%s5 + $0x408] sm:$0xff]
  %v2249 = vld [vmem:[%s5 + $0x410] sm:$0xff]
  %v2250 = vld [vmem:[%s5 + $0x418] sm:$0xff]
  %v2251 = vld [vmem:[%s5 + $0x420] sm:$0xff]
  %v2252 = vld [vmem:[%s5 + $0x428] sm:$0xff]
  %v2253 = vld [vmem:[%s5 + $0x430] sm:$0xff]
  %v2254 = vld [vmem:[%s5 + $0x438] sm:$0xff]
  %v2255 = vld [vmem:[%s5 + $0x440] sm:$0xff]
  %v2256 = vld [vmem:[%s5 + $0x448] sm:$0xff]
  %v2257 = vld [vmem:[%s5 + $0x450] sm:$0xff]
  %v2258 = vld [vmem:[%s5 + $0x458] sm:$0xff]
  %v2259 = vld [vmem:[%s5 + $0x460] sm:$0xff]
  %v2260 = vld [vmem:[%s5 + $0x468] sm:$0xff]
  %v2261 = vld [vmem:[%s5 + $0x470] sm:$0xff]
  %v2262 = vld [vmem:[%s5 + $0x478] sm:$0xff]
  %v2263 = vld [vmem:[%s5 + $0x480] sm:$0xff]
  %v2264 = vld [vmem:[%s5 + $0x488] sm:$0xff]
  %v2265 = vld [vmem:[%s5 + $0x490] sm:$0xff]
  %v2266 = vld [vmem:[%s5 + $0x498] sm:$0xff]
  %v2267 = vld [vmem:[%s5 + $0x4a0] sm:$0xff]
  %v2268 = vld [vmem:[%s5 + $0x4a8] sm:$0xff]
  %v2269 = vld [vmem:[%s5 + $0x4b0] sm:$0xff]
  %v2270 = vld [vmem:[%s5 + $0x4b8] sm:$0xff]
  %v2271 = vld [vmem:[%s5 + $0x4c0] sm:$0xff]
  %v2272 = vld [vmem:[%s5 + $0x4c8] sm:$0xff]
  %v2273 = vld [vmem:[%s5 + $0x4d0] sm:$0xff]
  %v2274 = vld [vmem:[%s5 + $0x4d8] sm:$0xff]
  %v2275 = vld [vmem:[%s5 + $0x4e0] sm:$0xff]
  %v2276 = vld [vmem:[%s5 + $0x4e8] sm:$0xff]
  %v2277 = vld [vmem:[%s5 + $0x4f0] sm:$0xff]
  %v2278 = vld [vmem:[%s5 + $0x4f8] sm:$0xff]
  %v2279 = vld [vmem:[%s5 + $0x500] sm:$0xff]
  %v2280 = vld [vmem:[%s5 + $0x508] sm:$0xff]
  %v2281 = vld [vmem:[%s5 + $0x510] sm:$0xff]
  %v2282 = vld [vmem:[%s5 + $0x518] sm:$0xff]
  %v2283 = vld [vmem:[%s5 + $0x520] sm:$0xff]
  %v2284 = vld [vmem:[%s5 + $0x528] sm:$0xff]
  %v2285 = vld [vmem:[%s5 + $0x530] sm:$0xff]
  %v2286 = vld [vmem:[%s5 + $0x538] sm:$0xff]
  %v2287 = vld [vmem:[%s5 + $0x540] sm:$0xff]
  %v2288 = vld [vmem:[%s5 + $0x548] sm:$0xff]
  %v2289 = vld [vmem:[%s5 + $0x550] sm:$0xff]
  %v2290 = vld [vmem:[%s5 + $0x558] sm:$0xff]
  %v2291 = vld [vmem:[%s5 + $0x560] sm:$0xff]
  %v2292 = vld [vmem:[%s5 + $0x568] sm:$0xff]
  %v2293 = vld [vmem:[%s5 + $0x570] sm:$0xff]
  %v2294 = vld [vmem:[%s5 + $0x578] sm:$0xff]
  %v2295 = vld [vmem:[%s5 + $0x580] sm:$0xff]
  %v2296 = vld [vmem:[%s5 + $0x588] sm:$0xff]
  %v2297 = vld [vmem:[%s5 + $0x590] sm:$0xff]
  %v2298 = vld [vmem:[%s5 + $0x598] sm:$0xff]
  %v2299 = vld [vmem:[%s5 + $0x5a0] sm:$0xff]
  %v2300 = vld [vmem:[%s5 + $0x5a8] sm:$0xff]
  %v2301 = vld [vmem:[%s5 + $0x5b0] sm:$0xff]
  %v2302 = vld [vmem:[%s5 + $0x5b8] sm:$0xff]
  %v2303 = vld [vmem:[%s5 + $0x5c0] sm:$0xff]
  %v2304 = vld [vmem:[%s5 + $0x5c8] sm:$0xff]
  %v2305 = vld [vmem:[%s5 + $0x5d0] sm:$0xff]
  %v2306 = vld [vmem:[%s5 + $0x5d8] sm:$0xff]
  %v2307 = vld [vmem:[%s5 + $0x5e0] sm:$0xff]
  %v2308 = vld [vmem:[%s5 + $0x5e8] sm:$0xff]
  %v2309 = vld [vmem:[%s5 + $0x5f0] sm:$0xff]
  %v2310 = vld [vmem:[%s5 + $0x5f8] sm:$0xff]
  %v2375 = vunpack.c.l.b16 %v2247
  %v2376 = vunpack.c.h.b16 %v2247
  %v2377 = vunpack.c.l.b16 %v2248
  %v2378 = vunpack.c.h.b16 %v2248
  %v2379 = vunpack.c.l.b16 %v2249
  %v2380 = vunpack.c.h.b16 %v2249
  %v2381 = vunpack.c.l.b16 %v2250
  %v2382 = vunpack.c.h.b16 %v2250
  %v2383 = vunpack.c.l.b16 %v2251
  %v2384 = vunpack.c.h.b16 %v2251
  %v2385 = vunpack.c.l.b16 %v2252
  %v2386 = vunpack.c.h.b16 %v2252
  %v2387 = vunpack.c.l.b16 %v2253
  %v2388 = vunpack.c.h.b16 %v2253
  %v2389 = vunpack.c.l.b16 %v2254
  %v2390 = vunpack.c.h.b16 %v2254
  %v2391 = vunpack.c.l.b16 %v2255
  %v2392 = vunpack.c.h.b16 %v2255
  %v2393 = vunpack.c.l.b16 %v2256
  %v2394 = vunpack.c.h.b16 %v2256
  %v2395 = vunpack.c.l.b16 %v2257
  %v2396 = vunpack.c.h.b16 %v2257
  %v2397 = vunpack.c.l.b16 %v2258
  %v2398 = vunpack.c.h.b16 %v2258
  %v2399 = vunpack.c.l.b16 %v2259
  %v2400 = vunpack.c.h.b16 %v2259
  %v2401 = vunpack.c.l.b16 %v2260
  %v2402 = vunpack.c.h.b16 %v2260
  %v2403 = vunpack.c.l.b16 %v2261
  %v2404 = vunpack.c.h.b16 %v2261
  %v2405 = vunpack.c.l.b16 %v2262
  %v2406 = vunpack.c.h.b16 %v2262
  %v2407 = vunpack.c.l.b16 %v2263
  %v2408 = vunpack.c.h.b16 %v2263
  %v2409 = vunpack.c.l.b16 %v2264
  %v2410 = vunpack.c.h.b16 %v2264
  %v2411 = vunpack.c.l.b16 %v2265
  %v2412 = vunpack.c.h.b16 %v2265
  %v2413 = vunpack.c.l.b16 %v2266
  %v2414 = vunpack.c.h.b16 %v2266
  %v2415 = vunpack.c.l.b16 %v2267
  %v2416 = vunpack.c.h.b16 %v2267
  %v2417 = vunpack.c.l.b16 %v2268
  %v2418 = vunpack.c.h.b16 %v2268
  %v2419 = vunpack.c.l.b16 %v2269
  %v2420 = vunpack.c.h.b16 %v2269
  %v2421 = vunpack.c.l.b16 %v2270
  %v2422 = vunpack.c.h.b16 %v2270
  %v2423 = vunpack.c.l.b16 %v2271
  %v2424 = vunpack.c.h.b16 %v2271
  %v2425 = vunpack.c.l.b16 %v2272
  %v2426 = vunpack.c.h.b16 %v2272
  %v2427 = vunpack.c.l.b16 %v2273
  %v2428 = vunpack.c.h.b16 %v2273
  %v2429 = vunpack.c.l.b16 %v2274
  %v2430 = vunpack.c.h.b16 %v2274
  %v2431 = vunpack.c.l.b16 %v2275
  %v2432 = vunpack.c.h.b16 %v2275
  %v2433 = vunpack.c.l.b16 %v2276
  %v2434 = vunpack.c.h.b16 %v2276
  %v2435 = vunpack.c.l.b16 %v2277
  %v2436 = vunpack.c.h.b16 %v2277
  %v2437 = vunpack.c.l.b16 %v2278
  %v2438 = vunpack.c.h.b16 %v2278
  %v2439 = vunpack.c.l.b16 %v2279
  %v2440 = vunpack.c.h.b16 %v2279
  %v2441 = vunpack.c.l.b16 %v2280
  %v2442 = vunpack.c.h.b16 %v2280
  %v2443 = vunpack.c.l.b16 %v2281
  %v2444 = vunpack.c.h.b16 %v2281
  %v2445 = vunpack.c.l.b16 %v2282
  %v2446 = vunpack.c.h.b16 %v2282
  %v2447 = vunpack.c.l.b16 %v2283
  %v2448 = vunpack.c.h.b16 %v2283
  %v2449 = vunpack.c.l.b16 %v2284
  %v2450 = vunpack.c.h.b16 %v2284
  %v2451 = vunpack.c.l.b16 %v2285
  %v2452 = vunpack.c.h.b16 %v2285
  %v2453 = vunpack.c.l.b16 %v2286
  %v2454 = vunpack.c.h.b16 %v2286
  %v2455 = vunpack.c.l.b16 %v2287
  %v2456 = vunpack.c.h.b16 %v2287
  %v2457 = vunpack.c.l.b16 %v2288
  %v2458 = vunpack.c.h.b16 %v2288
  %v2459 = vunpack.c.l.b16 %v2289
  %v2460 = vunpack.c.h.b16 %v2289
  %v2461 = vunpack.c.l.b16 %v2290
  %v2462 = vunpack.c.h.b16 %v2290
  %v2463 = vunpack.c.l.b16 %v2291
  %v2464 = vunpack.c.h.b16 %v2291
  %v2465 = vunpack.c.l.b16 %v2292
  %v2466 = vunpack.c.h.b16 %v2292
  %v2467 = vunpack.c.l.b16 %v2293
  %v2468 = vunpack.c.h.b16 %v2293
  %v2469 = vunpack.c.l.b16 %v2294
  %v2470 = vunpack.c.h.b16 %v2294
  %v2471 = vunpack.c.l.b16 %v2295
  %v2472 = vunpack.c.h.b16 %v2295
  %v2473 = vunpack.c.l.b16 %v2296
  %v2474 = vunpack.c.h.b16 %v2296
  %v2475 = vunpack.c.l.b16 %v2297
  %v2476 = vunpack.c.h.b16 %v2297
  %v2477 = vunpack.c.l.b16 %v2298
  %v2478 = vunpack.c.h.b16 %v2298
  %v2479 = vunpack.c.l.b16 %v2299
  %v2480 = vunpack.c.h.b16 %v2299
  %v2481 = vunpack.c.l.b16 %v2300
  %v2482 = vunpack.c.h.b16 %v2300
  %v2483 = vunpack.c.l.b16 %v2301
  %v2484 = vunpack.c.h.b16 %v2301
  %v2485 = vunpack.c.l.b16 %v2302
  %v2486 = vunpack.c.h.b16 %v2302
  %v2487 = vunpack.c.l.b16 %v2303
  %v2488 = vunpack.c.h.b16 %v2303
  %v2489 = vunpack.c.l.b16 %v2304
  %v2490 = vunpack.c.h.b16 %v2304
  %v2491 = vunpack.c.l.b16 %v2305
  %v2492 = vunpack.c.h.b16 %v2305
  %v2493 = vunpack.c.l.b16 %v2306
  %v2494 = vunpack.c.h.b16 %v2306
  %v2495 = vunpack.c.l.b16 %v2307
  %v2496 = vunpack.c.h.b16 %v2307
  %v2497 = vunpack.c.l.b16 %v2308
  %v2498 = vunpack.c.h.b16 %v2308
  %v2499 = vunpack.c.l.b16 %v2309
  %v2500 = vunpack.c.h.b16 %v2309
  %v2501 = vunpack.c.l.b16 %v2310
  %v2502 = vunpack.c.h.b16 %v2310
  %v2503 = vpack.c.b16 %v2383, %v2375
  %v2504 = vpack.c.b16 %v2384, %v2376
  %v2505 = vpack.c.b16 %v2385, %v2377
  %v2506 = vpack.c.b16 %v2386, %v2378
  %v2507 = vpack.c.b16 %v2387, %v2379
  %v2508 = vpack.c.b16 %v2388, %v2380
  %v2509 = vpack.c.b16 %v2389, %v2381
  %v2510 = vpack.c.b16 %v2390, %v2382
  %v2511 = vpack.c.b16 %v2399, %v2391
  %v2512 = vpack.c.b16 %v2400, %v2392
  %v2513 = vpack.c.b16 %v2401, %v2393
  %v2514 = vpack.c.b16 %v2402, %v2394
  %v2515 = vpack.c.b16 %v2403, %v2395
  %v2516 = vpack.c.b16 %v2404, %v2396
  %v2517 = vpack.c.b16 %v2405, %v2397
  %v2518 = vpack.c.b16 %v2406, %v2398
  %v2519 = vpack.c.b16 %v2415, %v2407
  %v2520 = vpack.c.b16 %v2416, %v2408
  %v2521 = vpack.c.b16 %v2417, %v2409
  %v2522 = vpack.c.b16 %v2418, %v2410
  %v2523 = vpack.c.b16 %v2419, %v2411
  %v2524 = vpack.c.b16 %v2420, %v2412
  %v2525 = vpack.c.b16 %v2421, %v2413
  %v2526 = vpack.c.b16 %v2422, %v2414
  %v2527 = vpack.c.b16 %v2431, %v2423
  %v2528 = vpack.c.b16 %v2432, %v2424
  %v2529 = vpack.c.b16 %v2433, %v2425
  %v2530 = vpack.c.b16 %v2434, %v2426
  %v2531 = vpack.c.b16 %v2435, %v2427
  %v2532 = vpack.c.b16 %v2436, %v2428
  %v2533 = vpack.c.b16 %v2437, %v2429
  %v2534 = vpack.c.b16 %v2438, %v2430
  %v2535 = vpack.c.b16 %v2447, %v2439
  %v2536 = vpack.c.b16 %v2448, %v2440
  %v2537 = vpack.c.b16 %v2449, %v2441
  %v2538 = vpack.c.b16 %v2450, %v2442
  %v2539 = vpack.c.b16 %v2451, %v2443
  %v2540 = vpack.c.b16 %v2452, %v2444
  %v2541 = vpack.c.b16 %v2453, %v2445
  %v2542 = vpack.c.b16 %v2454, %v2446
  %v2543 = vpack.c.b16 %v2463, %v2455
  %v2544 = vpack.c.b16 %v2464, %v2456
  %v2545 = vpack.c.b16 %v2465, %v2457
  %v2546 = vpack.c.b16 %v2466, %v2458
  %v2547 = vpack.c.b16 %v2467, %v2459
  %v2548 = vpack.c.b16 %v2468, %v2460
  %v2549 = vpack.c.b16 %v2469, %v2461
  %v2550 = vpack.c.b16 %v2470, %v2462
  %v2551 = vpack.c.b16 %v2479, %v2471
  %v2552 = vpack.c.b16 %v2480, %v2472
  %v2553 = vpack.c.b16 %v2481, %v2473
  %v2554 = vpack.c.b16 %v2482, %v2474
  %v2555 = vpack.c.b16 %v2483, %v2475
  %v2556 = vpack.c.b16 %v2484, %v2476
  %v2557 = vpack.c.b16 %v2485, %v2477
  %v2558 = vpack.c.b16 %v2486, %v2478
  %v2559 = vpack.c.b16 %v2495, %v2487
  %v2560 = vpack.c.b16 %v2496, %v2488
  %v2561 = vpack.c.b16 %v2497, %v2489
  %v2562 = vpack.c.b16 %v2498, %v2490
  %v2563 = vpack.c.b16 %v2499, %v2491
  %v2564 = vpack.c.b16 %v2500, %v2492
  %v2565 = vpack.c.b16 %v2501, %v2493
  %v2566 = vpack.c.b16 %v2502, %v2494
  %2631 = vmatpush.bf16.msra.mxu0 %v2559
  %2632 = vmatpush.bf16.msra.mxu0 %v2551
  %2633 = vmatpush.bf16.msra.mxu0 %v2543
  %2634 = vmatpush.bf16.msra.mxu0 %v2535
  %2635 = vmatpush.bf16.msra.mxu0 %v2527
  %2636 = vmatpush.bf16.msra.mxu0 %v2519
  %2637 = vmatpush.bf16.msra.mxu0 %v2511
  %2638 = vmatpush.bf16.msra.mxu0 %v2503
  %2639 = vmatmul.bf16.gmra.mxu0 %v687
  %v2640 = vpop.f32.mrf.mxu0
  %v2641 = vadd.f32 0.0, %v2640
  %v2642 = vpop.f32.mrf.mxu0
  %v2643 = vadd.f32 0.0, %v2642
  %2644 = vmatmul.bf16.gmra.mxu0 %v688
  %v2645 = vpop.f32.mrf.mxu0
  %v2646 = vadd.f32 0.0, %v2645
  %v2647 = vpop.f32.mrf.mxu0
  %v2648 = vadd.f32 0.0, %v2647
  %2649 = vmatmul.bf16.gmra.mxu0 %v689
  %v2650 = vpop.f32.mrf.mxu0
  %v2651 = vadd.f32 0.0, %v2650
  %v2652 = vpop.f32.mrf.mxu0
  %v2653 = vadd.f32 0.0, %v2652
  %2654 = vmatmul.bf16.gmra.mxu0 %v690
  %v2655 = vpop.f32.mrf.mxu0
  %v2656 = vadd.f32 0.0, %v2655
  %v2657 = vpop.f32.mrf.mxu0
  %v2658 = vadd.f32 0.0, %v2657
  %2659 = vmatmul.bf16.gmra.mxu0 %v691
  %v2660 = vpop.f32.mrf.mxu0
  %v2661 = vadd.f32 0.0, %v2660
  %v2662 = vpop.f32.mrf.mxu0
  %v2663 = vadd.f32 0.0, %v2662
  %2664 = vmatmul.bf16.gmra.mxu0 %v692
  %v2665 = vpop.f32.mrf.mxu0
  %v2666 = vadd.f32 0.0, %v2665
  %v2667 = vpop.f32.mrf.mxu0
  %v2668 = vadd.f32 0.0, %v2667
  %2669 = vmatmul.bf16.gmra.mxu0 %v693
  %v2670 = vpop.f32.mrf.mxu0
  %v2671 = vadd.f32 0.0, %v2670
  %v2672 = vpop.f32.mrf.mxu0
  %v2673 = vadd.f32 0.0, %v2672
  %2674 = vmatmul.bf16.gmra.mxu0 %v694
  %v2675 = vpop.f32.mrf.mxu0
  %v2676 = vadd.f32 0.0, %v2675
  %v2677 = vpop.f32.mrf.mxu0
  %v2678 = vadd.f32 0.0, %v2677
  %2679 = vdwg.mxu0
  %2680 = vmatpush.bf16.msra.mxu0 %v2560
  %2681 = vmatpush.bf16.msra.mxu0 %v2552
  %2682 = vmatpush.bf16.msra.mxu0 %v2544
  %2683 = vmatpush.bf16.msra.mxu0 %v2536
  %2684 = vmatpush.bf16.msra.mxu0 %v2528
  %2685 = vmatpush.bf16.msra.mxu0 %v2520
  %2686 = vmatpush.bf16.msra.mxu0 %v2512
  %2687 = vmatpush.bf16.msra.mxu0 %v2504
  %2688 = vmatmul.bf16.gmra.mxu0 %v687
  %v2689 = vpop.f32.mrf.mxu0
  %v2690 = vadd.f32 0.0, %v2689
  %v2691 = vpop.f32.mrf.mxu0
  %v2692 = vadd.f32 0.0, %v2691
  %2693 = vmatmul.bf16.gmra.mxu0 %v688
  %v2694 = vpop.f32.mrf.mxu0
  %v2695 = vadd.f32 0.0, %v2694
  %v2696 = vpop.f32.mrf.mxu0
  %v2697 = vadd.f32 0.0, %v2696
  %2698 = vmatmul.bf16.gmra.mxu0 %v689
  %v2699 = vpop.f32.mrf.mxu0
  %v2700 = vadd.f32 0.0, %v2699
  %v2701 = vpop.f32.mrf.mxu0
  %v2702 = vadd.f32 0.0, %v2701
  %2703 = vmatmul.bf16.gmra.mxu0 %v690
  %v2704 = vpop.f32.mrf.mxu0
  %v2705 = vadd.f32 0.0, %v2704
  %v2706 = vpop.f32.mrf.mxu0
  %v2707 = vadd.f32 0.0, %v2706
  %2708 = vmatmul.bf16.gmra.mxu0 %v691
  %v2709 = vpop.f32.mrf.mxu0
  %v2710 = vadd.f32 0.0, %v2709
  %v2711 = vpop.f32.mrf.mxu0
  %v2712 = vadd.f32 0.0, %v2711
  %2713 = vmatmul.bf16.gmra.mxu0 %v692
  %v2714 = vpop.f32.mrf.mxu0
  %v2715 = vadd.f32 0.0, %v2714
  %v2716 = vpop.f32.mrf.mxu0
  %v2717 = vadd.f32 0.0, %v2716
  %2718 = vmatmul.bf16.gmra.mxu0 %v693
  %v2719 = vpop.f32.mrf.mxu0
  %v2720 = vadd.f32 0.0, %v2719
  %v2721 = vpop.f32.mrf.mxu0
  %v2722 = vadd.f32 0.0, %v2721
  %2723 = vmatmul.bf16.gmra.mxu0 %v694
  %v2724 = vpop.f32.mrf.mxu0
  %v2725 = vadd.f32 0.0, %v2724
  %v2726 = vpop.f32.mrf.mxu0
  %v2727 = vadd.f32 0.0, %v2726
  %2728 = vdwg.mxu0
  %2729 = vmatpush.bf16.msra.mxu0 %v2561
  %2730 = vmatpush.bf16.msra.mxu0 %v2553
  %2731 = vmatpush.bf16.msra.mxu0 %v2545
  %2732 = vmatpush.bf16.msra.mxu0 %v2537
  %2733 = vmatpush.bf16.msra.mxu0 %v2529
  %2734 = vmatpush.bf16.msra.mxu0 %v2521
  %2735 = vmatpush.bf16.msra.mxu0 %v2513
  %2736 = vmatpush.bf16.msra.mxu0 %v2505
  %2737 = vmatmul.bf16.gmra.mxu0 %v687
  %v2738 = vpop.f32.mrf.mxu0
  %v2739 = vadd.f32 0.0, %v2738
  %v2740 = vpop.f32.mrf.mxu0
  %v2741 = vadd.f32 0.0, %v2740
  %2742 = vmatmul.bf16.gmra.mxu0 %v688
  %v2743 = vpop.f32.mrf.mxu0
  %v2744 = vadd.f32 0.0, %v2743
  %v2745 = vpop.f32.mrf.mxu0
  %v2746 = vadd.f32 0.0, %v2745
  %2747 = vmatmul.bf16.gmra.mxu0 %v689
  %v2748 = vpop.f32.mrf.mxu0
  %v2749 = vadd.f32 0.0, %v2748
  %v2750 = vpop.f32.mrf.mxu0
  %v2751 = vadd.f32 0.0, %v2750
  %2752 = vmatmul.bf16.gmra.mxu0 %v690
  %v2753 = vpop.f32.mrf.mxu0
  %v2754 = vadd.f32 0.0, %v2753
  %v2755 = vpop.f32.mrf.mxu0
  %v2756 = vadd.f32 0.0, %v2755
  %2757 = vmatmul.bf16.gmra.mxu0 %v691
  %v2758 = vpop.f32.mrf.mxu0
  %v2759 = vadd.f32 0.0, %v2758
  %v2760 = vpop.f32.mrf.mxu0
  %v2761 = vadd.f32 0.0, %v2760
  %2762 = vmatmul.bf16.gmra.mxu0 %v692
  %v2763 = vpop.f32.mrf.mxu0
  %v2764 = vadd.f32 0.0, %v2763
  %v2765 = vpop.f32.mrf.mxu0
  %v2766 = vadd.f32 0.0, %v2765
  %2767 = vmatmul.bf16.gmra.mxu0 %v693
  %v2768 = vpop.f32.mrf.mxu0
  %v2769 = vadd.f32 0.0, %v2768
  %v2770 = vpop.f32.mrf.mxu0
  %v2771 = vadd.f32 0.0, %v2770
  %2772 = vmatmul.bf16.gmra.mxu0 %v694
  %v2773 = vpop.f32.mrf.mxu0
  %v2774 = vadd.f32 0.0, %v2773
  %v2775 = vpop.f32.mrf.mxu0
  %v2776 = vadd.f32 0.0, %v2775
  %2777 = vdwg.mxu0
  %2778 = vmatpush.bf16.msra.mxu0 %v2562
  %2779 = vmatpush.bf16.msra.mxu0 %v2554
  %2780 = vmatpush.bf16.msra.mxu0 %v2546
  %2781 = vmatpush.bf16.msra.mxu0 %v2538
  %2782 = vmatpush.bf16.msra.mxu0 %v2530
  %2783 = vmatpush.bf16.msra.mxu0 %v2522
  %2784 = vmatpush.bf16.msra.mxu0 %v2514
  %2785 = vmatpush.bf16.msra.mxu0 %v2506
  %2786 = vmatmul.bf16.gmra.mxu0 %v687
  %v2787 = vpop.f32.mrf.mxu0
  %v2788 = vadd.f32 0.0, %v2787
  %v2789 = vpop.f32.mrf.mxu0
  %v2790 = vadd.f32 0.0, %v2789
  %2791 = vmatmul.bf16.gmra.mxu0 %v688
  %v2792 = vpop.f32.mrf.mxu0
  %v2793 = vadd.f32 0.0, %v2792
  %v2794 = vpop.f32.mrf.mxu0
  %v2795 = vadd.f32 0.0, %v2794
  %2796 = vmatmul.bf16.gmra.mxu0 %v689
  %v2797 = vpop.f32.mrf.mxu0
  %v2798 = vadd.f32 0.0, %v2797
  %v2799 = vpop.f32.mrf.mxu0
  %v2800 = vadd.f32 0.0, %v2799
  %2801 = vmatmul.bf16.gmra.mxu0 %v690
  %v2802 = vpop.f32.mrf.mxu0
  %v2803 = vadd.f32 0.0, %v2802
  %v2804 = vpop.f32.mrf.mxu0
  %v2805 = vadd.f32 0.0, %v2804
  %2806 = vmatmul.bf16.gmra.mxu0 %v691
  %v2807 = vpop.f32.mrf.mxu0
  %v2808 = vadd.f32 0.0, %v2807
  %v2809 = vpop.f32.mrf.mxu0
  %v2810 = vadd.f32 0.0, %v2809
  %2811 = vmatmul.bf16.gmra.mxu0 %v692
  %v2812 = vpop.f32.mrf.mxu0
  %v2813 = vadd.f32 0.0, %v2812
  %v2814 = vpop.f32.mrf.mxu0
  %v2815 = vadd.f32 0.0, %v2814
  %2816 = vmatmul.bf16.gmra.mxu0 %v693
  %v2817 = vpop.f32.mrf.mxu0
  %v2818 = vadd.f32 0.0, %v2817
  %v2819 = vpop.f32.mrf.mxu0
  %v2820 = vadd.f32 0.0, %v2819
  %2821 = vmatmul.bf16.gmra.mxu0 %v694
  %v2822 = vpop.f32.mrf.mxu0
  %v2823 = vadd.f32 0.0, %v2822
  %v2824 = vpop.f32.mrf.mxu0
  %v2825 = vadd.f32 0.0, %v2824
  %2826 = vdwg.mxu0
  %2827 = vmatpush.bf16.msra.mxu0 %v2563
  %2828 = vmatpush.bf16.msra.mxu0 %v2555
  %2829 = vmatpush.bf16.msra.mxu0 %v2547
  %2830 = vmatpush.bf16.msra.mxu0 %v2539
  %2831 = vmatpush.bf16.msra.mxu0 %v2531
  %2832 = vmatpush.bf16.msra.mxu0 %v2523
  %2833 = vmatpush.bf16.msra.mxu0 %v2515
  %2834 = vmatpush.bf16.msra.mxu0 %v2507
  %2835 = vmatmul.bf16.gmra.mxu0 %v687
  %v2836 = vpop.f32.mrf.mxu0
  %v2837 = vadd.f32 0.0, %v2836
  %v2838 = vpop.f32.mrf.mxu0
  %v2839 = vadd.f32 0.0, %v2838
  %2840 = vmatmul.bf16.gmra.mxu0 %v688
  %v2841 = vpop.f32.mrf.mxu0
  %v2842 = vadd.f32 0.0, %v2841
  %v2843 = vpop.f32.mrf.mxu0
  %v2844 = vadd.f32 0.0, %v2843
  %2845 = vmatmul.bf16.gmra.mxu0 %v689
  %v2846 = vpop.f32.mrf.mxu0
  %v2847 = vadd.f32 0.0, %v2846
  %v2848 = vpop.f32.mrf.mxu0
  %v2849 = vadd.f32 0.0, %v2848
  %2850 = vmatmul.bf16.gmra.mxu0 %v690
  %v2851 = vpop.f32.mrf.mxu0
  %v2852 = vadd.f32 0.0, %v2851
  %v2853 = vpop.f32.mrf.mxu0
  %v2854 = vadd.f32 0.0, %v2853
  %2855 = vmatmul.bf16.gmra.mxu0 %v691
  %v2856 = vpop.f32.mrf.mxu0
  %v2857 = vadd.f32 0.0, %v2856
  %v2858 = vpop.f32.mrf.mxu0
  %v2859 = vadd.f32 0.0, %v2858
  %2860 = vmatmul.bf16.gmra.mxu0 %v692
  %v2861 = vpop.f32.mrf.mxu0
  %v2862 = vadd.f32 0.0, %v2861
  %v2863 = vpop.f32.mrf.mxu0
  %v2864 = vadd.f32 0.0, %v2863
  %2865 = vmatmul.bf16.gmra.mxu0 %v693
  %v2866 = vpop.f32.mrf.mxu0
  %v2867 = vadd.f32 0.0, %v2866
  %v2868 = vpop.f32.mrf.mxu0
  %v2869 = vadd.f32 0.0, %v2868
  %2870 = vmatmul.bf16.gmra.mxu0 %v694
  %v2871 = vpop.f32.mrf.mxu0
  %v2872 = vadd.f32 0.0, %v2871
  %v2873 = vpop.f32.mrf.mxu0
  %v2874 = vadd.f32 0.0, %v2873
  %2875 = vdwg.mxu0
  %2876 = vmatpush.bf16.msra.mxu0 %v2564
  %2877 = vmatpush.bf16.msra.mxu0 %v2556
  %2878 = vmatpush.bf16.msra.mxu0 %v2548
  %2879 = vmatpush.bf16.msra.mxu0 %v2540
  %2880 = vmatpush.bf16.msra.mxu0 %v2532
  %2881 = vmatpush.bf16.msra.mxu0 %v2524
  %2882 = vmatpush.bf16.msra.mxu0 %v2516
  %2883 = vmatpush.bf16.msra.mxu0 %v2508
  %2884 = vmatmul.bf16.gmra.mxu0 %v687
  %v2885 = vpop.f32.mrf.mxu0
  %v2886 = vadd.f32 0.0, %v2885
  %v2887 = vpop.f32.mrf.mxu0
  %v2888 = vadd.f32 0.0, %v2887
  %2889 = vmatmul.bf16.gmra.mxu0 %v688
  %v2890 = vpop.f32.mrf.mxu0
  %v2891 = vadd.f32 0.0, %v2890
  %v2892 = vpop.f32.mrf.mxu0
  %v2893 = vadd.f32 0.0, %v2892
  %2894 = vmatmul.bf16.gmra.mxu0 %v689
  %v2895 = vpop.f32.mrf.mxu0
  %v2896 = vadd.f32 0.0, %v2895
  %v2897 = vpop.f32.mrf.mxu0
  %v2898 = vadd.f32 0.0, %v2897
  %2899 = vmatmul.bf16.gmra.mxu0 %v690
  %v2900 = vpop.f32.mrf.mxu0
  %v2901 = vadd.f32 0.0, %v2900
  %v2902 = vpop.f32.mrf.mxu0
  %v2903 = vadd.f32 0.0, %v2902
  %2904 = vmatmul.bf16.gmra.mxu0 %v691
  %v2905 = vpop.f32.mrf.mxu0
  %v2906 = vadd.f32 0.0, %v2905
  %v2907 = vpop.f32.mrf.mxu0
  %v2908 = vadd.f32 0.0, %v2907
  %2909 = vmatmul.bf16.gmra.mxu0 %v692
  %v2910 = vpop.f32.mrf.mxu0
  %v2911 = vadd.f32 0.0, %v2910
  %v2912 = vpop.f32.mrf.mxu0
  %v2913 = vadd.f32 0.0, %v2912
  %2914 = vmatmul.bf16.gmra.mxu0 %v693
  %v2915 = vpop.f32.mrf.mxu0
  %v2916 = vadd.f32 0.0, %v2915
  %v2917 = vpop.f32.mrf.mxu0
  %v2918 = vadd.f32 0.0, %v2917
  %2919 = vmatmul.bf16.gmra.mxu0 %v694
  %v2920 = vpop.f32.mrf.mxu0
  %v2921 = vadd.f32 0.0, %v2920
  %v2922 = vpop.f32.mrf.mxu0
  %v2923 = vadd.f32 0.0, %v2922
  %2924 = vdwg.mxu0
  %2925 = vmatpush.bf16.msra.mxu0 %v2565
  %2926 = vmatpush.bf16.msra.mxu0 %v2557
  %2927 = vmatpush.bf16.msra.mxu0 %v2549
  %2928 = vmatpush.bf16.msra.mxu0 %v2541
  %2929 = vmatpush.bf16.msra.mxu0 %v2533
  %2930 = vmatpush.bf16.msra.mxu0 %v2525
  %2931 = vmatpush.bf16.msra.mxu0 %v2517
  %2932 = vmatpush.bf16.msra.mxu0 %v2509
  %2933 = vmatmul.bf16.gmra.mxu0 %v687
  %v2934 = vpop.f32.mrf.mxu0
  %v2935 = vadd.f32 0.0, %v2934
  %v2936 = vpop.f32.mrf.mxu0
  %v2937 = vadd.f32 0.0, %v2936
  %2938 = vmatmul.bf16.gmra.mxu0 %v688
  %v2939 = vpop.f32.mrf.mxu0
  %v2940 = vadd.f32 0.0, %v2939
  %v2941 = vpop.f32.mrf.mxu0
  %v2942 = vadd.f32 0.0, %v2941
  %2943 = vmatmul.bf16.gmra.mxu0 %v689
  %v2944 = vpop.f32.mrf.mxu0
  %v2945 = vadd.f32 0.0, %v2944
  %v2946 = vpop.f32.mrf.mxu0
  %v2947 = vadd.f32 0.0, %v2946
  %2948 = vmatmul.bf16.gmra.mxu0 %v690
  %v2949 = vpop.f32.mrf.mxu0
  %v2950 = vadd.f32 0.0, %v2949
  %v2951 = vpop.f32.mrf.mxu0
  %v2952 = vadd.f32 0.0, %v2951
  %2953 = vmatmul.bf16.gmra.mxu0 %v691
  %v2954 = vpop.f32.mrf.mxu0
  %v2955 = vadd.f32 0.0, %v2954
  %v2956 = vpop.f32.mrf.mxu0
  %v2957 = vadd.f32 0.0, %v2956
  %2958 = vmatmul.bf16.gmra.mxu0 %v692
  %v2959 = vpop.f32.mrf.mxu0
  %v2960 = vadd.f32 0.0, %v2959
  %v2961 = vpop.f32.mrf.mxu0
  %v2962 = vadd.f32 0.0, %v2961
  %2963 = vmatmul.bf16.gmra.mxu0 %v693
  %v2964 = vpop.f32.mrf.mxu0
  %v2965 = vadd.f32 0.0, %v2964
  %v2966 = vpop.f32.mrf.mxu0
  %v2967 = vadd.f32 0.0, %v2966
  %2968 = vmatmul.bf16.gmra.mxu0 %v694
  %v2969 = vpop.f32.mrf.mxu0
  %v2970 = vadd.f32 0.0, %v2969
  %v2971 = vpop.f32.mrf.mxu0
  %v2972 = vadd.f32 0.0, %v2971
  %2973 = vdwg.mxu0
  %2974 = vmatpush.bf16.msra.mxu0 %v2566
  %2975 = vmatpush.bf16.msra.mxu0 %v2558
  %2976 = vmatpush.bf16.msra.mxu0 %v2550
  %2977 = vmatpush.bf16.msra.mxu0 %v2542
  %2978 = vmatpush.bf16.msra.mxu0 %v2534
  %2979 = vmatpush.bf16.msra.mxu0 %v2526
  %2980 = vmatpush.bf16.msra.mxu0 %v2518
  %2981 = vmatpush.bf16.msra.mxu0 %v2510
  %2982 = vmatmul.bf16.gmra.mxu0 %v687
  %v2983 = vpop.f32.mrf.mxu0
  %v2984 = vadd.f32 0.0, %v2983
  %v2985 = vpop.f32.mrf.mxu0
  %v2986 = vadd.f32 0.0, %v2985
  %2987 = vmatmul.bf16.gmra.mxu0 %v688
  %v2988 = vpop.f32.mrf.mxu0
  %v2989 = vadd.f32 0.0, %v2988
  %v2990 = vpop.f32.mrf.mxu0
  %v2991 = vadd.f32 0.0, %v2990
  %2992 = vmatmul.bf16.gmra.mxu0 %v689
  %v2993 = vpop.f32.mrf.mxu0
  %v2994 = vadd.f32 0.0, %v2993
  %v2995 = vpop.f32.mrf.mxu0
  %v2996 = vadd.f32 0.0, %v2995
  %2997 = vmatmul.bf16.gmra.mxu0 %v690
  %v2998 = vpop.f32.mrf.mxu0
  %v2999 = vadd.f32 0.0, %v2998
  %v3000 = vpop.f32.mrf.mxu0
  %v3001 = vadd.f32 0.0, %v3000
  %3002 = vmatmul.bf16.gmra.mxu0 %v691
  %v3003 = vpop.f32.mrf.mxu0
  %v3004 = vadd.f32 0.0, %v3003
  %v3005 = vpop.f32.mrf.mxu0
  %v3006 = vadd.f32 0.0, %v3005
  %3007 = vmatmul.bf16.gmra.mxu0 %v692
  %v3008 = vpop.f32.mrf.mxu0
  %v3009 = vadd.f32 0.0, %v3008
  %v3010 = vpop.f32.mrf.mxu0
  %v3011 = vadd.f32 0.0, %v3010
  %3012 = vmatmul.bf16.gmra.mxu0 %v693
  %v3013 = vpop.f32.mrf.mxu0
  %v3014 = vadd.f32 0.0, %v3013
  %v3015 = vpop.f32.mrf.mxu0
  %v3016 = vadd.f32 0.0, %v3015
  %3017 = vmatmul.bf16.gmra.mxu0 %v694
  %v3018 = vpop.f32.mrf.mxu0
  %v3019 = vadd.f32 0.0, %v3018
  %v3020 = vpop.f32.mrf.mxu0
  %v3021 = vadd.f32 0.0, %v3020
  %3022 = vdwg.mxu0
  %v3023 = vadd.f32 %v1865, %v2641
  %v3024 = vadd.f32 %v1914, %v2690
  %v3025 = vadd.f32 %v1963, %v2739
  %v3026 = vadd.f32 %v2012, %v2788
  %v3027 = vadd.f32 %v2061, %v2837
  %v3028 = vadd.f32 %v2110, %v2886
  %v3029 = vadd.f32 %v2159, %v2935
  %v3030 = vadd.f32 %v2208, %v2984
  %v3031 = vadd.f32 %v1867, %v2643
  %v3032 = vadd.f32 %v1916, %v2692
  %v3033 = vadd.f32 %v1965, %v2741
  %v3034 = vadd.f32 %v2014, %v2790
  %v3035 = vadd.f32 %v2063, %v2839
  %v3036 = vadd.f32 %v2112, %v2888
  %v3037 = vadd.f32 %v2161, %v2937
  %v3038 = vadd.f32 %v2210, %v2986
  %v3039 = vadd.f32 %v1870, %v2646
  %v3040 = vadd.f32 %v1919, %v2695
  %v3041 = vadd.f32 %v1968, %v2744
  %v3042 = vadd.f32 %v2017, %v2793
  %v3043 = vadd.f32 %v2066, %v2842
  %v3044 = vadd.f32 %v2115, %v2891
  %v3045 = vadd.f32 %v2164, %v2940
  %v3046 = vadd.f32 %v2213, %v2989
  %v3047 = vadd.f32 %v1872, %v2648
  %v3048 = vadd.f32 %v1921, %v2697
  %v3049 = vadd.f32 %v1970, %v2746
  %v3050 = vadd.f32 %v2019, %v2795
  %v3051 = vadd.f32 %v2068, %v2844
  %v3052 = vadd.f32 %v2117, %v2893
  %v3053 = vadd.f32 %v2166, %v2942
  %v3054 = vadd.f32 %v2215, %v2991
  %v3055 = vadd.f32 %v1875, %v2651
  %v3056 = vadd.f32 %v1924, %v2700
  %v3057 = vadd.f32 %v1973, %v2749
  %v3058 = vadd.f32 %v2022, %v2798
  %v3059 = vadd.f32 %v2071, %v2847
  %v3060 = vadd.f32 %v2120, %v2896
  %v3061 = vadd.f32 %v2169, %v2945
  %v3062 = vadd.f32 %v2218, %v2994
  %v3063 = vadd.f32 %v1877, %v2653
  %v3064 = vadd.f32 %v1926, %v2702
  %v3065 = vadd.f32 %v1975, %v2751
  %v3066 = vadd.f32 %v2024, %v2800
  %v3067 = vadd.f32 %v2073, %v2849
  %v3068 = vadd.f32 %v2122, %v2898
  %v3069 = vadd.f32 %v2171, %v2947
  %v3070 = vadd.f32 %v2220, %v2996
  %v3071 = vadd.f32 %v1880, %v2656
  %v3072 = vadd.f32 %v1929, %v2705
  %v3073 = vadd.f32 %v1978, %v2754
  %v3074 = vadd.f32 %v2027, %v2803
  %v3075 = vadd.f32 %v2076, %v2852
  %v3076 = vadd.f32 %v2125, %v2901
  %v3077 = vadd.f32 %v2174, %v2950
  %v3078 = vadd.f32 %v2223, %v2999
  %v3079 = vadd.f32 %v1882, %v2658
  %v3080 = vadd.f32 %v1931, %v2707
  %v3081 = vadd.f32 %v1980, %v2756
  %v3082 = vadd.f32 %v2029, %v2805
  %v3083 = vadd.f32 %v2078, %v2854
  %v3084 = vadd.f32 %v2127, %v2903
  %v3085 = vadd.f32 %v2176, %v2952
  %v3086 = vadd.f32 %v2225, %v3001
  %v3087 = vadd.f32 %v1885, %v2661
  %v3088 = vadd.f32 %v1934, %v2710
  %v3089 = vadd.f32 %v1983, %v2759
  %v3090 = vadd.f32 %v2032, %v2808
  %v3091 = vadd.f32 %v2081, %v2857
  %v3092 = vadd.f32 %v2130, %v2906
  %v3093 = vadd.f32 %v2179, %v2955
  %v3094 = vadd.f32 %v2228, %v3004
  %v3095 = vadd.f32 %v1887, %v2663
  %v3096 = vadd.f32 %v1936, %v2712
  %v3097 = vadd.f32 %v1985, %v2761
  %v3098 = vadd.f32 %v2034, %v2810
  %v3099 = vadd.f32 %v2083, %v2859
  %v3100 = vadd.f32 %v2132, %v2908
  %v3101 = vadd.f32 %v2181, %v2957
  %v3102 = vadd.f32 %v2230, %v3006
  %v3103 = vadd.f32 %v1890, %v2666
  %v3104 = vadd.f32 %v1939, %v2715
  %v3105 = vadd.f32 %v1988, %v2764
  %v3106 = vadd.f32 %v2037, %v2813
  %v3107 = vadd.f32 %v2086, %v2862
  %v3108 = vadd.f32 %v2135, %v2911
  %v3109 = vadd.f32 %v2184, %v2960
  %v3110 = vadd.f32 %v2233, %v3009
  %v3111 = vadd.f32 %v1892, %v2668
  %v3112 = vadd.f32 %v1941, %v2717
  %v3113 = vadd.f32 %v1990, %v2766
  %v3114 = vadd.f32 %v2039, %v2815
  %v3115 = vadd.f32 %v2088, %v2864
  %v3116 = vadd.f32 %v2137, %v2913
  %v3117 = vadd.f32 %v2186, %v2962
  %v3118 = vadd.f32 %v2235, %v3011
  %v3119 = vadd.f32 %v1895, %v2671
  %v3120 = vadd.f32 %v1944, %v2720
  %v3121 = vadd.f32 %v1993, %v2769
  %v3122 = vadd.f32 %v2042, %v2818
  %v3123 = vadd.f32 %v2091, %v2867
  %v3124 = vadd.f32 %v2140, %v2916
  %v3125 = vadd.f32 %v2189, %v2965
  %v3126 = vadd.f32 %v2238, %v3014
  %v3127 = vadd.f32 %v1897, %v2673
  %v3128 = vadd.f32 %v1946, %v2722
  %v3129 = vadd.f32 %v1995, %v2771
  %v3130 = vadd.f32 %v2044, %v2820
  %v3131 = vadd.f32 %v2093, %v2869
  %v3132 = vadd.f32 %v2142, %v2918
  %v3133 = vadd.f32 %v2191, %v2967
  %v3134 = vadd.f32 %v2240, %v3016
  %v3135 = vadd.f32 %v1900, %v2676
  %v3136 = vadd.f32 %v1949, %v2725
  %v3137 = vadd.f32 %v1998, %v2774
  %v3138 = vadd.f32 %v2047, %v2823
  %v3139 = vadd.f32 %v2096, %v2872
  %v3140 = vadd.f32 %v2145, %v2921
  %v3141 = vadd.f32 %v2194, %v2970
  %v3142 = vadd.f32 %v2243, %v3019
  %v3143 = vadd.f32 %v1902, %v2678
  %v3144 = vadd.f32 %v1951, %v2727
  %v3145 = vadd.f32 %v2000, %v2776
  %v3146 = vadd.f32 %v2049, %v2825
  %v3147 = vadd.f32 %v2098, %v2874
  %v3148 = vadd.f32 %v2147, %v2923
  %v3149 = vadd.f32 %v2196, %v2972
  %v3150 = vadd.f32 %v2245, %v3021
  %v3151 = vld [vmem:[%s6] sm:$0xff]
  %v3153 = vperm.slane %v3151, 0
  %v3154 = vperm.slane %v3151, 1
  %v3155 = vperm.slane %v3151, 2
  %v3156 = vperm.slane %v3151, 3
  %v3157 = vperm.slane %v3151, 4
  %v3158 = vperm.slane %v3151, 5
  %v3159 = vperm.slane %v3151, 6
  %v3160 = vperm.slane %v3151, 7
  %v3169 = vadd.f32 %v3023, %v3153
  %v3170 = vadd.f32 %v3024, %v3154
  %v3171 = vadd.f32 %v3025, %v3155
  %v3172 = vadd.f32 %v3026, %v3156
  %v3173 = vadd.f32 %v3027, %v3157
  %v3174 = vadd.f32 %v3028, %v3158
  %v3175 = vadd.f32 %v3029, %v3159
  %v3176 = vadd.f32 %v3030, %v3160
  %v3177 = vadd.f32 %v3031, %v3153
  %v3178 = vadd.f32 %v3032, %v3154
  %v3179 = vadd.f32 %v3033, %v3155
  %v3180 = vadd.f32 %v3034, %v3156
  %v3181 = vadd.f32 %v3035, %v3157
  %v3182 = vadd.f32 %v3036, %v3158
  %v3183 = vadd.f32 %v3037, %v3159
  %v3184 = vadd.f32 %v3038, %v3160
  %v3185 = vadd.f32 %v3039, %v3153
  %v3186 = vadd.f32 %v3040, %v3154
  %v3187 = vadd.f32 %v3041, %v3155
  %v3188 = vadd.f32 %v3042, %v3156
  %v3189 = vadd.f32 %v3043, %v3157
  %v3190 = vadd.f32 %v3044, %v3158
  %v3191 = vadd.f32 %v3045, %v3159
  %v3192 = vadd.f32 %v3046, %v3160
  %v3193 = vadd.f32 %v3047, %v3153
  %v3194 = vadd.f32 %v3048, %v3154
  %v3195 = vadd.f32 %v3049, %v3155
  %v3196 = vadd.f32 %v3050, %v3156
  %v3197 = vadd.f32 %v3051, %v3157
  %v3198 = vadd.f32 %v3052, %v3158
  %v3199 = vadd.f32 %v3053, %v3159
  %v3200 = vadd.f32 %v3054, %v3160
  %v3201 = vadd.f32 %v3055, %v3153
  %v3202 = vadd.f32 %v3056, %v3154
  %v3203 = vadd.f32 %v3057, %v3155
  %v3204 = vadd.f32 %v3058, %v3156
  %v3205 = vadd.f32 %v3059, %v3157
  %v3206 = vadd.f32 %v3060, %v3158
  %v3207 = vadd.f32 %v3061, %v3159
  %v3208 = vadd.f32 %v3062, %v3160
  %v3209 = vadd.f32 %v3063, %v3153
  %v3210 = vadd.f32 %v3064, %v3154
  %v3211 = vadd.f32 %v3065, %v3155
  %v3212 = vadd.f32 %v3066, %v3156
  %v3213 = vadd.f32 %v3067, %v3157
  %v3214 = vadd.f32 %v3068, %v3158
  %v3215 = vadd.f32 %v3069, %v3159
  %v3216 = vadd.f32 %v3070, %v3160
  %v3217 = vadd.f32 %v3071, %v3153
  %v3218 = vadd.f32 %v3072, %v3154
  %v3219 = vadd.f32 %v3073, %v3155
  %v3220 = vadd.f32 %v3074, %v3156
  %v3221 = vadd.f32 %v3075, %v3157
  %v3222 = vadd.f32 %v3076, %v3158
  %v3223 = vadd.f32 %v3077, %v3159
  %v3224 = vadd.f32 %v3078, %v3160
  %v3225 = vadd.f32 %v3079, %v3153
  %v3226 = vadd.f32 %v3080, %v3154
  %v3227 = vadd.f32 %v3081, %v3155
  %v3228 = vadd.f32 %v3082, %v3156
  %v3229 = vadd.f32 %v3083, %v3157
  %v3230 = vadd.f32 %v3084, %v3158
  %v3231 = vadd.f32 %v3085, %v3159
  %v3232 = vadd.f32 %v3086, %v3160
  %v3233 = vadd.f32 %v3087, %v3153
  %v3234 = vadd.f32 %v3088, %v3154
  %v3235 = vadd.f32 %v3089, %v3155
  %v3236 = vadd.f32 %v3090, %v3156
  %v3237 = vadd.f32 %v3091, %v3157
  %v3238 = vadd.f32 %v3092, %v3158
  %v3239 = vadd.f32 %v3093, %v3159
  %v3240 = vadd.f32 %v3094, %v3160
  %v3241 = vadd.f32 %v3095, %v3153
  %v3242 = vadd.f32 %v3096, %v3154
  %v3243 = vadd.f32 %v3097, %v3155
  %v3244 = vadd.f32 %v3098, %v3156
  %v3245 = vadd.f32 %v3099, %v3157
  %v3246 = vadd.f32 %v3100, %v3158
  %v3247 = vadd.f32 %v3101, %v3159
  %v3248 = vadd.f32 %v3102, %v3160
  %v3249 = vadd.f32 %v3103, %v3153
  %v3250 = vadd.f32 %v3104, %v3154
  %v3251 = vadd.f32 %v3105, %v3155
  %v3252 = vadd.f32 %v3106, %v3156
  %v3253 = vadd.f32 %v3107, %v3157
  %v3254 = vadd.f32 %v3108, %v3158
  %v3255 = vadd.f32 %v3109, %v3159
  %v3256 = vadd.f32 %v3110, %v3160
  %v3257 = vadd.f32 %v3111, %v3153
  %v3258 = vadd.f32 %v3112, %v3154
  %v3259 = vadd.f32 %v3113, %v3155
  %v3260 = vadd.f32 %v3114, %v3156
  %v3261 = vadd.f32 %v3115, %v3157
  %v3262 = vadd.f32 %v3116, %v3158
  %v3263 = vadd.f32 %v3117, %v3159
  %v3264 = vadd.f32 %v3118, %v3160
  %v3265 = vadd.f32 %v3119, %v3153
  %v3266 = vadd.f32 %v3120, %v3154
  %v3267 = vadd.f32 %v3121, %v3155
  %v3268 = vadd.f32 %v3122, %v3156
  %v3269 = vadd.f32 %v3123, %v3157
  %v3270 = vadd.f32 %v3124, %v3158
  %v3271 = vadd.f32 %v3125, %v3159
  %v3272 = vadd.f32 %v3126, %v3160
  %v3273 = vadd.f32 %v3127, %v3153
  %v3274 = vadd.f32 %v3128, %v3154
  %v3275 = vadd.f32 %v3129, %v3155
  %v3276 = vadd.f32 %v3130, %v3156
  %v3277 = vadd.f32 %v3131, %v3157
  %v3278 = vadd.f32 %v3132, %v3158
  %v3279 = vadd.f32 %v3133, %v3159
  %v3280 = vadd.f32 %v3134, %v3160
  %v3281 = vadd.f32 %v3135, %v3153
  %v3282 = vadd.f32 %v3136, %v3154
  %v3283 = vadd.f32 %v3137, %v3155
  %v3284 = vadd.f32 %v3138, %v3156
  %v3285 = vadd.f32 %v3139, %v3157
  %v3286 = vadd.f32 %v3140, %v3158
  %v3287 = vadd.f32 %v3141, %v3159
  %v3288 = vadd.f32 %v3142, %v3160
  %v3289 = vadd.f32 %v3143, %v3153
  %v3290 = vadd.f32 %v3144, %v3154
  %v3291 = vadd.f32 %v3145, %v3155
  %v3292 = vadd.f32 %v3146, %v3156
  %v3293 = vadd.f32 %v3147, %v3157
  %v3294 = vadd.f32 %v3148, %v3158
  %v3295 = vadd.f32 %v3149, %v3159
  %v3296 = vadd.f32 %v3150, %v3160
  %v3297 = vmul.f32 %v3169, 0.01
  %v3298 = vmul.f32 %v3170, 0.01
  %v3299 = vmul.f32 %v3171, 0.01
  %v3300 = vmul.f32 %v3172, 0.01
  %v3301 = vmul.f32 %v3173, 0.01
  %v3302 = vmul.f32 %v3174, 0.01
  %v3303 = vmul.f32 %v3175, 0.01
  %v3304 = vmul.f32 %v3176, 0.01
  %v3305 = vmul.f32 %v3177, 0.01
  %v3306 = vmul.f32 %v3178, 0.01
  %v3307 = vmul.f32 %v3179, 0.01
  %v3308 = vmul.f32 %v3180, 0.01
  %v3309 = vmul.f32 %v3181, 0.01
  %v3310 = vmul.f32 %v3182, 0.01
  %v3311 = vmul.f32 %v3183, 0.01
  %v3312 = vmul.f32 %v3184, 0.01
  %v3313 = vmul.f32 %v3185, 0.01
  %v3314 = vmul.f32 %v3186, 0.01
  %v3315 = vmul.f32 %v3187, 0.01
  %v3316 = vmul.f32 %v3188, 0.01
  %v3317 = vmul.f32 %v3189, 0.01
  %v3318 = vmul.f32 %v3190, 0.01
  %v3319 = vmul.f32 %v3191, 0.01
  %v3320 = vmul.f32 %v3192, 0.01
  %v3321 = vmul.f32 %v3193, 0.01
  %v3322 = vmul.f32 %v3194, 0.01
  %v3323 = vmul.f32 %v3195, 0.01
  %v3324 = vmul.f32 %v3196, 0.01
  %v3325 = vmul.f32 %v3197, 0.01
  %v3326 = vmul.f32 %v3198, 0.01
  %v3327 = vmul.f32 %v3199, 0.01
  %v3328 = vmul.f32 %v3200, 0.01
  %v3329 = vmul.f32 %v3201, 0.01
  %v3330 = vmul.f32 %v3202, 0.01
  %v3331 = vmul.f32 %v3203, 0.01
  %v3332 = vmul.f32 %v3204, 0.01
  %v3333 = vmul.f32 %v3205, 0.01
  %v3334 = vmul.f32 %v3206, 0.01
  %v3335 = vmul.f32 %v3207, 0.01
  %v3336 = vmul.f32 %v3208, 0.01
  %v3337 = vmul.f32 %v3209, 0.01
  %v3338 = vmul.f32 %v3210, 0.01
  %v3339 = vmul.f32 %v3211, 0.01
  %v3340 = vmul.f32 %v3212, 0.01
  %v3341 = vmul.f32 %v3213, 0.01
  %v3342 = vmul.f32 %v3214, 0.01
  %v3343 = vmul.f32 %v3215, 0.01
  %v3344 = vmul.f32 %v3216, 0.01
  %v3345 = vmul.f32 %v3217, 0.01
  %v3346 = vmul.f32 %v3218, 0.01
  %v3347 = vmul.f32 %v3219, 0.01
  %v3348 = vmul.f32 %v3220, 0.01
  %v3349 = vmul.f32 %v3221, 0.01
  %v3350 = vmul.f32 %v3222, 0.01
  %v3351 = vmul.f32 %v3223, 0.01
  %v3352 = vmul.f32 %v3224, 0.01
  %v3353 = vmul.f32 %v3225, 0.01
  %v3354 = vmul.f32 %v3226, 0.01
  %v3355 = vmul.f32 %v3227, 0.01
  %v3356 = vmul.f32 %v3228, 0.01
  %v3357 = vmul.f32 %v3229, 0.01
  %v3358 = vmul.f32 %v3230, 0.01
  %v3359 = vmul.f32 %v3231, 0.01
  %v3360 = vmul.f32 %v3232, 0.01
  %v3361 = vmul.f32 %v3233, 0.01
  %v3362 = vmul.f32 %v3234, 0.01
  %v3363 = vmul.f32 %v3235, 0.01
  %v3364 = vmul.f32 %v3236, 0.01
  %v3365 = vmul.f32 %v3237, 0.01
  %v3366 = vmul.f32 %v3238, 0.01
  %v3367 = vmul.f32 %v3239, 0.01
  %v3368 = vmul.f32 %v3240, 0.01
  %v3369 = vmul.f32 %v3241, 0.01
  %v3370 = vmul.f32 %v3242, 0.01
  %v3371 = vmul.f32 %v3243, 0.01
  %v3372 = vmul.f32 %v3244, 0.01
  %v3373 = vmul.f32 %v3245, 0.01
  %v3374 = vmul.f32 %v3246, 0.01
  %v3375 = vmul.f32 %v3247, 0.01
  %v3376 = vmul.f32 %v3248, 0.01
  %v3377 = vmul.f32 %v3249, 0.01
  %v3378 = vmul.f32 %v3250, 0.01
  %v3379 = vmul.f32 %v3251, 0.01
  %v3380 = vmul.f32 %v3252, 0.01
  %v3381 = vmul.f32 %v3253, 0.01
  %v3382 = vmul.f32 %v3254, 0.01
  %v3383 = vmul.f32 %v3255, 0.01
  %v3384 = vmul.f32 %v3256, 0.01
  %v3385 = vmul.f32 %v3257, 0.01
  %v3386 = vmul.f32 %v3258, 0.01
  %v3387 = vmul.f32 %v3259, 0.01
  %v3388 = vmul.f32 %v3260, 0.01
  %v3389 = vmul.f32 %v3261, 0.01
  %v3390 = vmul.f32 %v3262, 0.01
  %v3391 = vmul.f32 %v3263, 0.01
  %v3392 = vmul.f32 %v3264, 0.01
  %v3393 = vmul.f32 %v3265, 0.01
  %v3394 = vmul.f32 %v3266, 0.01
  %v3395 = vmul.f32 %v3267, 0.01
  %v3396 = vmul.f32 %v3268, 0.01
  %v3397 = vmul.f32 %v3269, 0.01
  %v3398 = vmul.f32 %v3270, 0.01
  %v3399 = vmul.f32 %v3271, 0.01
  %v3400 = vmul.f32 %v3272, 0.01
  %v3401 = vmul.f32 %v3273, 0.01
  %v3402 = vmul.f32 %v3274, 0.01
  %v3403 = vmul.f32 %v3275, 0.01
  %v3404 = vmul.f32 %v3276, 0.01
  %v3405 = vmul.f32 %v3277, 0.01
  %v3406 = vmul.f32 %v3278, 0.01
  %v3407 = vmul.f32 %v3279, 0.01
  %v3408 = vmul.f32 %v3280, 0.01
  %v3409 = vmul.f32 %v3281, 0.01
  %v3410 = vmul.f32 %v3282, 0.01
  %v3411 = vmul.f32 %v3283, 0.01
  %v3412 = vmul.f32 %v3284, 0.01
  %v3413 = vmul.f32 %v3285, 0.01
  %v3414 = vmul.f32 %v3286, 0.01
  %v3415 = vmul.f32 %v3287, 0.01
  %v3416 = vmul.f32 %v3288, 0.01
  %v3417 = vmul.f32 %v3289, 0.01
  %v3418 = vmul.f32 %v3290, 0.01
  %v3419 = vmul.f32 %v3291, 0.01
  %v3420 = vmul.f32 %v3292, 0.01
  %v3421 = vmul.f32 %v3293, 0.01
  %v3422 = vmul.f32 %v3294, 0.01
  %v3423 = vmul.f32 %v3295, 0.01
  %v3424 = vmul.f32 %v3296, 0.01
  %v3425 = vmax.f32 %v3169, %v3297
  %v3426 = vmax.f32 %v3170, %v3298
  %v3427 = vmax.f32 %v3171, %v3299
  %v3428 = vmax.f32 %v3172, %v3300
  %v3429 = vmax.f32 %v3173, %v3301
  %v3430 = vmax.f32 %v3174, %v3302
  %v3431 = vmax.f32 %v3175, %v3303
  %v3432 = vmax.f32 %v3176, %v3304
  %v3433 = vmax.f32 %v3177, %v3305
  %v3434 = vmax.f32 %v3178, %v3306
  %v3435 = vmax.f32 %v3179, %v3307
  %v3436 = vmax.f32 %v3180, %v3308
  %v3437 = vmax.f32 %v3181, %v3309
  %v3438 = vmax.f32 %v3182, %v3310
  %v3439 = vmax.f32 %v3183, %v3311
  %v3440 = vmax.f32 %v3184, %v3312
  %v3441 = vmax.f32 %v3185, %v3313
  %v3442 = vmax.f32 %v3186, %v3314
  %v3443 = vmax.f32 %v3187, %v3315
  %v3444 = vmax.f32 %v3188, %v3316
  %v3445 = vmax.f32 %v3189, %v3317
  %v3446 = vmax.f32 %v3190, %v3318
  %v3447 = vmax.f32 %v3191, %v3319
  %v3448 = vmax.f32 %v3192, %v3320
  %v3449 = vmax.f32 %v3193, %v3321
  %v3450 = vmax.f32 %v3194, %v3322
  %v3451 = vmax.f32 %v3195, %v3323
  %v3452 = vmax.f32 %v3196, %v3324
  %v3453 = vmax.f32 %v3197, %v3325
  %v3454 = vmax.f32 %v3198, %v3326
  %v3455 = vmax.f32 %v3199, %v3327
  %v3456 = vmax.f32 %v3200, %v3328
  %v3457 = vmax.f32 %v3201, %v3329
  %v3458 = vmax.f32 %v3202, %v3330
  %v3459 = vmax.f32 %v3203, %v3331
  %v3460 = vmax.f32 %v3204, %v3332
  %v3461 = vmax.f32 %v3205, %v3333
  %v3462 = vmax.f32 %v3206, %v3334
  %v3463 = vmax.f32 %v3207, %v3335
  %v3464 = vmax.f32 %v3208, %v3336
  %v3465 = vmax.f32 %v3209, %v3337
  %v3466 = vmax.f32 %v3210, %v3338
  %v3467 = vmax.f32 %v3211, %v3339
  %v3468 = vmax.f32 %v3212, %v3340
  %v3469 = vmax.f32 %v3213, %v3341
  %v3470 = vmax.f32 %v3214, %v3342
  %v3471 = vmax.f32 %v3215, %v3343
  %v3472 = vmax.f32 %v3216, %v3344
  %v3473 = vmax.f32 %v3217, %v3345
  %v3474 = vmax.f32 %v3218, %v3346
  %v3475 = vmax.f32 %v3219, %v3347
  %v3476 = vmax.f32 %v3220, %v3348
  %v3477 = vmax.f32 %v3221, %v3349
  %v3478 = vmax.f32 %v3222, %v3350
  %v3479 = vmax.f32 %v3223, %v3351
  %v3480 = vmax.f32 %v3224, %v3352
  %v3481 = vmax.f32 %v3225, %v3353
  %v3482 = vmax.f32 %v3226, %v3354
  %v3483 = vmax.f32 %v3227, %v3355
  %v3484 = vmax.f32 %v3228, %v3356
  %v3485 = vmax.f32 %v3229, %v3357
  %v3486 = vmax.f32 %v3230, %v3358
  %v3487 = vmax.f32 %v3231, %v3359
  %v3488 = vmax.f32 %v3232, %v3360
  %v3489 = vmax.f32 %v3233, %v3361
  %v3490 = vmax.f32 %v3234, %v3362
  %v3491 = vmax.f32 %v3235, %v3363
  %v3492 = vmax.f32 %v3236, %v3364
  %v3493 = vmax.f32 %v3237, %v3365
  %v3494 = vmax.f32 %v3238, %v3366
  %v3495 = vmax.f32 %v3239, %v3367
  %v3496 = vmax.f32 %v3240, %v3368
  %v3497 = vmax.f32 %v3241, %v3369
  %v3498 = vmax.f32 %v3242, %v3370
  %v3499 = vmax.f32 %v3243, %v3371
  %v3500 = vmax.f32 %v3244, %v3372
  %v3501 = vmax.f32 %v3245, %v3373
  %v3502 = vmax.f32 %v3246, %v3374
  %v3503 = vmax.f32 %v3247, %v3375
  %v3504 = vmax.f32 %v3248, %v3376
  %v3505 = vmax.f32 %v3249, %v3377
  %v3506 = vmax.f32 %v3250, %v3378
  %v3507 = vmax.f32 %v3251, %v3379
  %v3508 = vmax.f32 %v3252, %v3380
  %v3509 = vmax.f32 %v3253, %v3381
  %v3510 = vmax.f32 %v3254, %v3382
  %v3511 = vmax.f32 %v3255, %v3383
  %v3512 = vmax.f32 %v3256, %v3384
  %v3513 = vmax.f32 %v3257, %v3385
  %v3514 = vmax.f32 %v3258, %v3386
  %v3515 = vmax.f32 %v3259, %v3387
  %v3516 = vmax.f32 %v3260, %v3388
  %v3517 = vmax.f32 %v3261, %v3389
  %v3518 = vmax.f32 %v3262, %v3390
  %v3519 = vmax.f32 %v3263, %v3391
  %v3520 = vmax.f32 %v3264, %v3392
  %v3521 = vmax.f32 %v3265, %v3393
  %v3522 = vmax.f32 %v3266, %v3394
  %v3523 = vmax.f32 %v3267, %v3395
  %v3524 = vmax.f32 %v3268, %v3396
  %v3525 = vmax.f32 %v3269, %v3397
  %v3526 = vmax.f32 %v3270, %v3398
  %v3527 = vmax.f32 %v3271, %v3399
  %v3528 = vmax.f32 %v3272, %v3400
  %v3529 = vmax.f32 %v3273, %v3401
  %v3530 = vmax.f32 %v3274, %v3402
  %v3531 = vmax.f32 %v3275, %v3403
  %v3532 = vmax.f32 %v3276, %v3404
  %v3533 = vmax.f32 %v3277, %v3405
  %v3534 = vmax.f32 %v3278, %v3406
  %v3535 = vmax.f32 %v3279, %v3407
  %v3536 = vmax.f32 %v3280, %v3408
  %v3537 = vmax.f32 %v3281, %v3409
  %v3538 = vmax.f32 %v3282, %v3410
  %v3539 = vmax.f32 %v3283, %v3411
  %v3540 = vmax.f32 %v3284, %v3412
  %v3541 = vmax.f32 %v3285, %v3413
  %v3542 = vmax.f32 %v3286, %v3414
  %v3543 = vmax.f32 %v3287, %v3415
  %v3544 = vmax.f32 %v3288, %v3416
  %v3545 = vmax.f32 %v3289, %v3417
  %v3546 = vmax.f32 %v3290, %v3418
  %v3547 = vmax.f32 %v3291, %v3419
  %v3548 = vmax.f32 %v3292, %v3420
  %v3549 = vmax.f32 %v3293, %v3421
  %v3550 = vmax.f32 %v3294, %v3422
  %v3551 = vmax.f32 %v3295, %v3423
  %v3552 = vmax.f32 %v3296, %v3424
  %v3553 = vpack.c.bf16 %v3433, %v3425
  %v3554 = vpack.c.bf16 %v3434, %v3426
  %v3555 = vpack.c.bf16 %v3435, %v3427
  %v3556 = vpack.c.bf16 %v3436, %v3428
  %v3557 = vpack.c.bf16 %v3437, %v3429
  %v3558 = vpack.c.bf16 %v3438, %v3430
  %v3559 = vpack.c.bf16 %v3439, %v3431
  %v3560 = vpack.c.bf16 %v3440, %v3432
  %v3561 = vpack.c.bf16 %v3449, %v3441
  %v3562 = vpack.c.bf16 %v3450, %v3442
  %v3563 = vpack.c.bf16 %v3451, %v3443
  %v3564 = vpack.c.bf16 %v3452, %v3444
  %v3565 = vpack.c.bf16 %v3453, %v3445
  %v3566 = vpack.c.bf16 %v3454, %v3446
  %v3567 = vpack.c.bf16 %v3455, %v3447
  %v3568 = vpack.c.bf16 %v3456, %v3448
  %v3569 = vpack.c.bf16 %v3465, %v3457
  %v3570 = vpack.c.bf16 %v3466, %v3458
  %v3571 = vpack.c.bf16 %v3467, %v3459
  %v3572 = vpack.c.bf16 %v3468, %v3460
  %v3573 = vpack.c.bf16 %v3469, %v3461
  %v3574 = vpack.c.bf16 %v3470, %v3462
  %v3575 = vpack.c.bf16 %v3471, %v3463
  %v3576 = vpack.c.bf16 %v3472, %v3464
  %v3577 = vpack.c.bf16 %v3481, %v3473
  %v3578 = vpack.c.bf16 %v3482, %v3474
  %v3579 = vpack.c.bf16 %v3483, %v3475
  %v3580 = vpack.c.bf16 %v3484, %v3476
  %v3581 = vpack.c.bf16 %v3485, %v3477
  %v3582 = vpack.c.bf16 %v3486, %v3478
  %v3583 = vpack.c.bf16 %v3487, %v3479
  %v3584 = vpack.c.bf16 %v3488, %v3480
  %v3585 = vpack.c.bf16 %v3497, %v3489
  %v3586 = vpack.c.bf16 %v3498, %v3490
  %v3587 = vpack.c.bf16 %v3499, %v3491
  %v3588 = vpack.c.bf16 %v3500, %v3492
  %v3589 = vpack.c.bf16 %v3501, %v3493
  %v3590 = vpack.c.bf16 %v3502, %v3494
  %v3591 = vpack.c.bf16 %v3503, %v3495
  %v3592 = vpack.c.bf16 %v3504, %v3496
  %v3593 = vpack.c.bf16 %v3513, %v3505
  %v3594 = vpack.c.bf16 %v3514, %v3506
  %v3595 = vpack.c.bf16 %v3515, %v3507
  %v3596 = vpack.c.bf16 %v3516, %v3508
  %v3597 = vpack.c.bf16 %v3517, %v3509
  %v3598 = vpack.c.bf16 %v3518, %v3510
  %v3599 = vpack.c.bf16 %v3519, %v3511
  %v3600 = vpack.c.bf16 %v3520, %v3512
  %v3601 = vpack.c.bf16 %v3529, %v3521
  %v3602 = vpack.c.bf16 %v3530, %v3522
  %v3603 = vpack.c.bf16 %v3531, %v3523
  %v3604 = vpack.c.bf16 %v3532, %v3524
  %v3605 = vpack.c.bf16 %v3533, %v3525
  %v3606 = vpack.c.bf16 %v3534, %v3526
  %v3607 = vpack.c.bf16 %v3535, %v3527
  %v3608 = vpack.c.bf16 %v3536, %v3528
  %v3609 = vpack.c.bf16 %v3545, %v3537
  %v3610 = vpack.c.bf16 %v3546, %v3538
  %v3611 = vpack.c.bf16 %v3547, %v3539
  %v3612 = vpack.c.bf16 %v3548, %v3540
  %v3613 = vpack.c.bf16 %v3549, %v3541
  %v3614 = vpack.c.bf16 %v3550, %v3542
  %v3615 = vpack.c.bf16 %v3551, %v3543
  %v3616 = vpack.c.bf16 %v3552, %v3544
  %v3617 = vld [vmem:[%s7] sm:$0xf]
  %v3618 = vld [vmem:[%s7 + $0x4] sm:$0xf]
  %v3619 = vld [vmem:[%s7 + $0x8] sm:$0xf]
  %v3620 = vld [vmem:[%s7 + $0xc] sm:$0xf]
  %v3621 = vld [vmem:[%s7 + $0x10] sm:$0xf]
  %v3622 = vld [vmem:[%s7 + $0x14] sm:$0xf]
  %v3623 = vld [vmem:[%s7 + $0x18] sm:$0xf]
  %v3624 = vld [vmem:[%s7 + $0x1c] sm:$0xf]
  %v3625 = vld [vmem:[%s7 + $0x20] sm:$0xf]
  %v3626 = vld [vmem:[%s7 + $0x24] sm:$0xf]
  %v3627 = vld [vmem:[%s7 + $0x28] sm:$0xf]
  %v3628 = vld [vmem:[%s7 + $0x2c] sm:$0xf]
  %v3629 = vld [vmem:[%s7 + $0x30] sm:$0xf]
  %v3630 = vld [vmem:[%s7 + $0x34] sm:$0xf]
  %v3631 = vld [vmem:[%s7 + $0x38] sm:$0xf]
  %v3632 = vld [vmem:[%s7 + $0x3c] sm:$0xf]
  %v3633 = vld [vmem:[%s7 + $0x40] sm:$0xf]
  %v3634 = vld [vmem:[%s7 + $0x44] sm:$0xf]
  %v3635 = vld [vmem:[%s7 + $0x48] sm:$0xf]
  %v3636 = vld [vmem:[%s7 + $0x4c] sm:$0xf]
  %v3637 = vld [vmem:[%s7 + $0x50] sm:$0xf]
  %v3638 = vld [vmem:[%s7 + $0x54] sm:$0xf]
  %v3639 = vld [vmem:[%s7 + $0x58] sm:$0xf]
  %v3640 = vld [vmem:[%s7 + $0x5c] sm:$0xf]
  %v3641 = vld [vmem:[%s7 + $0x60] sm:$0xf]
  %v3642 = vld [vmem:[%s7 + $0x64] sm:$0xf]
  %v3643 = vld [vmem:[%s7 + $0x68] sm:$0xf]
  %v3644 = vld [vmem:[%s7 + $0x6c] sm:$0xf]
  %v3645 = vld [vmem:[%s7 + $0x70] sm:$0xf]
  %v3646 = vld [vmem:[%s7 + $0x74] sm:$0xf]
  %v3647 = vld [vmem:[%s7 + $0x78] sm:$0xf]
  %v3648 = vld [vmem:[%s7 + $0x7c] sm:$0xf]
  %v3649 = vld [vmem:[%s7 + $0x80] sm:$0xf]
  %v3650 = vld [vmem:[%s7 + $0x84] sm:$0xf]
  %v3651 = vld [vmem:[%s7 + $0x88] sm:$0xf]
  %v3652 = vld [vmem:[%s7 + $0x8c] sm:$0xf]
  %v3653 = vld [vmem:[%s7 + $0x90] sm:$0xf]
  %v3654 = vld [vmem:[%s7 + $0x94] sm:$0xf]
  %v3655 = vld [vmem:[%s7 + $0x98] sm:$0xf]
  %v3656 = vld [vmem:[%s7 + $0x9c] sm:$0xf]
  %v3657 = vld [vmem:[%s7 + $0xa0] sm:$0xf]
  %v3658 = vld [vmem:[%s7 + $0xa4] sm:$0xf]
  %v3659 = vld [vmem:[%s7 + $0xa8] sm:$0xf]
  %v3660 = vld [vmem:[%s7 + $0xac] sm:$0xf]
  %v3661 = vld [vmem:[%s7 + $0xb0] sm:$0xf]
  %v3662 = vld [vmem:[%s7 + $0xb4] sm:$0xf]
  %v3663 = vld [vmem:[%s7 + $0xb8] sm:$0xf]
  %v3664 = vld [vmem:[%s7 + $0xbc] sm:$0xf]
  %v3665 = vld [vmem:[%s7 + $0xc0] sm:$0xf]
  %v3666 = vld [vmem:[%s7 + $0xc4] sm:$0xf]
  %v3667 = vld [vmem:[%s7 + $0xc8] sm:$0xf]
  %v3668 = vld [vmem:[%s7 + $0xcc] sm:$0xf]
  %v3669 = vld [vmem:[%s7 + $0xd0] sm:$0xf]
  %v3670 = vld [vmem:[%s7 + $0xd4] sm:$0xf]
  %v3671 = vld [vmem:[%s7 + $0xd8] sm:$0xf]
  %v3672 = vld [vmem:[%s7 + $0xdc] sm:$0xf]
  %v3673 = vld [vmem:[%s7 + $0xe0] sm:$0xf]
  %v3674 = vld [vmem:[%s7 + $0xe4] sm:$0xf]
  %v3675 = vld [vmem:[%s7 + $0xe8] sm:$0xf]
  %v3676 = vld [vmem:[%s7 + $0xec] sm:$0xf]
  %v3677 = vld [vmem:[%s7 + $0xf0] sm:$0xf]
  %v3678 = vld [vmem:[%s7 + $0xf4] sm:$0xf]
  %v3679 = vld [vmem:[%s7 + $0xf8] sm:$0xf]
  %v3680 = vld [vmem:[%s7 + $0xfc] sm:$0xf]
  %v3681 = vld [vmem:[%s7 + $0x100] sm:$0xf]
  %v3682 = vld [vmem:[%s7 + $0x104] sm:$0xf]
  %v3683 = vld [vmem:[%s7 + $0x108] sm:$0xf]
  %v3684 = vld [vmem:[%s7 + $0x10c] sm:$0xf]
  %v3685 = vld [vmem:[%s7 + $0x110] sm:$0xf]
  %v3686 = vld [vmem:[%s7 + $0x114] sm:$0xf]
  %v3687 = vld [vmem:[%s7 + $0x118] sm:$0xf]
  %v3688 = vld [vmem:[%s7 + $0x11c] sm:$0xf]
  %v3689 = vld [vmem:[%s7 + $0x120] sm:$0xf]
  %v3690 = vld [vmem:[%s7 + $0x124] sm:$0xf]
  %v3691 = vld [vmem:[%s7 + $0x128] sm:$0xf]
  %v3692 = vld [vmem:[%s7 + $0x12c] sm:$0xf]
  %v3693 = vld [vmem:[%s7 + $0x130] sm:$0xf]
  %v3694 = vld [vmem:[%s7 + $0x134] sm:$0xf]
  %v3695 = vld [vmem:[%s7 + $0x138] sm:$0xf]
  %v3696 = vld [vmem:[%s7 + $0x13c] sm:$0xf]
  %v3697 = vld [vmem:[%s7 + $0x140] sm:$0xf]
  %v3698 = vld [vmem:[%s7 + $0x144] sm:$0xf]
  %v3699 = vld [vmem:[%s7 + $0x148] sm:$0xf]
  %v3700 = vld [vmem:[%s7 + $0x14c] sm:$0xf]
  %v3701 = vld [vmem:[%s7 + $0x150] sm:$0xf]
  %v3702 = vld [vmem:[%s7 + $0x154] sm:$0xf]
  %v3703 = vld [vmem:[%s7 + $0x158] sm:$0xf]
  %v3704 = vld [vmem:[%s7 + $0x15c] sm:$0xf]
  %v3705 = vld [vmem:[%s7 + $0x160] sm:$0xf]
  %v3706 = vld [vmem:[%s7 + $0x164] sm:$0xf]
  %v3707 = vld [vmem:[%s7 + $0x168] sm:$0xf]
  %v3708 = vld [vmem:[%s7 + $0x16c] sm:$0xf]
  %v3709 = vld [vmem:[%s7 + $0x170] sm:$0xf]
  %v3710 = vld [vmem:[%s7 + $0x174] sm:$0xf]
  %v3711 = vld [vmem:[%s7 + $0x178] sm:$0xf]
  %v3712 = vld [vmem:[%s7 + $0x17c] sm:$0xf]
  %v3713 = vld [vmem:[%s7 + $0x180] sm:$0xf]
  %v3714 = vld [vmem:[%s7 + $0x184] sm:$0xf]
  %v3715 = vld [vmem:[%s7 + $0x188] sm:$0xf]
  %v3716 = vld [vmem:[%s7 + $0x18c] sm:$0xf]
  %v3717 = vld [vmem:[%s7 + $0x190] sm:$0xf]
  %v3718 = vld [vmem:[%s7 + $0x194] sm:$0xf]
  %v3719 = vld [vmem:[%s7 + $0x198] sm:$0xf]
  %v3720 = vld [vmem:[%s7 + $0x19c] sm:$0xf]
  %v3721 = vld [vmem:[%s7 + $0x1a0] sm:$0xf]
  %v3722 = vld [vmem:[%s7 + $0x1a4] sm:$0xf]
  %v3723 = vld [vmem:[%s7 + $0x1a8] sm:$0xf]
  %v3724 = vld [vmem:[%s7 + $0x1ac] sm:$0xf]
  %v3725 = vld [vmem:[%s7 + $0x1b0] sm:$0xf]
  %v3726 = vld [vmem:[%s7 + $0x1b4] sm:$0xf]
  %v3727 = vld [vmem:[%s7 + $0x1b8] sm:$0xf]
  %v3728 = vld [vmem:[%s7 + $0x1bc] sm:$0xf]
  %v3729 = vld [vmem:[%s7 + $0x1c0] sm:$0xf]
  %v3730 = vld [vmem:[%s7 + $0x1c4] sm:$0xf]
  %v3731 = vld [vmem:[%s7 + $0x1c8] sm:$0xf]
  %v3732 = vld [vmem:[%s7 + $0x1cc] sm:$0xf]
  %v3733 = vld [vmem:[%s7 + $0x1d0] sm:$0xf]
  %v3734 = vld [vmem:[%s7 + $0x1d4] sm:$0xf]
  %v3735 = vld [vmem:[%s7 + $0x1d8] sm:$0xf]
  %v3736 = vld [vmem:[%s7 + $0x1dc] sm:$0xf]
  %v3737 = vld [vmem:[%s7 + $0x1e0] sm:$0xf]
  %v3738 = vld [vmem:[%s7 + $0x1e4] sm:$0xf]
  %v3739 = vld [vmem:[%s7 + $0x1e8] sm:$0xf]
  %v3740 = vld [vmem:[%s7 + $0x1ec] sm:$0xf]
  %v3741 = vld [vmem:[%s7 + $0x1f0] sm:$0xf]
  %v3742 = vld [vmem:[%s7 + $0x1f4] sm:$0xf]
  %v3743 = vld [vmem:[%s7 + $0x1f8] sm:$0xf]
  %v3744 = vld [vmem:[%s7 + $0x1fc] sm:$0xf]
  %v3745 = vld [vmem:[%s8] sm:$0x1]
  %v3747 = vperm.slane %v3745, 0
  %v3877 = vunpack.c.l.b16 %v3617
  %v3878 = vunpack.c.l.b16 %v3618
  %v3879 = vunpack.c.l.b16 %v3619
  %v3880 = vunpack.c.l.b16 %v3620
  %v3881 = vunpack.c.l.b16 %v3621
  %v3882 = vunpack.c.l.b16 %v3622
  %v3883 = vunpack.c.l.b16 %v3623
  %v3884 = vunpack.c.l.b16 %v3624
  %v3885 = vunpack.c.l.b16 %v3625
  %v3886 = vunpack.c.l.b16 %v3626
  %v3887 = vunpack.c.l.b16 %v3627
  %v3888 = vunpack.c.l.b16 %v3628
  %v3889 = vunpack.c.l.b16 %v3629
  %v3890 = vunpack.c.l.b16 %v3630
  %v3891 = vunpack.c.l.b16 %v3631
  %v3892 = vunpack.c.l.b16 %v3632
  %v3893 = vunpack.c.l.b16 %v3633
  %v3894 = vunpack.c.l.b16 %v3634
  %v3895 = vunpack.c.l.b16 %v3635
  %v3896 = vunpack.c.l.b16 %v3636
  %v3897 = vunpack.c.l.b16 %v3637
  %v3898 = vunpack.c.l.b16 %v3638
  %v3899 = vunpack.c.l.b16 %v3639
  %v3900 = vunpack.c.l.b16 %v3640
  %v3901 = vunpack.c.l.b16 %v3641
  %v3902 = vunpack.c.l.b16 %v3642
  %v3903 = vunpack.c.l.b16 %v3643
  %v3904 = vunpack.c.l.b16 %v3644
  %v3905 = vunpack.c.l.b16 %v3645
  %v3906 = vunpack.c.l.b16 %v3646
  %v3907 = vunpack.c.l.b16 %v3647
  %v3908 = vunpack.c.l.b16 %v3648
  %v3909 = vunpack.c.l.b16 %v3649
  %v3910 = vunpack.c.l.b16 %v3650
  %v3911 = vunpack.c.l.b16 %v3651
  %v3912 = vunpack.c.l.b16 %v3652
  %v3913 = vunpack.c.l.b16 %v3653
  %v3914 = vunpack.c.l.b16 %v3654
  %v3915 = vunpack.c.l.b16 %v3655
  %v3916 = vunpack.c.l.b16 %v3656
  %v3917 = vunpack.c.l.b16 %v3657
  %v3918 = vunpack.c.l.b16 %v3658
  %v3919 = vunpack.c.l.b16 %v3659
  %v3920 = vunpack.c.l.b16 %v3660
  %v3921 = vunpack.c.l.b16 %v3661
  %v3922 = vunpack.c.l.b16 %v3662
  %v3923 = vunpack.c.l.b16 %v3663
  %v3924 = vunpack.c.l.b16 %v3664
  %v3925 = vunpack.c.l.b16 %v3665
  %v3926 = vunpack.c.l.b16 %v3666
  %v3927 = vunpack.c.l.b16 %v3667
  %v3928 = vunpack.c.l.b16 %v3668
  %v3929 = vunpack.c.l.b16 %v3669
  %v3930 = vunpack.c.l.b16 %v3670
  %v3931 = vunpack.c.l.b16 %v3671
  %v3932 = vunpack.c.l.b16 %v3672
  %v3933 = vunpack.c.l.b16 %v3673
  %v3934 = vunpack.c.l.b16 %v3674
  %v3935 = vunpack.c.l.b16 %v3675
  %v3936 = vunpack.c.l.b16 %v3676
  %v3937 = vunpack.c.l.b16 %v3677
  %v3938 = vunpack.c.l.b16 %v3678
  %v3939 = vunpack.c.l.b16 %v3679
  %v3940 = vunpack.c.l.b16 %v3680
  %v3941 = vunpack.c.l.b16 %v3681
  %v3942 = vunpack.c.l.b16 %v3682
  %v3943 = vunpack.c.l.b16 %v3683
  %v3944 = vunpack.c.l.b16 %v3684
  %v3945 = vunpack.c.l.b16 %v3685
  %v3946 = vunpack.c.l.b16 %v3686
  %v3947 = vunpack.c.l.b16 %v3687
  %v3948 = vunpack.c.l.b16 %v3688
  %v3949 = vunpack.c.l.b16 %v3689
  %v3950 = vunpack.c.l.b16 %v3690
  %v3951 = vunpack.c.l.b16 %v3691
  %v3952 = vunpack.c.l.b16 %v3692
  %v3953 = vunpack.c.l.b16 %v3693
  %v3954 = vunpack.c.l.b16 %v3694
  %v3955 = vunpack.c.l.b16 %v3695
  %v3956 = vunpack.c.l.b16 %v3696
  %v3957 = vunpack.c.l.b16 %v3697
  %v3958 = vunpack.c.l.b16 %v3698
  %v3959 = vunpack.c.l.b16 %v3699
  %v3960 = vunpack.c.l.b16 %v3700
  %v3961 = vunpack.c.l.b16 %v3701
  %v3962 = vunpack.c.l.b16 %v3702
  %v3963 = vunpack.c.l.b16 %v3703
  %v3964 = vunpack.c.l.b16 %v3704
  %v3965 = vunpack.c.l.b16 %v3705
  %v3966 = vunpack.c.l.b16 %v3706
  %v3967 = vunpack.c.l.b16 %v3707
  %v3968 = vunpack.c.l.b16 %v3708
  %v3969 = vunpack.c.l.b16 %v3709
  %v3970 = vunpack.c.l.b16 %v3710
  %v3971 = vunpack.c.l.b16 %v3711
  %v3972 = vunpack.c.l.b16 %v3712
  %v3973 = vunpack.c.l.b16 %v3713
  %v3974 = vunpack.c.l.b16 %v3714
  %v3975 = vunpack.c.l.b16 %v3715
  %v3976 = vunpack.c.l.b16 %v3716
  %v3977 = vunpack.c.l.b16 %v3717
  %v3978 = vunpack.c.l.b16 %v3718
  %v3979 = vunpack.c.l.b16 %v3719
  %v3980 = vunpack.c.l.b16 %v3720
  %v3981 = vunpack.c.l.b16 %v3721
  %v3982 = vunpack.c.l.b16 %v3722
  %v3983 = vunpack.c.l.b16 %v3723
  %v3984 = vunpack.c.l.b16 %v3724
  %v3985 = vunpack.c.l.b16 %v3725
  %v3986 = vunpack.c.l.b16 %v3726
  %v3987 = vunpack.c.l.b16 %v3727
  %v3988 = vunpack.c.l.b16 %v3728
  %v3989 = vunpack.c.l.b16 %v3729
  %v3990 = vunpack.c.l.b16 %v3730
  %v3991 = vunpack.c.l.b16 %v3731
  %v3992 = vunpack.c.l.b16 %v3732
  %v3993 = vunpack.c.l.b16 %v3733
  %v3994 = vunpack.c.l.b16 %v3734
  %v3995 = vunpack.c.l.b16 %v3735
  %v3996 = vunpack.c.l.b16 %v3736
  %v3997 = vunpack.c.l.b16 %v3737
  %v3998 = vunpack.c.l.b16 %v3738
  %v3999 = vunpack.c.l.b16 %v3739
  %v4000 = vunpack.c.l.b16 %v3740
  %v4001 = vunpack.c.l.b16 %v3741
  %v4002 = vunpack.c.l.b16 %v3742
  %v4003 = vunpack.c.l.b16 %v3743
  %v4004 = vunpack.c.l.b16 %v3744
  %v4005 = vpack.c.b16 %v3878, %v3877
  %v4006 = vpack.c.b16 %v3880, %v3879
  %v4007 = vpack.c.b16 %v3882, %v3881
  %v4008 = vpack.c.b16 %v3884, %v3883
  %v4009 = vpack.c.b16 %v3886, %v3885
  %v4010 = vpack.c.b16 %v3888, %v3887
  %v4011 = vpack.c.b16 %v3890, %v3889
  %v4012 = vpack.c.b16 %v3892, %v3891
  %v4013 = vpack.c.b16 %v3894, %v3893
  %v4014 = vpack.c.b16 %v3896, %v3895
  %v4015 = vpack.c.b16 %v3898, %v3897
  %v4016 = vpack.c.b16 %v3900, %v3899
  %v4017 = vpack.c.b16 %v3902, %v3901
  %v4018 = vpack.c.b16 %v3904, %v3903
  %v4019 = vpack.c.b16 %v3906, %v3905
  %v4020 = vpack.c.b16 %v3908, %v3907
  %v4021 = vpack.c.b16 %v3910, %v3909
  %v4022 = vpack.c.b16 %v3912, %v3911
  %v4023 = vpack.c.b16 %v3914, %v3913
  %v4024 = vpack.c.b16 %v3916, %v3915
  %v4025 = vpack.c.b16 %v3918, %v3917
  %v4026 = vpack.c.b16 %v3920, %v3919
  %v4027 = vpack.c.b16 %v3922, %v3921
  %v4028 = vpack.c.b16 %v3924, %v3923
  %v4029 = vpack.c.b16 %v3926, %v3925
  %v4030 = vpack.c.b16 %v3928, %v3927
  %v4031 = vpack.c.b16 %v3930, %v3929
  %v4032 = vpack.c.b16 %v3932, %v3931
  %v4033 = vpack.c.b16 %v3934, %v3933
  %v4034 = vpack.c.b16 %v3936, %v3935
  %v4035 = vpack.c.b16 %v3938, %v3937
  %v4036 = vpack.c.b16 %v3940, %v3939
  %v4037 = vpack.c.b16 %v3942, %v3941
  %v4038 = vpack.c.b16 %v3944, %v3943
  %v4039 = vpack.c.b16 %v3946, %v3945
  %v4040 = vpack.c.b16 %v3948, %v3947
  %v4041 = vpack.c.b16 %v3950, %v3949
  %v4042 = vpack.c.b16 %v3952, %v3951
  %v4043 = vpack.c.b16 %v3954, %v3953
  %v4044 = vpack.c.b16 %v3956, %v3955
  %v4045 = vpack.c.b16 %v3958, %v3957
  %v4046 = vpack.c.b16 %v3960, %v3959
  %v4047 = vpack.c.b16 %v3962, %v3961
  %v4048 = vpack.c.b16 %v3964, %v3963
  %v4049 = vpack.c.b16 %v3966, %v3965
  %v4050 = vpack.c.b16 %v3968, %v3967
  %v4051 = vpack.c.b16 %v3970, %v3969
  %v4052 = vpack.c.b16 %v3972, %v3971
  %v4053 = vpack.c.b16 %v3974, %v3973
  %v4054 = vpack.c.b16 %v3976, %v3975
  %v4055 = vpack.c.b16 %v3978, %v3977
  %v4056 = vpack.c.b16 %v3980, %v3979
  %v4057 = vpack.c.b16 %v3982, %v3981
  %v4058 = vpack.c.b16 %v3984, %v3983
  %v4059 = vpack.c.b16 %v3986, %v3985
  %v4060 = vpack.c.b16 %v3988, %v3987
  %v4061 = vpack.c.b16 %v3990, %v3989
  %v4062 = vpack.c.b16 %v3992, %v3991
  %v4063 = vpack.c.b16 %v3994, %v3993
  %v4064 = vpack.c.b16 %v3996, %v3995
  %v4065 = vpack.c.b16 %v3998, %v3997
  %v4066 = vpack.c.b16 %v4000, %v3999
  %v4067 = vpack.c.b16 %v4002, %v4001
  %v4068 = vpack.c.b16 %v4004, %v4003
  %4133 = vmatpush.bf16.msra.mxu0 %v4012
  %4134 = vmatpush.bf16.msra.mxu0 %v4011
  %4135 = vmatpush.bf16.msra.mxu0 %v4010
  %4136 = vmatpush.bf16.msra.mxu0 %v4009
  %4137 = vmatpush.bf16.msra.mxu0 %v4008
  %4138 = vmatpush.bf16.msra.mxu0 %v4007
  %4139 = vmatpush.bf16.msra.mxu0 %v4006
  %4140 = vmatpush.bf16.msra.mxu0 %v4005
  %4141 = vmatmul.bf16.gmra.mxu0 %v3553
  %v4142 = vpop.f32.mrf.mxu0
  %v4143 = vadd.f32 %v3747, %v4142
  %v4144 = vpop.f32.mrf.mxu0
  %v4145 = vadd.f32 %v3747, %v4144
  %4146 = vmatmul.bf16.gmra.mxu0 %v3561
  %v4147 = vpop.f32.mrf.mxu0
  %v4148 = vadd.f32 %v3747, %v4147
  %v4149 = vpop.f32.mrf.mxu0
  %v4150 = vadd.f32 %v3747, %v4149
  %4151 = vmatmul.bf16.gmra.mxu0 %v3569
  %v4152 = vpop.f32.mrf.mxu0
  %v4153 = vadd.f32 %v3747, %v4152
  %v4154 = vpop.f32.mrf.mxu0
  %v4155 = vadd.f32 %v3747, %v4154
  %4156 = vmatmul.bf16.gmra.mxu0 %v3577
  %v4157 = vpop.f32.mrf.mxu0
  %v4158 = vadd.f32 %v3747, %v4157
  %v4159 = vpop.f32.mrf.mxu0
  %v4160 = vadd.f32 %v3747, %v4159
  %4161 = vmatmul.bf16.gmra.mxu0 %v3585
  %v4162 = vpop.f32.mrf.mxu0
  %v4163 = vadd.f32 %v3747, %v4162
  %v4164 = vpop.f32.mrf.mxu0
  %v4165 = vadd.f32 %v3747, %v4164
  %4166 = vmatmul.bf16.gmra.mxu0 %v3593
  %v4167 = vpop.f32.mrf.mxu0
  %v4168 = vadd.f32 %v3747, %v4167
  %v4169 = vpop.f32.mrf.mxu0
  %v4170 = vadd.f32 %v3747, %v4169
  %4171 = vmatmul.bf16.gmra.mxu0 %v3601
  %v4172 = vpop.f32.mrf.mxu0
  %v4173 = vadd.f32 %v3747, %v4172
  %v4174 = vpop.f32.mrf.mxu0
  %v4175 = vadd.f32 %v3747, %v4174
  %4176 = vmatmul.bf16.gmra.mxu0 %v3609
  %v4177 = vpop.f32.mrf.mxu0
  %v4178 = vadd.f32 %v3747, %v4177
  %v4179 = vpop.f32.mrf.mxu0
  %v4180 = vadd.f32 %v3747, %v4179
  %4181 = vdwg.mxu0
  %4182 = vmatpush.bf16.msra.mxu0 %v4020
  %4183 = vmatpush.bf16.msra.mxu0 %v4019
  %4184 = vmatpush.bf16.msra.mxu0 %v4018
  %4185 = vmatpush.bf16.msra.mxu0 %v4017
  %4186 = vmatpush.bf16.msra.mxu0 %v4016
  %4187 = vmatpush.bf16.msra.mxu0 %v4015
  %4188 = vmatpush.bf16.msra.mxu0 %v4014
  %4189 = vmatpush.bf16.msra.mxu0 %v4013
  %4190 = vmatmul.bf16.gmra.mxu0 %v3554
  %v4191 = vpop.f32.mrf.mxu0
  %v4192 = vadd.f32 %v4143, %v4191
  %v4193 = vpop.f32.mrf.mxu0
  %v4194 = vadd.f32 %v4145, %v4193
  %4195 = vmatmul.bf16.gmra.mxu0 %v3562
  %v4196 = vpop.f32.mrf.mxu0
  %v4197 = vadd.f32 %v4148, %v4196
  %v4198 = vpop.f32.mrf.mxu0
  %v4199 = vadd.f32 %v4150, %v4198
  %4200 = vmatmul.bf16.gmra.mxu0 %v3570
  %v4201 = vpop.f32.mrf.mxu0
  %v4202 = vadd.f32 %v4153, %v4201
  %v4203 = vpop.f32.mrf.mxu0
  %v4204 = vadd.f32 %v4155, %v4203
  %4205 = vmatmul.bf16.gmra.mxu0 %v3578
  %v4206 = vpop.f32.mrf.mxu0
  %v4207 = vadd.f32 %v4158, %v4206
  %v4208 = vpop.f32.mrf.mxu0
  %v4209 = vadd.f32 %v4160, %v4208
  %4210 = vmatmul.bf16.gmra.mxu0 %v3586
  %v4211 = vpop.f32.mrf.mxu0
  %v4212 = vadd.f32 %v4163, %v4211
  %v4213 = vpop.f32.mrf.mxu0
  %v4214 = vadd.f32 %v4165, %v4213
  %4215 = vmatmul.bf16.gmra.mxu0 %v3594
  %v4216 = vpop.f32.mrf.mxu0
  %v4217 = vadd.f32 %v4168, %v4216
  %v4218 = vpop.f32.mrf.mxu0
  %v4219 = vadd.f32 %v4170, %v4218
  %4220 = vmatmul.bf16.gmra.mxu0 %v3602
  %v4221 = vpop.f32.mrf.mxu0
  %v4222 = vadd.f32 %v4173, %v4221
  %v4223 = vpop.f32.mrf.mxu0
  %v4224 = vadd.f32 %v4175, %v4223
  %4225 = vmatmul.bf16.gmra.mxu0 %v3610
  %v4226 = vpop.f32.mrf.mxu0
  %v4227 = vadd.f32 %v4178, %v4226
  %v4228 = vpop.f32.mrf.mxu0
  %v4229 = vadd.f32 %v4180, %v4228
  %4230 = vdwg.mxu0
  %4231 = vmatpush.bf16.msra.mxu0 %v4028
  %4232 = vmatpush.bf16.msra.mxu0 %v4027
  %4233 = vmatpush.bf16.msra.mxu0 %v4026
  %4234 = vmatpush.bf16.msra.mxu0 %v4025
  %4235 = vmatpush.bf16.msra.mxu0 %v4024
  %4236 = vmatpush.bf16.msra.mxu0 %v4023
  %4237 = vmatpush.bf16.msra.mxu0 %v4022
  %4238 = vmatpush.bf16.msra.mxu0 %v4021
  %4239 = vmatmul.bf16.gmra.mxu0 %v3555
  %v4240 = vpop.f32.mrf.mxu0
  %v4241 = vadd.f32 %v4192, %v4240
  %v4242 = vpop.f32.mrf.mxu0
  %v4243 = vadd.f32 %v4194, %v4242
  %4244 = vmatmul.bf16.gmra.mxu0 %v3563
  %v4245 = vpop.f32.mrf.mxu0
  %v4246 = vadd.f32 %v4197, %v4245
  %v4247 = vpop.f32.mrf.mxu0
  %v4248 = vadd.f32 %v4199, %v4247
  %4249 = vmatmul.bf16.gmra.mxu0 %v3571
  %v4250 = vpop.f32.mrf.mxu0
  %v4251 = vadd.f32 %v4202, %v4250
  %v4252 = vpop.f32.mrf.mxu0
  %v4253 = vadd.f32 %v4204, %v4252
  %4254 = vmatmul.bf16.gmra.mxu0 %v3579
  %v4255 = vpop.f32.mrf.mxu0
  %v4256 = vadd.f32 %v4207, %v4255
  %v4257 = vpop.f32.mrf.mxu0
  %v4258 = vadd.f32 %v4209, %v4257
  %4259 = vmatmul.bf16.gmra.mxu0 %v3587
  %v4260 = vpop.f32.mrf.mxu0
  %v4261 = vadd.f32 %v4212, %v4260
  %v4262 = vpop.f32.mrf.mxu0
  %v4263 = vadd.f32 %v4214, %v4262
  %4264 = vmatmul.bf16.gmra.mxu0 %v3595
  %v4265 = vpop.f32.mrf.mxu0
  %v4266 = vadd.f32 %v4217, %v4265
  %v4267 = vpop.f32.mrf.mxu0
  %v4268 = vadd.f32 %v4219, %v4267
  %4269 = vmatmul.bf16.gmra.mxu0 %v3603
  %v4270 = vpop.f32.mrf.mxu0
  %v4271 = vadd.f32 %v4222, %v4270
  %v4272 = vpop.f32.mrf.mxu0
  %v4273 = vadd.f32 %v4224, %v4272
  %4274 = vmatmul.bf16.gmra.mxu0 %v3611
  %v4275 = vpop.f32.mrf.mxu0
  %v4276 = vadd.f32 %v4227, %v4275
  %v4277 = vpop.f32.mrf.mxu0
  %v4278 = vadd.f32 %v4229, %v4277
  %4279 = vdwg.mxu0
  %4280 = vmatpush.bf16.msra.mxu0 %v4036
  %4281 = vmatpush.bf16.msra.mxu0 %v4035
  %4282 = vmatpush.bf16.msra.mxu0 %v4034
  %4283 = vmatpush.bf16.msra.mxu0 %v4033
  %4284 = vmatpush.bf16.msra.mxu0 %v4032
  %4285 = vmatpush.bf16.msra.mxu0 %v4031
  %4286 = vmatpush.bf16.msra.mxu0 %v4030
  %4287 = vmatpush.bf16.msra.mxu0 %v4029
  %4288 = vmatmul.bf16.gmra.mxu0 %v3556
  %v4289 = vpop.f32.mrf.mxu0
  %v4290 = vadd.f32 %v4241, %v4289
  %v4291 = vpop.f32.mrf.mxu0
  %v4292 = vadd.f32 %v4243, %v4291
  %4293 = vmatmul.bf16.gmra.mxu0 %v3564
  %v4294 = vpop.f32.mrf.mxu0
  %v4295 = vadd.f32 %v4246, %v4294
  %v4296 = vpop.f32.mrf.mxu0
  %v4297 = vadd.f32 %v4248, %v4296
  %4298 = vmatmul.bf16.gmra.mxu0 %v3572
  %v4299 = vpop.f32.mrf.mxu0
  %v4300 = vadd.f32 %v4251, %v4299
  %v4301 = vpop.f32.mrf.mxu0
  %v4302 = vadd.f32 %v4253, %v4301
  %4303 = vmatmul.bf16.gmra.mxu0 %v3580
  %v4304 = vpop.f32.mrf.mxu0
  %v4305 = vadd.f32 %v4256, %v4304
  %v4306 = vpop.f32.mrf.mxu0
  %v4307 = vadd.f32 %v4258, %v4306
  %4308 = vmatmul.bf16.gmra.mxu0 %v3588
  %v4309 = vpop.f32.mrf.mxu0
  %v4310 = vadd.f32 %v4261, %v4309
  %v4311 = vpop.f32.mrf.mxu0
  %v4312 = vadd.f32 %v4263, %v4311
  %4313 = vmatmul.bf16.gmra.mxu0 %v3596
  %v4314 = vpop.f32.mrf.mxu0
  %v4315 = vadd.f32 %v4266, %v4314
  %v4316 = vpop.f32.mrf.mxu0
  %v4317 = vadd.f32 %v4268, %v4316
  %4318 = vmatmul.bf16.gmra.mxu0 %v3604
  %v4319 = vpop.f32.mrf.mxu0
  %v4320 = vadd.f32 %v4271, %v4319
  %v4321 = vpop.f32.mrf.mxu0
  %v4322 = vadd.f32 %v4273, %v4321
  %4323 = vmatmul.bf16.gmra.mxu0 %v3612
  %v4324 = vpop.f32.mrf.mxu0
  %v4325 = vadd.f32 %v4276, %v4324
  %v4326 = vpop.f32.mrf.mxu0
  %v4327 = vadd.f32 %v4278, %v4326
  %4328 = vdwg.mxu0
  %4329 = vmatpush.bf16.msra.mxu0 %v4044
  %4330 = vmatpush.bf16.msra.mxu0 %v4043
  %4331 = vmatpush.bf16.msra.mxu0 %v4042
  %4332 = vmatpush.bf16.msra.mxu0 %v4041
  %4333 = vmatpush.bf16.msra.mxu0 %v4040
  %4334 = vmatpush.bf16.msra.mxu0 %v4039
  %4335 = vmatpush.bf16.msra.mxu0 %v4038
  %4336 = vmatpush.bf16.msra.mxu0 %v4037
  %4337 = vmatmul.bf16.gmra.mxu0 %v3557
  %v4338 = vpop.f32.mrf.mxu0
  %v4339 = vadd.f32 %v4290, %v4338
  %v4340 = vpop.f32.mrf.mxu0
  %v4341 = vadd.f32 %v4292, %v4340
  %4342 = vmatmul.bf16.gmra.mxu0 %v3565
  %v4343 = vpop.f32.mrf.mxu0
  %v4344 = vadd.f32 %v4295, %v4343
  %v4345 = vpop.f32.mrf.mxu0
  %v4346 = vadd.f32 %v4297, %v4345
  %4347 = vmatmul.bf16.gmra.mxu0 %v3573
  %v4348 = vpop.f32.mrf.mxu0
  %v4349 = vadd.f32 %v4300, %v4348
  %v4350 = vpop.f32.mrf.mxu0
  %v4351 = vadd.f32 %v4302, %v4350
  %4352 = vmatmul.bf16.gmra.mxu0 %v3581
  %v4353 = vpop.f32.mrf.mxu0
  %v4354 = vadd.f32 %v4305, %v4353
  %v4355 = vpop.f32.mrf.mxu0
  %v4356 = vadd.f32 %v4307, %v4355
  %4357 = vmatmul.bf16.gmra.mxu0 %v3589
  %v4358 = vpop.f32.mrf.mxu0
  %v4359 = vadd.f32 %v4310, %v4358
  %v4360 = vpop.f32.mrf.mxu0
  %v4361 = vadd.f32 %v4312, %v4360
  %4362 = vmatmul.bf16.gmra.mxu0 %v3597
  %v4363 = vpop.f32.mrf.mxu0
  %v4364 = vadd.f32 %v4315, %v4363
  %v4365 = vpop.f32.mrf.mxu0
  %v4366 = vadd.f32 %v4317, %v4365
  %4367 = vmatmul.bf16.gmra.mxu0 %v3605
  %v4368 = vpop.f32.mrf.mxu0
  %v4369 = vadd.f32 %v4320, %v4368
  %v4370 = vpop.f32.mrf.mxu0
  %v4371 = vadd.f32 %v4322, %v4370
  %4372 = vmatmul.bf16.gmra.mxu0 %v3613
  %v4373 = vpop.f32.mrf.mxu0
  %v4374 = vadd.f32 %v4325, %v4373
  %v4375 = vpop.f32.mrf.mxu0
  %v4376 = vadd.f32 %v4327, %v4375
  %4377 = vdwg.mxu0
  %4378 = vmatpush.bf16.msra.mxu0 %v4052
  %4379 = vmatpush.bf16.msra.mxu0 %v4051
  %4380 = vmatpush.bf16.msra.mxu0 %v4050
  %4381 = vmatpush.bf16.msra.mxu0 %v4049
  %4382 = vmatpush.bf16.msra.mxu0 %v4048
  %4383 = vmatpush.bf16.msra.mxu0 %v4047
  %4384 = vmatpush.bf16.msra.mxu0 %v4046
  %4385 = vmatpush.bf16.msra.mxu0 %v4045
  %4386 = vmatmul.bf16.gmra.mxu0 %v3558
  %v4387 = vpop.f32.mrf.mxu0
  %v4388 = vadd.f32 %v4339, %v4387
  %v4389 = vpop.f32.mrf.mxu0
  %v4390 = vadd.f32 %v4341, %v4389
  %4391 = vmatmul.bf16.gmra.mxu0 %v3566
  %v4392 = vpop.f32.mrf.mxu0
  %v4393 = vadd.f32 %v4344, %v4392
  %v4394 = vpop.f32.mrf.mxu0
  %v4395 = vadd.f32 %v4346, %v4394
  %4396 = vmatmul.bf16.gmra.mxu0 %v3574
  %v4397 = vpop.f32.mrf.mxu0
  %v4398 = vadd.f32 %v4349, %v4397
  %v4399 = vpop.f32.mrf.mxu0
  %v4400 = vadd.f32 %v4351, %v4399
  %4401 = vmatmul.bf16.gmra.mxu0 %v3582
  %v4402 = vpop.f32.mrf.mxu0
  %v4403 = vadd.f32 %v4354, %v4402
  %v4404 = vpop.f32.mrf.mxu0
  %v4405 = vadd.f32 %v4356, %v4404
  %4406 = vmatmul.bf16.gmra.mxu0 %v3590
  %v4407 = vpop.f32.mrf.mxu0
  %v4408 = vadd.f32 %v4359, %v4407
  %v4409 = vpop.f32.mrf.mxu0
  %v4410 = vadd.f32 %v4361, %v4409
  %4411 = vmatmul.bf16.gmra.mxu0 %v3598
  %v4412 = vpop.f32.mrf.mxu0
  %v4413 = vadd.f32 %v4364, %v4412
  %v4414 = vpop.f32.mrf.mxu0
  %v4415 = vadd.f32 %v4366, %v4414
  %4416 = vmatmul.bf16.gmra.mxu0 %v3606
  %v4417 = vpop.f32.mrf.mxu0
  %v4418 = vadd.f32 %v4369, %v4417
  %v4419 = vpop.f32.mrf.mxu0
  %v4420 = vadd.f32 %v4371, %v4419
  %4421 = vmatmul.bf16.gmra.mxu0 %v3614
  %v4422 = vpop.f32.mrf.mxu0
  %v4423 = vadd.f32 %v4374, %v4422
  %v4424 = vpop.f32.mrf.mxu0
  %v4425 = vadd.f32 %v4376, %v4424
  %4426 = vdwg.mxu0
  %4427 = vmatpush.bf16.msra.mxu0 %v4060
  %4428 = vmatpush.bf16.msra.mxu0 %v4059
  %4429 = vmatpush.bf16.msra.mxu0 %v4058
  %4430 = vmatpush.bf16.msra.mxu0 %v4057
  %4431 = vmatpush.bf16.msra.mxu0 %v4056
  %4432 = vmatpush.bf16.msra.mxu0 %v4055
  %4433 = vmatpush.bf16.msra.mxu0 %v4054
  %4434 = vmatpush.bf16.msra.mxu0 %v4053
  %4435 = vmatmul.bf16.gmra.mxu0 %v3559
  %v4436 = vpop.f32.mrf.mxu0
  %v4437 = vadd.f32 %v4388, %v4436
  %v4438 = vpop.f32.mrf.mxu0
  %v4439 = vadd.f32 %v4390, %v4438
  %4440 = vmatmul.bf16.gmra.mxu0 %v3567
  %v4441 = vpop.f32.mrf.mxu0
  %v4442 = vadd.f32 %v4393, %v4441
  %v4443 = vpop.f32.mrf.mxu0
  %v4444 = vadd.f32 %v4395, %v4443
  %4445 = vmatmul.bf16.gmra.mxu0 %v3575
  %v4446 = vpop.f32.mrf.mxu0
  %v4447 = vadd.f32 %v4398, %v4446
  %v4448 = vpop.f32.mrf.mxu0
  %v4449 = vadd.f32 %v4400, %v4448
  %4450 = vmatmul.bf16.gmra.mxu0 %v3583
  %v4451 = vpop.f32.mrf.mxu0
  %v4452 = vadd.f32 %v4403, %v4451
  %v4453 = vpop.f32.mrf.mxu0
  %v4454 = vadd.f32 %v4405, %v4453
  %4455 = vmatmul.bf16.gmra.mxu0 %v3591
  %v4456 = vpop.f32.mrf.mxu0
  %v4457 = vadd.f32 %v4408, %v4456
  %v4458 = vpop.f32.mrf.mxu0
  %v4459 = vadd.f32 %v4410, %v4458
  %4460 = vmatmul.bf16.gmra.mxu0 %v3599
  %v4461 = vpop.f32.mrf.mxu0
  %v4462 = vadd.f32 %v4413, %v4461
  %v4463 = vpop.f32.mrf.mxu0
  %v4464 = vadd.f32 %v4415, %v4463
  %4465 = vmatmul.bf16.gmra.mxu0 %v3607
  %v4466 = vpop.f32.mrf.mxu0
  %v4467 = vadd.f32 %v4418, %v4466
  %v4468 = vpop.f32.mrf.mxu0
  %v4469 = vadd.f32 %v4420, %v4468
  %4470 = vmatmul.bf16.gmra.mxu0 %v3615
  %v4471 = vpop.f32.mrf.mxu0
  %v4472 = vadd.f32 %v4423, %v4471
  %v4473 = vpop.f32.mrf.mxu0
  %v4474 = vadd.f32 %v4425, %v4473
  %4475 = vdwg.mxu0
  %4476 = vmatpush.bf16.msra.mxu0 %v4068
  %4477 = vmatpush.bf16.msra.mxu0 %v4067
  %4478 = vmatpush.bf16.msra.mxu0 %v4066
  %4479 = vmatpush.bf16.msra.mxu0 %v4065
  %4480 = vmatpush.bf16.msra.mxu0 %v4064
  %4481 = vmatpush.bf16.msra.mxu0 %v4063
  %4482 = vmatpush.bf16.msra.mxu0 %v4062
  %4483 = vmatpush.bf16.msra.mxu0 %v4061
  %4484 = vmatmul.bf16.gmra.mxu0 %v3560
  %v4485 = vpop.f32.mrf.mxu0
  %v4486 = vadd.f32 %v4437, %v4485
  %v4487 = vpop.f32.mrf.mxu0
  %v4488 = vadd.f32 %v4439, %v4487
  %4489 = vmatmul.bf16.gmra.mxu0 %v3568
  %v4490 = vpop.f32.mrf.mxu0
  %v4491 = vadd.f32 %v4442, %v4490
  %v4492 = vpop.f32.mrf.mxu0
  %v4493 = vadd.f32 %v4444, %v4492
  %4494 = vmatmul.bf16.gmra.mxu0 %v3576
  %v4495 = vpop.f32.mrf.mxu0
  %v4496 = vadd.f32 %v4447, %v4495
  %v4497 = vpop.f32.mrf.mxu0
  %v4498 = vadd.f32 %v4449, %v4497
  %4499 = vmatmul.bf16.gmra.mxu0 %v3584
  %v4500 = vpop.f32.mrf.mxu0
  %v4501 = vadd.f32 %v4452, %v4500
  %v4502 = vpop.f32.mrf.mxu0
  %v4503 = vadd.f32 %v4454, %v4502
  %4504 = vmatmul.bf16.gmra.mxu0 %v3592
  %v4505 = vpop.f32.mrf.mxu0
  %v4506 = vadd.f32 %v4457, %v4505
  %v4507 = vpop.f32.mrf.mxu0
  %v4508 = vadd.f32 %v4459, %v4507
  %4509 = vmatmul.bf16.gmra.mxu0 %v3600
  %v4510 = vpop.f32.mrf.mxu0
  %v4511 = vadd.f32 %v4462, %v4510
  %v4512 = vpop.f32.mrf.mxu0
  %v4513 = vadd.f32 %v4464, %v4512
  %4514 = vmatmul.bf16.gmra.mxu0 %v3608
  %v4515 = vpop.f32.mrf.mxu0
  %v4516 = vadd.f32 %v4467, %v4515
  %v4517 = vpop.f32.mrf.mxu0
  %v4518 = vadd.f32 %v4469, %v4517
  %4519 = vmatmul.bf16.gmra.mxu0 %v3616
  %v4520 = vpop.f32.mrf.mxu0
  %v4521 = vadd.f32 %v4472, %v4520
  %v4522 = vpop.f32.mrf.mxu0
  %v4523 = vadd.f32 %v4474, %v4522
  %4524 = vdwg.mxu0
  %4525 = vst [vmem:[%s9] sm:$0xff] %v4486
  %4526 = vst [vmem:[%s9 + $0x8] sm:$0xff] %v4488
  %4527 = vst [vmem:[%s9 + $0x10] sm:$0xff] %v4491
  %4528 = vst [vmem:[%s9 + $0x18] sm:$0xff] %v4493
  %4529 = vst [vmem:[%s9 + $0x20] sm:$0xff] %v4496
  %4530 = vst [vmem:[%s9 + $0x28] sm:$0xff] %v4498
  %4531 = vst [vmem:[%s9 + $0x30] sm:$0xff] %v4501
  %4532 = vst [vmem:[%s9 + $0x38] sm:$0xff] %v4503
  %4533 = vst [vmem:[%s9 + $0x40] sm:$0xff] %v4506
  %4534 = vst [vmem:[%s9 + $0x48] sm:$0xff] %v4508
  %4535 = vst [vmem:[%s9 + $0x50] sm:$0xff] %v4511
  %4536 = vst [vmem:[%s9 + $0x58] sm:$0xff] %v4513
  %4537 = vst [vmem:[%s9 + $0x60] sm:$0xff] %v4516
  %4538 = vst [vmem:[%s9 + $0x68] sm:$0xff] %v4518
  %4539 = vst [vmem:[%s9 + $0x70] sm:$0xff] %v4521
  %4540 = vst [vmem:[%s9 + $0x78] sm:$0xff] %v4523
  %4541 = vmax.xlane.f32.xlu0 %v4486
  %v4542 = vpop.xlane.xlu0 %4541
  %4543 = vmax.xlane.f32.xlu0 %v4488
  %v4544 = vpop.xlane.xlu0 %4543
  %4545 = vmax.xlane.f32.xlu0 %v4491
  %v4546 = vpop.xlane.xlu0 %4545
  %4547 = vmax.xlane.f32.xlu0 %v4493
  %v4548 = vpop.xlane.xlu0 %4547
  %4549 = vmax.xlane.f32.xlu0 %v4496
  %v4550 = vpop.xlane.xlu0 %4549
  %4551 = vmax.xlane.f32.xlu0 %v4498
  %v4552 = vpop.xlane.xlu0 %4551
  %4553 = vmax.xlane.f32.xlu0 %v4501
  %v4554 = vpop.xlane.xlu0 %4553
  %4555 = vmax.xlane.f32.xlu0 %v4503
  %v4556 = vpop.xlane.xlu0 %4555
  %4557 = vmax.xlane.f32.xlu0 %v4506
  %v4558 = vpop.xlane.xlu0 %4557
  %4559 = vmax.xlane.f32.xlu0 %v4508
  %v4560 = vpop.xlane.xlu0 %4559
  %4561 = vmax.xlane.f32.xlu0 %v4511
  %v4562 = vpop.xlane.xlu0 %4561
  %4563 = vmax.xlane.f32.xlu0 %v4513
  %v4564 = vpop.xlane.xlu0 %4563
  %4565 = vmax.xlane.f32.xlu0 %v4516
  %v4566 = vpop.xlane.xlu0 %4565
  %4567 = vmax.xlane.f32.xlu0 %v4518
  %v4568 = vpop.xlane.xlu0 %4567
  %4569 = vmax.xlane.f32.xlu0 %v4521
  %v4570 = vpop.xlane.xlu0 %4569
  %4571 = vmax.xlane.f32.xlu0 %v4523
  %v4572 = vpop.xlane.xlu0 %4571
  %v4573 = vsub.f32 %v4486, %v4542
  %v4574 = vsub.f32 %v4488, %v4544
  %v4575 = vsub.f32 %v4491, %v4546
  %v4576 = vsub.f32 %v4493, %v4548
  %v4577 = vsub.f32 %v4496, %v4550
  %v4578 = vsub.f32 %v4498, %v4552
  %v4579 = vsub.f32 %v4501, %v4554
  %v4580 = vsub.f32 %v4503, %v4556
  %v4581 = vsub.f32 %v4506, %v4558
  %v4582 = vsub.f32 %v4508, %v4560
  %v4583 = vsub.f32 %v4511, %v4562
  %v4584 = vsub.f32 %v4513, %v4564
  %v4585 = vsub.f32 %v4516, %v4566
  %v4586 = vsub.f32 %v4518, %v4568
  %v4587 = vsub.f32 %v4521, %v4570
  %v4588 = vsub.f32 %v4523, %v4572
  %v4589 = vmul.f32 %v4573, 1.442695
  %v4590 = vpow.pop %v4589
  %v4591 = vmul.f32 %v4574, 1.442695
  %v4592 = vpow.pop %v4591
  %v4593 = vmul.f32 %v4575, 1.442695
  %v4594 = vpow.pop %v4593
  %v4595 = vmul.f32 %v4576, 1.442695
  %v4596 = vpow.pop %v4595
  %v4597 = vmul.f32 %v4577, 1.442695
  %v4598 = vpow.pop %v4597
  %v4599 = vmul.f32 %v4578, 1.442695
  %v4600 = vpow.pop %v4599
  %v4601 = vmul.f32 %v4579, 1.442695
  %v4602 = vpow.pop %v4601
  %v4603 = vmul.f32 %v4580, 1.442695
  %v4604 = vpow.pop %v4603
  %v4605 = vmul.f32 %v4581, 1.442695
  %v4606 = vpow.pop %v4605
  %v4607 = vmul.f32 %v4582, 1.442695
  %v4608 = vpow.pop %v4607
  %v4609 = vmul.f32 %v4583, 1.442695
  %v4610 = vpow.pop %v4609
  %v4611 = vmul.f32 %v4584, 1.442695
  %v4612 = vpow.pop %v4611
  %v4613 = vmul.f32 %v4585, 1.442695
  %v4614 = vpow.pop %v4613
  %v4615 = vmul.f32 %v4586, 1.442695
  %v4616 = vpow.pop %v4615
  %v4617 = vmul.f32 %v4587, 1.442695
  %v4618 = vpow.pop %v4617
  %v4619 = vmul.f32 %v4588, 1.442695
  %v4620 = vpow.pop %v4619
  %4621 = vadd.xlane.f32.xlu0 %v4590
  %v4622 = vpop.xlane.xlu0 %4621
  %4623 = vadd.xlane.f32.xlu0 %v4592
  %v4624 = vpop.xlane.xlu0 %4623
  %4625 = vadd.xlane.f32.xlu0 %v4594
  %v4626 = vpop.xlane.xlu0 %4625
  %4627 = vadd.xlane.f32.xlu0 %v4596
  %v4628 = vpop.xlane.xlu0 %4627
  %4629 = vadd.xlane.f32.xlu0 %v4598
  %v4630 = vpop.xlane.xlu0 %4629
  %4631 = vadd.xlane.f32.xlu0 %v4600
  %v4632 = vpop.xlane.xlu0 %4631
  %4633 = vadd.xlane.f32.xlu0 %v4602
  %v4634 = vpop.xlane.xlu0 %4633
  %4635 = vadd.xlane.f32.xlu0 %v4604
  %v4636 = vpop.xlane.xlu0 %4635
  %4637 = vadd.xlane.f32.xlu0 %v4606
  %v4638 = vpop.xlane.xlu0 %4637
  %4639 = vadd.xlane.f32.xlu0 %v4608
  %v4640 = vpop.xlane.xlu0 %4639
  %4641 = vadd.xlane.f32.xlu0 %v4610
  %v4642 = vpop.xlane.xlu0 %4641
  %4643 = vadd.xlane.f32.xlu0 %v4612
  %v4644 = vpop.xlane.xlu0 %4643
  %4645 = vadd.xlane.f32.xlu0 %v4614
  %v4646 = vpop.xlane.xlu0 %4645
  %4647 = vadd.xlane.f32.xlu0 %v4616
  %v4648 = vpop.xlane.xlu0 %4647
  %4649 = vadd.xlane.f32.xlu0 %v4618
  %v4650 = vpop.xlane.xlu0 %4649
  %4651 = vadd.xlane.f32.xlu0 %v4620
  %v4652 = vpop.xlane.xlu0 %4651
  %v4653 = vrcp.pop %v4622
  %v4654 = vmul.f32 %v4622, %v4653
  %v4655 = vsub.f32 1.0, %v4654
  %v4656 = vmul.f32 %v4653, %v4655
  %v4657 = vadd.f32 %v4653, %v4656
  %vm4658 = vweird.f32 %v4622
  %vm4659 = vweird.f32 %v4653
  %vm4660 = vmor %vm4658, %vm4659
  %v4661 = vsel %vm4660, %v4653, %v4657
  %v4662 = vand.u32 2147483647, %v4622
  %vm4663 = vcmp.eq.f32.partialorder %v4662, 8.507059e+37
  %v4664 = vand.u32 %v4622, 2147483648
  %v4665 = vor.u32 1.1754944e-38, %v4664
  %v4666 = vsel %vm4663, %v4665, %v4661
  %v4667 = vrcp.pop %v4624
  %v4668 = vmul.f32 %v4624, %v4667
  %v4669 = vsub.f32 1.0, %v4668
  %v4670 = vmul.f32 %v4667, %v4669
  %v4671 = vadd.f32 %v4667, %v4670
  %vm4672 = vweird.f32 %v4624
  %vm4673 = vweird.f32 %v4667
  %vm4674 = vmor %vm4672, %vm4673
  %v4675 = vsel %vm4674, %v4667, %v4671
  %v4676 = vand.u32 2147483647, %v4624
  %vm4677 = vcmp.eq.f32.partialorder %v4676, 8.507059e+37
  %v4678 = vand.u32 %v4624, 2147483648
  %v4679 = vor.u32 1.1754944e-38, %v4678
  %v4680 = vsel %vm4677, %v4679, %v4675
  %v4681 = vrcp.pop %v4626
  %v4682 = vmul.f32 %v4626, %v4681
  %v4683 = vsub.f32 1.0, %v4682
  %v4684 = vmul.f32 %v4681, %v4683
  %v4685 = vadd.f32 %v4681, %v4684
  %vm4686 = vweird.f32 %v4626
  %vm4687 = vweird.f32 %v4681
  %vm4688 = vmor %vm4686, %vm4687
  %v4689 = vsel %vm4688, %v4681, %v4685
  %v4690 = vand.u32 2147483647, %v4626
  %vm4691 = vcmp.eq.f32.partialorder %v4690, 8.507059e+37
  %v4692 = vand.u32 %v4626, 2147483648
  %v4693 = vor.u32 1.1754944e-38, %v4692
  %v4694 = vsel %vm4691, %v4693, %v4689
  %v4695 = vrcp.pop %v4628
  %v4696 = vmul.f32 %v4628, %v4695
  %v4697 = vsub.f32 1.0, %v4696
  %v4698 = vmul.f32 %v4695, %v4697
  %v4699 = vadd.f32 %v4695, %v4698
  %vm4700 = vweird.f32 %v4628
  %vm4701 = vweird.f32 %v4695
  %vm4702 = vmor %vm4700, %vm4701
  %v4703 = vsel %vm4702, %v4695, %v4699
  %v4704 = vand.u32 2147483647, %v4628
  %vm4705 = vcmp.eq.f32.partialorder %v4704, 8.507059e+37
  %v4706 = vand.u32 %v4628, 2147483648
  %v4707 = vor.u32 1.1754944e-38, %v4706
  %v4708 = vsel %vm4705, %v4707, %v4703
  %v4709 = vrcp.pop %v4630
  %v4710 = vmul.f32 %v4630, %v4709
  %v4711 = vsub.f32 1.0, %v4710
  %v4712 = vmul.f32 %v4709, %v4711
  %v4713 = vadd.f32 %v4709, %v4712
  %vm4714 = vweird.f32 %v4630
  %vm4715 = vweird.f32 %v4709
  %vm4716 = vmor %vm4714, %vm4715
  %v4717 = vsel %vm4716, %v4709, %v4713
  %v4718 = vand.u32 2147483647, %v4630
  %vm4719 = vcmp.eq.f32.partialorder %v4718, 8.507059e+37
  %v4720 = vand.u32 %v4630, 2147483648
  %v4721 = vor.u32 1.1754944e-38, %v4720
  %v4722 = vsel %vm4719, %v4721, %v4717
  %v4723 = vrcp.pop %v4632
  %v4724 = vmul.f32 %v4632, %v4723
  %v4725 = vsub.f32 1.0, %v4724
  %v4726 = vmul.f32 %v4723, %v4725
  %v4727 = vadd.f32 %v4723, %v4726
  %vm4728 = vweird.f32 %v4632
  %vm4729 = vweird.f32 %v4723
  %vm4730 = vmor %vm4728, %vm4729
  %v4731 = vsel %vm4730, %v4723, %v4727
  %v4732 = vand.u32 2147483647, %v4632
  %vm4733 = vcmp.eq.f32.partialorder %v4732, 8.507059e+37
  %v4734 = vand.u32 %v4632, 2147483648
  %v4735 = vor.u32 1.1754944e-38, %v4734
  %v4736 = vsel %vm4733, %v4735, %v4731
  %v4737 = vrcp.pop %v4634
  %v4738 = vmul.f32 %v4634, %v4737
  %v4739 = vsub.f32 1.0, %v4738
  %v4740 = vmul.f32 %v4737, %v4739
  %v4741 = vadd.f32 %v4737, %v4740
  %vm4742 = vweird.f32 %v4634
  %vm4743 = vweird.f32 %v4737
  %vm4744 = vmor %vm4742, %vm4743
  %v4745 = vsel %vm4744, %v4737, %v4741
  %v4746 = vand.u32 2147483647, %v4634
  %vm4747 = vcmp.eq.f32.partialorder %v4746, 8.507059e+37
  %v4748 = vand.u32 %v4634, 2147483648
  %v4749 = vor.u32 1.1754944e-38, %v4748
  %v4750 = vsel %vm4747, %v4749, %v4745
  %v4751 = vrcp.pop %v4636
  %v4752 = vmul.f32 %v4636, %v4751
  %v4753 = vsub.f32 1.0, %v4752
  %v4754 = vmul.f32 %v4751, %v4753
  %v4755 = vadd.f32 %v4751, %v4754
  %vm4756 = vweird.f32 %v4636
  %vm4757 = vweird.f32 %v4751
  %vm4758 = vmor %vm4756, %vm4757
  %v4759 = vsel %vm4758, %v4751, %v4755
  %v4760 = vand.u32 2147483647, %v4636
  %vm4761 = vcmp.eq.f32.partialorder %v4760, 8.507059e+37
  %v4762 = vand.u32 %v4636, 2147483648
  %v4763 = vor.u32 1.1754944e-38, %v4762
  %v4764 = vsel %vm4761, %v4763, %v4759
  %v4765 = vrcp.pop %v4638
  %v4766 = vmul.f32 %v4638, %v4765
  %v4767 = vsub.f32 1.0, %v4766
  %v4768 = vmul.f32 %v4765, %v4767
  %v4769 = vadd.f32 %v4765, %v4768
  %vm4770 = vweird.f32 %v4638
  %vm4771 = vweird.f32 %v4765
  %vm4772 = vmor %vm4770, %vm4771
  %v4773 = vsel %vm4772, %v4765, %v4769
  %v4774 = vand.u32 2147483647, %v4638
  %vm4775 = vcmp.eq.f32.partialorder %v4774, 8.507059e+37
  %v4776 = vand.u32 %v4638, 2147483648
  %v4777 = vor.u32 1.1754944e-38, %v4776
  %v4778 = vsel %vm4775, %v4777, %v4773
  %v4779 = vrcp.pop %v4640
  %v4780 = vmul.f32 %v4640, %v4779
  %v4781 = vsub.f32 1.0, %v4780
  %v4782 = vmul.f32 %v4779, %v4781
  %v4783 = vadd.f32 %v4779, %v4782
  %vm4784 = vweird.f32 %v4640
  %vm4785 = vweird.f32 %v4779
  %vm4786 = vmor %vm4784, %vm4785
  %v4787 = vsel %vm4786, %v4779, %v4783
  %v4788 = vand.u32 2147483647, %v4640
  %vm4789 = vcmp.eq.f32.partialorder %v4788, 8.507059e+37
  %v4790 = vand.u32 %v4640, 2147483648
  %v4791 = vor.u32 1.1754944e-38, %v4790
  %v4792 = vsel %vm4789, %v4791, %v4787
  %v4793 = vrcp.pop %v4642
  %v4794 = vmul.f32 %v4642, %v4793
  %v4795 = vsub.f32 1.0, %v4794
  %v4796 = vmul.f32 %v4793, %v4795
  %v4797 = vadd.f32 %v4793, %v4796
  %vm4798 = vweird.f32 %v4642
  %vm4799 = vweird.f32 %v4793
  %vm4800 = vmor %vm4798, %vm4799
  %v4801 = vsel %vm4800, %v4793, %v4797
  %v4802 = vand.u32 2147483647, %v4642
  %vm4803 = vcmp.eq.f32.partialorder %v4802, 8.507059e+37
  %v4804 = vand.u32 %v4642, 2147483648
  %v4805 = vor.u32 1.1754944e-38, %v4804
  %v4806 = vsel %vm4803, %v4805, %v4801
  %v4807 = vrcp.pop %v4644
  %v4808 = vmul.f32 %v4644, %v4807
  %v4809 = vsub.f32 1.0, %v4808
  %v4810 = vmul.f32 %v4807, %v4809
  %v4811 = vadd.f32 %v4807, %v4810
  %vm4812 = vweird.f32 %v4644
  %vm4813 = vweird.f32 %v4807
  %vm4814 = vmor %vm4812, %vm4813
  %v4815 = vsel %vm4814, %v4807, %v4811
  %v4816 = vand.u32 2147483647, %v4644
  %vm4817 = vcmp.eq.f32.partialorder %v4816, 8.507059e+37
  %v4818 = vand.u32 %v4644, 2147483648
  %v4819 = vor.u32 1.1754944e-38, %v4818
  %v4820 = vsel %vm4817, %v4819, %v4815
  %v4821 = vrcp.pop %v4646
  %v4822 = vmul.f32 %v4646, %v4821
  %v4823 = vsub.f32 1.0, %v4822
  %v4824 = vmul.f32 %v4821, %v4823
  %v4825 = vadd.f32 %v4821, %v4824
  %vm4826 = vweird.f32 %v4646
  %vm4827 = vweird.f32 %v4821
  %vm4828 = vmor %vm4826, %vm4827
  %v4829 = vsel %vm4828, %v4821, %v4825
  %v4830 = vand.u32 2147483647, %v4646
  %vm4831 = vcmp.eq.f32.partialorder %v4830, 8.507059e+37
  %v4832 = vand.u32 %v4646, 2147483648
  %v4833 = vor.u32 1.1754944e-38, %v4832
  %v4834 = vsel %vm4831, %v4833, %v4829
  %v4835 = vrcp.pop %v4648
  %v4836 = vmul.f32 %v4648, %v4835
  %v4837 = vsub.f32 1.0, %v4836
  %v4838 = vmul.f32 %v4835, %v4837
  %v4839 = vadd.f32 %v4835, %v4838
  %vm4840 = vweird.f32 %v4648
  %vm4841 = vweird.f32 %v4835
  %vm4842 = vmor %vm4840, %vm4841
  %v4843 = vsel %vm4842, %v4835, %v4839
  %v4844 = vand.u32 2147483647, %v4648
  %vm4845 = vcmp.eq.f32.partialorder %v4844, 8.507059e+37
  %v4846 = vand.u32 %v4648, 2147483648
  %v4847 = vor.u32 1.1754944e-38, %v4846
  %v4848 = vsel %vm4845, %v4847, %v4843
  %v4849 = vrcp.pop %v4650
  %v4850 = vmul.f32 %v4650, %v4849
  %v4851 = vsub.f32 1.0, %v4850
  %v4852 = vmul.f32 %v4849, %v4851
  %v4853 = vadd.f32 %v4849, %v4852
  %vm4854 = vweird.f32 %v4650
  %vm4855 = vweird.f32 %v4849
  %vm4856 = vmor %vm4854, %vm4855
  %v4857 = vsel %vm4856, %v4849, %v4853
  %v4858 = vand.u32 2147483647, %v4650
  %vm4859 = vcmp.eq.f32.partialorder %v4858, 8.507059e+37
  %v4860 = vand.u32 %v4650, 2147483648
  %v4861 = vor.u32 1.1754944e-38, %v4860
  %v4862 = vsel %vm4859, %v4861, %v4857
  %v4863 = vrcp.pop %v4652
  %v4864 = vmul.f32 %v4652, %v4863
  %v4865 = vsub.f32 1.0, %v4864
  %v4866 = vmul.f32 %v4863, %v4865
  %v4867 = vadd.f32 %v4863, %v4866
  %vm4868 = vweird.f32 %v4652
  %vm4869 = vweird.f32 %v4863
  %vm4870 = vmor %vm4868, %vm4869
  %v4871 = vsel %vm4870, %v4863, %v4867
  %v4872 = vand.u32 2147483647, %v4652
  %vm4873 = vcmp.eq.f32.partialorder %v4872, 8.507059e+37
  %v4874 = vand.u32 %v4652, 2147483648
  %v4875 = vor.u32 1.1754944e-38, %v4874
  %v4876 = vsel %vm4873, %v4875, %v4871
  %v4877 = vmul.f32 %v4590, %v4666
  %v4878 = vmul.f32 %v4592, %v4680
  %v4879 = vmul.f32 %v4594, %v4694
  %v4880 = vmul.f32 %v4596, %v4708
  %v4881 = vmul.f32 %v4598, %v4722
  %v4882 = vmul.f32 %v4600, %v4736
  %v4883 = vmul.f32 %v4602, %v4750
  %v4884 = vmul.f32 %v4604, %v4764
  %v4885 = vmul.f32 %v4606, %v4778
  %v4886 = vmul.f32 %v4608, %v4792
  %v4887 = vmul.f32 %v4610, %v4806
  %v4888 = vmul.f32 %v4612, %v4820
  %v4889 = vmul.f32 %v4614, %v4834
  %v4890 = vmul.f32 %v4616, %v4848
  %v4891 = vmul.f32 %v4618, %v4862
  %v4892 = vmul.f32 %v4620, %v4876
  %4893 = vst [vmem:[%s10] sm:$0xff] %v4877
  %4894 = vst [vmem:[%s10 + $0x8] sm:$0xff] %v4878
  %4895 = vst [vmem:[%s10 + $0x10] sm:$0xff] %v4879
  %4896 = vst [vmem:[%s10 + $0x18] sm:$0xff] %v4880
  %4897 = vst [vmem:[%s10 + $0x20] sm:$0xff] %v4881
  %4898 = vst [vmem:[%s10 + $0x28] sm:$0xff] %v4882
  %4899 = vst [vmem:[%s10 + $0x30] sm:$0xff] %v4883
  %4900 = vst [vmem:[%s10 + $0x38] sm:$0xff] %v4884
  %4901 = vst [vmem:[%s10 + $0x40] sm:$0xff] %v4885
  %4902 = vst [vmem:[%s10 + $0x48] sm:$0xff] %v4886
  %4903 = vst [vmem:[%s10 + $0x50] sm:$0xff] %v4887
  %4904 = vst [vmem:[%s10 + $0x58] sm:$0xff] %v4888
  %4905 = vst [vmem:[%s10 + $0x60] sm:$0xff] %v4889
  %4906 = vst [vmem:[%s10 + $0x68] sm:$0xff] %v4890
  %4907 = vst [vmem:[%s10 + $0x70] sm:$0xff] %v4891
  %4908 = vst [vmem:[%s10 + $0x78] sm:$0xff] %v4892
  // Predicated region
  $region38: #{phrase_classifier_apply.1} parent=0 // pred_check
    _
  $region39: #{phrase_classifier_apply.1} parent=0 // pred_check_branch
    %4910 = sbr.rel (0) target = $region41
  $region40: #{phrase_classifier_apply.1} parent=0 // pred_region
    _
  $region41: #{phrase_classifier_apply.1} parent=0 // pred_fallthru
    _
  // Predicated region
  $region42: #{phrase_classifier_apply.1} parent=0 // pred_check
    _
  $region43: #{phrase_classifier_apply.1} parent=0 // pred_check_branch
    %4912 = sbr.rel (0) target = $region45
  $region44: #{phrase_classifier_apply.1} parent=0 // pred_region
    _
  $region45: #{phrase_classifier_apply.1} parent=0 // pred_fallthru
    _
  // Predicated region
  $region46: #{phrase_classifier_apply.1} parent=0 // pred_check
    _
  $region47: #{phrase_classifier_apply.1} parent=0 // pred_check_branch
    %4914 = sbr.rel (0) target = $region49
  $region48: #{phrase_classifier_apply.1} parent=0 // pred_region
    _
  $region49: #{phrase_classifier_apply.1} parent=0 // pred_fallthru
    _
  // Predicated region
  $region50: #{phrase_classifier_apply.1} parent=0 // pred_check
    _
  $region51: #{phrase_classifier_apply.1} parent=0 // pred_check_branch
    %4916 = sbr.rel (0) target = $region53
  $region52: #{phrase_classifier_apply.1} parent=0 // pred_region
    _
  $region53: #{phrase_classifier_apply.1} parent=0 // pred_fallthru
    _

</llo_original>
